<compile_context>
chip_gen: v7x
topology: tpu7x:2x2x1
jax: 0.10.0
libtpu: 0.0.40
codegen_flags: <defaults>
</compile_context>

<pallas_src>
import jax
import jax.numpy as jnp
from jax import lax
from jax.experimental import pallas as pl
from jax.experimental.pallas import tpu as pltpu


# Static network geometry (the module requires 32x32 inputs because of the
# 12*5*5 flatten after two 5x5 valid convs + two 2x2 pools).
C1_IN, C1_OUT, K = 3, 6, 5
C2_IN, C2_OUT = 6, 12
H0 = W0 = 32
H1 = W1 = H0 - K + 1            # 28  conv1 output
P1 = H1 // 2                    # 14  pool1 output
H2 = W2 = P1 - K + 1            # 10  conv2 output
P2 = H2 // 2                    # 5   pool2 output
FC1_IN, FC1_OUT = C2_OUT * P2 * P2, 256     # 300 -> 256
FC2_OUT, FC3_OUT = 128, 10


# ------------------------------ fused kernel ------------------------------- #

def _convnet_kernel(x_ref,
                    t1_ref, b1_ref, t2_ref, b2_ref,
                    s1e_ref, s1o_ref, p1e_ref, p1o_ref,
                    s2e_ref, s2o_ref, p2e_ref, p2o_ref,
                    wf1_ref, bf1_ref, wf2_ref, bf2_ref, wf3_ref, bf3_ref,
                    o_ref):
    """Whole convNet forward for one image (grid iterates over the batch)."""
    f32 = jnp.float32

    # ---- conv1 (3->6, 5x5, valid) + ReLU ----------------------------------
    # y1[oh, oc*28+ow] = sum_{i,c,j} x[c, oh+i, ow+j] * w1[oc, c, i, j]
    # 15 shifted-row matmuls against a banded weight matrix (im2col folded
    # into the weights, built once in the wrapper). Everything stays 2-D.
    y1 = jnp.zeros((H1, C1_OUT * W1), f32)
    for i in range(K):
        for c in range(C1_IN):
            rows = x_ref[0, c, i:i + H1, :]                         # (28, 32)
            k0 = (i * C1_IN + c) * W0
            y1 = y1 + jnp.dot(rows, t1_ref[k0:k0 + W0, :],
                              preferred_element_type=f32)
    y1 = jnp.maximum(y1 + b1_ref[...], 0.0)                         # (28, 168)

    # ---- fused 2x2 max-pool (exact 0/1 selection matmuls + max) -----------
    rmax = jnp.maximum(jnp.dot(s1e_ref[...], y1, preferred_element_type=f32),
                       jnp.dot(s1o_ref[...], y1, preferred_element_type=f32))
    a1 = jnp.maximum(jnp.dot(rmax, p1e_ref[...], preferred_element_type=f32),
                     jnp.dot(rmax, p1o_ref[...], preferred_element_type=f32))
    # a1: (14, 6*14), layout [h, c*14 + w]

    # ---- conv2 (6->12, 5x5, valid) + ReLU ----------------------------------
    y2 = jnp.zeros((H2, C2_OUT * W2), f32)
    for i in range(K):
        k0 = i * (C2_IN * P1)
        y2 = y2 + jnp.dot(a1[i:i + H2, :], t2_ref[k0:k0 + C2_IN * P1, :],
                          preferred_element_type=f32)
    y2 = jnp.maximum(y2 + b2_ref[...], 0.0)                         # (10, 120)

    # ---- fused 2x2 max-pool -------------------------------------------------
    rmax2 = jnp.maximum(jnp.dot(s2e_ref[...], y2, preferred_element_type=f32),
                        jnp.dot(s2o_ref[...], y2, preferred_element_type=f32))
    a2 = jnp.maximum(jnp.dot(rmax2, p2e_ref[...], preferred_element_type=f32),
                     jnp.dot(rmax2, p2o_ref[...], preferred_element_type=f32))
    # a2: (5, 12*5), layout [h, c*5 + w]

    # ---- flatten + fc1 + ReLU ----------------------------------------------
    # PyTorch's x.view(-1, 300) order (c, h, w) is folded into the per-row
    # fc1 weight slabs wf1[h] prepared in the wrapper, so no in-kernel reshape.
    h = bf1_ref[...]                                                # (1, 256)
    for r in range(P2):
        h = h + jnp.dot(a2[r:r + 1, :], wf1_ref[r],
                        preferred_element_type=f32)
    h = jnp.maximum(h, 0.0)

    # ---- fc2 + ReLU, fc3 ----------------------------------------------------
    h = jnp.maximum(jnp.dot(h, wf2_ref[...], preferred_element_type=f32)
                    + bf2_ref[...], 0.0)                            # (1, 128)
    o_ref[0] = (jnp.dot(h, wf3_ref[...], preferred_element_type=f32)
                + bf3_ref[...]).astype(o_ref.dtype)                 # (1, 10)


# --------------------- wrapper-side weight preprocessing -------------------- #
# (tiny, weight-only; constant-folded / cached under jit)

def _banded_conv_weights(w, w_in):
    """(OC, C, KH, KW) -> (KH*C*w_in, OC*OW) banded GEMM matrix.

    T[(i, c, w'), (oc, ow)] = w[oc, c, i, w'-ow] if 0 <= w'-ow < KW else 0,
    matching the shifted-row slabs the kernel multiplies against.
    """
    oc, c, kh, kw = w.shape
    ow = w_in - kw + 1
    wp = jnp.arange(w_in)[:, None]
    owi = jnp.arange(ow)[None, :]
    j = wp - owi
    valid = ((j >= 0) & (j < kw)).astype(w.dtype)
    t = w[:, :, :, jnp.clip(j, 0, kw - 1)] * valid      # (oc, c, kh, w_in, ow)
    t = jnp.transpose(t, (2, 1, 3, 0, 4))               # (kh, c, w_in, oc, ow)
    return t.reshape(kh * c * w_in, oc * ow)


def _row_pool_selectors(h):
    """(h//2, h) 0/1 matrices selecting even / odd rows."""
    r = jnp.arange(h // 2)[:, None]
    hh = jnp.arange(h)[None, :]
    return ((hh == 2 * r).astype(jnp.float32),
            (hh == 2 * r + 1).astype(jnp.float32))


def _lane_pool_selectors(c, w):
    """(c*w, c*(w//2)) 0/1 matrices selecting even / odd columns per channel."""
    w2 = w // 2
    src = jnp.arange(c * w)[:, None]
    dst = jnp.arange(c * w2)[None, :]
    same_c = (src // w) == (dst // w2)
    even = same_c & ((src % w) == 2 * (dst % w2))
    odd = same_c & ((src % w) == 2 * (dst % w2) + 1)
    return even.astype(jnp.float32), odd.astype(jnp.float32)


# ------------------------------- full forward ------------------------------- #

def conv_net_forward(x, params):
    n = x.shape[0]
    f32 = jnp.float32

    t1 = _banded_conv_weights(params["conv1_w"], W0)          # (480, 168)
    b1 = jnp.repeat(params["conv1_b"], W1)[None, :]            # (1, 168)
    t2 = _banded_conv_weights(params["conv2_w"], P1)           # (420, 120)
    b2 = jnp.repeat(params["conv2_b"], W2)[None, :]            # (1, 120)

    s1e, s1o = _row_pool_selectors(H1)                         # (14, 28)
    p1e, p1o = _lane_pool_selectors(C1_OUT, W1)                # (168, 84)
    s2e, s2o = _row_pool_selectors(H2)                         # (5, 10)
    p2e, p2o = _lane_pool_selectors(C2_OUT, W2)                # (120, 60)

    # fc1 regrouped to the kernel's [h, c*5+w] activation layout:
    # wf1[h, c*5+w, o] = fc1_w[o, c*25 + h*5 + w]
    wf1 = params["fc1_w"].reshape(FC1_OUT, C2_OUT, P2, P2)
    wf1 = jnp.transpose(wf1, (2, 1, 3, 0)).reshape(P2, C2_OUT * P2, FC1_OUT)
    bf1 = params["fc1_b"][None, :]
    wf2 = params["fc2_w"].T                                    # (256, 128)
    bf2 = params["fc2_b"][None, :]
    wf3 = params["fc3_w"].T                                    # (128, 10)
    bf3 = params["fc3_b"][None, :]

    consts = (t1, b1, t2, b2, s1e, s1o, p1e, p1o, s2e, s2o, p2e, p2o,
              wf1, bf1, wf2, bf2, wf3, bf3)

    def resident(a):
        zeros = (0,) * a.ndim
        return pl.BlockSpec(a.shape, lambda i, _z=zeros: _z)   # VMEM-resident

    out = pl.pallas_call(
        _convnet_kernel,
        out_shape=jax.ShapeDtypeStruct((n, 1, FC3_OUT), f32),
        grid=(n,),
        in_specs=[pl.BlockSpec((1, C1_IN, H0, W0), lambda i: (i, 0, 0, 0))]
                 + [resident(a) for a in consts],
        out_specs=pl.BlockSpec((1, 1, FC3_OUT), lambda i: (i, 0, 0)),
        compiler_params=pltpu.CompilerParams(
            dimension_semantics=("parallel",),
            vmem_limit_bytes=32 * 1024 * 1024,
        ),
    )(x.astype(f32), *consts)
    return out.reshape(n, FC3_OUT)


# --------------------------- reference & harness ---------------------------- #

def reference_forward(x, p):
    """Pure-XLA reference with PyTorch semantics (sanity check only)."""
    def conv(x, w, b):
        dn = lax.conv_dimension_numbers(x.shape, w.shape, ("NCHW", "OIHW", "NCHW"))
        y = lax.conv_general_dilated(x, w, (1, 1), "VALID", dimension_numbers=dn,
                                     precision=lax.Precision.HIGHEST)
        return y + b[None, :, None, None]

    def pool(x):
        return lax.reduce_window(x, -jnp.inf, lax.max,
                                 (1, 1, 2, 2), (1, 1, 2, 2), "VALID")

    y = pool(jnp.maximum(conv(x, p["conv1_w"], p["conv1_b"]), 0.0))
    y = pool(jnp.maximum(conv(y, p["conv2_w"], p["conv2_b"]), 0.0))
    y = y.reshape(y.shape[0], -1)
    y = jnp.maximum(y @ p["fc1_w"].T + p["fc1_b"], 0.0)
    y = jnp.maximum(y @ p["fc2_w"].T + p["fc2_b"], 0.0)
    return y @ p["fc3_w"].T + p["fc3_b"]


def init_params(key):
    """PyTorch-default-like init: U(-1/sqrt(fan_in), 1/sqrt(fan_in))."""
    ks = jax.random.split(key, 10)

    def u(k, shape, fan_in):
        bound = 1.0 / float(fan_in) ** 0.5
        return jax.random.uniform(k, shape, jnp.float32, -bound, bound)

    return {
        "conv1_w": u(ks[0], (C1_OUT, C1_IN, K, K), C1_IN * K * K),
        "conv1_b": u(ks[1], (C1_OUT,), C1_IN * K * K),
        "conv2_w": u(ks[2], (C2_OUT, C2_IN, K, K), C2_IN * K * K),
        "conv2_b": u(ks[3], (C2_OUT,), C2_IN * K * K),
        "fc1_w": u(ks[4], (FC1_OUT, FC1_IN), FC1_IN),
        "fc1_b": u(ks[5], (FC1_OUT,), FC1_IN),
        "fc2_w": u(ks[6], (FC2_OUT, FC1_OUT), FC1_OUT),
        "fc2_b": u(ks[7], (FC2_OUT,), FC1_OUT),
        "fc3_w": u(ks[8], (FC3_OUT, FC2_OUT), FC2_OUT),
        "fc3_b": u(ks[9], (FC3_OUT,), FC2_OUT),
    }


if __name__ == "__main__":
    key = jax.random.PRNGKey(0)
    k_x, k_p = jax.random.split(key)
    x = jax.random.normal(k_x, (2, C1_IN, H0, W0), dtype=jnp.float32)
    params = init_params(k_p)

    out = jax.jit(conv_net_forward)(x, params)
    out = jax.block_until_ready(out)
    assert out.shape == (2, FC3_OUT), out.shape

    ref = jax.block_until_ready(jax.jit(reference_forward)(x, params))
    assert jnp.allclose(out, ref, rtol=5e-2, atol=5e-3), (
        "max abs diff vs reference: %f" % float(jnp.max(jnp.abs(out - ref))))

    print("KERNEL_OK")
</pallas_src>

<mosaic_0001>
module attributes {stable_mosaic.version = 11 : i64} {
  func.func @_convnet_kernel(%arg0: i32, %arg1: memref<1x3x32x32xf32, #tpu.memory_space<vmem>>, %arg2: memref<480x168xf32, #tpu.memory_space<vmem>>, %arg3: memref<1x168xf32, #tpu.memory_space<vmem>>, %arg4: memref<420x120xf32, #tpu.memory_space<vmem>>, %arg5: memref<1x120xf32, #tpu.memory_space<vmem>>, %arg6: memref<14x28xf32, #tpu.memory_space<vmem>>, %arg7: memref<14x28xf32, #tpu.memory_space<vmem>>, %arg8: memref<168x84xf32, #tpu.memory_space<vmem>>, %arg9: memref<168x84xf32, #tpu.memory_space<vmem>>, %arg10: memref<5x10xf32, #tpu.memory_space<vmem>>, %arg11: memref<5x10xf32, #tpu.memory_space<vmem>>, %arg12: memref<120x60xf32, #tpu.memory_space<vmem>>, %arg13: memref<120x60xf32, #tpu.memory_space<vmem>>, %arg14: memref<5x60x256xf32, #tpu.memory_space<vmem>>, %arg15: memref<1x256xf32, #tpu.memory_space<vmem>>, %arg16: memref<256x128xf32, #tpu.memory_space<vmem>>, %arg17: memref<1x128xf32, #tpu.memory_space<vmem>>, %arg18: memref<128x10xf32, #tpu.memory_space<vmem>>, %arg19: memref<1x10xf32, #tpu.memory_space<vmem>>, %arg20: memref<1x1x10xf32, #tpu.memory_space<vmem>>) attributes {dimension_semantics = [#tpu.dimension_semantics<parallel>], iteration_bounds = array<i64: 2>, scalar_prefetch = 0 : i64, scratch_operands = 0 : i64, tpu.core_type = #tpu.core_type<tc>, window_params = [{transform_indices = @transform_0, window_bounds = array<i64: 1, 3, 32, 32>}, {pipeline_mode = #tpu.pipeline_mode<synchronous>, transform_indices = @transform_1, window_bounds = array<i64: 480, 168>}, {pipeline_mode = #tpu.pipeline_mode<synchronous>, transform_indices = @transform_2, window_bounds = array<i64: 1, 168>}, {pipeline_mode = #tpu.pipeline_mode<synchronous>, transform_indices = @transform_3, window_bounds = array<i64: 420, 120>}, {pipeline_mode = #tpu.pipeline_mode<synchronous>, transform_indices = @transform_4, window_bounds = array<i64: 1, 120>}, {pipeline_mode = #tpu.pipeline_mode<synchronous>, transform_indices = @transform_5, window_bounds = array<i64: 14, 28>}, {pipeline_mode = #tpu.pipeline_mode<synchronous>, transform_indices = @transform_6, window_bounds = array<i64: 14, 28>}, {pipeline_mode = #tpu.pipeline_mode<synchronous>, transform_indices = @transform_7, window_bounds = array<i64: 168, 84>}, {pipeline_mode = #tpu.pipeline_mode<synchronous>, transform_indices = @transform_8, window_bounds = array<i64: 168, 84>}, {pipeline_mode = #tpu.pipeline_mode<synchronous>, transform_indices = @transform_9, window_bounds = array<i64: 5, 10>}, {pipeline_mode = #tpu.pipeline_mode<synchronous>, transform_indices = @transform_10, window_bounds = array<i64: 5, 10>}, {pipeline_mode = #tpu.pipeline_mode<synchronous>, transform_indices = @transform_11, window_bounds = array<i64: 120, 60>}, {pipeline_mode = #tpu.pipeline_mode<synchronous>, transform_indices = @transform_12, window_bounds = array<i64: 120, 60>}, {pipeline_mode = #tpu.pipeline_mode<synchronous>, transform_indices = @transform_13, window_bounds = array<i64: 5, 60, 256>}, {pipeline_mode = #tpu.pipeline_mode<synchronous>, transform_indices = @transform_14, window_bounds = array<i64: 1, 256>}, {pipeline_mode = #tpu.pipeline_mode<synchronous>, transform_indices = @transform_15, window_bounds = array<i64: 256, 128>}, {pipeline_mode = #tpu.pipeline_mode<synchronous>, transform_indices = @transform_16, window_bounds = array<i64: 1, 128>}, {pipeline_mode = #tpu.pipeline_mode<synchronous>, transform_indices = @transform_17, window_bounds = array<i64: 128, 10>}, {pipeline_mode = #tpu.pipeline_mode<synchronous>, transform_indices = @transform_18, window_bounds = array<i64: 1, 10>}, {transform_indices = @transform_19, window_bounds = array<i64: 1, 1, 10>}]} {
    %cst = arith.constant 0.000000e+00 : f32
    %0 = vector.broadcast %cst : f32 to vector<28x168xf32>
    %c0 = arith.constant 0 : index
    %c0_0 = arith.constant 0 : index
    %c0_1 = arith.constant 0 : index
    %c0_2 = arith.constant 0 : index
    %1 = vector.load %arg1[%c0, %c0_0, %c0_1, %c0_2] : memref<1x3x32x32xf32, #tpu.memory_space<vmem>>, vector<1x1x28x32xf32>
    %2 = vector.shape_cast %1 : vector<1x1x28x32xf32> to vector<28x32xf32>
    %c0_3 = arith.constant 0 : index
    %c0_4 = arith.constant 0 : index
    %3 = vector.load %arg2[%c0_3, %c0_4] : memref<480x168xf32, #tpu.memory_space<vmem>>, vector<32x168xf32>
    %cst_5 = arith.constant dense<0.000000e+00> : vector<28x168xf32>
    %4 = tpu.matmul %2, %3, %cst_5 {dimension_numbers = #tpu.dot_dimension_numbers<[1], [0], [0], [1], [0, 0, 1, 1], [], []>} : vector<28x32xf32>, vector<32x168xf32>, vector<28x168xf32> -> vector<28x168xf32>
    %5 = arith.addf %0, %4 : vector<28x168xf32>
    %c0_6 = arith.constant 0 : index
    %c1 = arith.constant 1 : index
    %c0_7 = arith.constant 0 : index
    %c0_8 = arith.constant 0 : index
    %6 = vector.load %arg1[%c0_6, %c1, %c0_7, %c0_8] : memref<1x3x32x32xf32, #tpu.memory_space<vmem>>, vector<1x1x28x32xf32>
    %7 = vector.shape_cast %6 : vector<1x1x28x32xf32> to vector<28x32xf32>
    %c32 = arith.constant 32 : index
    %c0_9 = arith.constant 0 : index
    %8 = vector.load %arg2[%c32, %c0_9] : memref<480x168xf32, #tpu.memory_space<vmem>>, vector<32x168xf32>
    %cst_10 = arith.constant dense<0.000000e+00> : vector<28x168xf32>
    %9 = tpu.matmul %7, %8, %cst_10 {dimension_numbers = #tpu.dot_dimension_numbers<[1], [0], [0], [1], [0, 0, 1, 1], [], []>} : vector<28x32xf32>, vector<32x168xf32>, vector<28x168xf32> -> vector<28x168xf32>
    %10 = arith.addf %5, %9 : vector<28x168xf32>
    %c0_11 = arith.constant 0 : index
    %c2 = arith.constant 2 : index
    %c0_12 = arith.constant 0 : index
    %c0_13 = arith.constant 0 : index
    %11 = vector.load %arg1[%c0_11, %c2, %c0_12, %c0_13] : memref<1x3x32x32xf32, #tpu.memory_space<vmem>>, vector<1x1x28x32xf32>
    %12 = vector.shape_cast %11 : vector<1x1x28x32xf32> to vector<28x32xf32>
    %c64 = arith.constant 64 : index
    %c0_14 = arith.constant 0 : index
    %13 = vector.load %arg2[%c64, %c0_14] : memref<480x168xf32, #tpu.memory_space<vmem>>, vector<32x168xf32>
    %cst_15 = arith.constant dense<0.000000e+00> : vector<28x168xf32>
    %14 = tpu.matmul %12, %13, %cst_15 {dimension_numbers = #tpu.dot_dimension_numbers<[1], [0], [0], [1], [0, 0, 1, 1], [], []>} : vector<28x32xf32>, vector<32x168xf32>, vector<28x168xf32> -> vector<28x168xf32>
    %15 = arith.addf %10, %14 : vector<28x168xf32>
    %c0_16 = arith.constant 0 : index
    %c0_17 = arith.constant 0 : index
    %c1_18 = arith.constant 1 : index
    %c0_19 = arith.constant 0 : index
    %16 = vector.load %arg1[%c0_16, %c0_17, %c1_18, %c0_19] : memref<1x3x32x32xf32, #tpu.memory_space<vmem>>, vector<1x1x28x32xf32>
    %17 = vector.shape_cast %16 : vector<1x1x28x32xf32> to vector<28x32xf32>
    %c96 = arith.constant 96 : index
    %c0_20 = arith.constant 0 : index
    %18 = vector.load %arg2[%c96, %c0_20] : memref<480x168xf32, #tpu.memory_space<vmem>>, vector<32x168xf32>
    %cst_21 = arith.constant dense<0.000000e+00> : vector<28x168xf32>
    %19 = tpu.matmul %17, %18, %cst_21 {dimension_numbers = #tpu.dot_dimension_numbers<[1], [0], [0], [1], [0, 0, 1, 1], [], []>} : vector<28x32xf32>, vector<32x168xf32>, vector<28x168xf32> -> vector<28x168xf32>
    %20 = arith.addf %15, %19 : vector<28x168xf32>
    %c0_22 = arith.constant 0 : index
    %c1_23 = arith.constant 1 : index
    %c1_24 = arith.constant 1 : index
    %c0_25 = arith.constant 0 : index
    %21 = vector.load %arg1[%c0_22, %c1_23, %c1_24, %c0_25] : memref<1x3x32x32xf32, #tpu.memory_space<vmem>>, vector<1x1x28x32xf32>
    %22 = vector.shape_cast %21 : vector<1x1x28x32xf32> to vector<28x32xf32>
    %c128 = arith.constant 128 : index
    %c0_26 = arith.constant 0 : index
    %23 = vector.load %arg2[%c128, %c0_26] : memref<480x168xf32, #tpu.memory_space<vmem>>, vector<32x168xf32>
    %cst_27 = arith.constant dense<0.000000e+00> : vector<28x168xf32>
    %24 = tpu.matmul %22, %23, %cst_27 {dimension_numbers = #tpu.dot_dimension_numbers<[1], [0], [0], [1], [0, 0, 1, 1], [], []>} : vector<28x32xf32>, vector<32x168xf32>, vector<28x168xf32> -> vector<28x168xf32>
    %25 = arith.addf %20, %24 : vector<28x168xf32>
    %c0_28 = arith.constant 0 : index
    %c2_29 = arith.constant 2 : index
    %c1_30 = arith.constant 1 : index
    %c0_31 = arith.constant 0 : index
    %26 = vector.load %arg1[%c0_28, %c2_29, %c1_30, %c0_31] : memref<1x3x32x32xf32, #tpu.memory_space<vmem>>, vector<1x1x28x32xf32>
    %27 = vector.shape_cast %26 : vector<1x1x28x32xf32> to vector<28x32xf32>
    %c160 = arith.constant 160 : index
    %c0_32 = arith.constant 0 : index
    %28 = vector.load %arg2[%c160, %c0_32] : memref<480x168xf32, #tpu.memory_space<vmem>>, vector<32x168xf32>
    %cst_33 = arith.constant dense<0.000000e+00> : vector<28x168xf32>
    %29 = tpu.matmul %27, %28, %cst_33 {dimension_numbers = #tpu.dot_dimension_numbers<[1], [0], [0], [1], [0, 0, 1, 1], [], []>} : vector<28x32xf32>, vector<32x168xf32>, vector<28x168xf32> -> vector<28x168xf32>
    %30 = arith.addf %25, %29 : vector<28x168xf32>
    %c0_34 = arith.constant 0 : index
    %c0_35 = arith.constant 0 : index
    %c2_36 = arith.constant 2 : index
    %c0_37 = arith.constant 0 : index
    %31 = vector.load %arg1[%c0_34, %c0_35, %c2_36, %c0_37] : memref<1x3x32x32xf32, #tpu.memory_space<vmem>>, vector<1x1x28x32xf32>
    %32 = vector.shape_cast %31 : vector<1x1x28x32xf32> to vector<28x32xf32>
    %c192 = arith.constant 192 : index
    %c0_38 = arith.constant 0 : index
    %33 = vector.load %arg2[%c192, %c0_38] : memref<480x168xf32, #tpu.memory_space<vmem>>, vector<32x168xf32>
    %cst_39 = arith.constant dense<0.000000e+00> : vector<28x168xf32>
    %34 = tpu.matmul %32, %33, %cst_39 {dimension_numbers = #tpu.dot_dimension_numbers<[1], [0], [0], [1], [0, 0, 1, 1], [], []>} : vector<28x32xf32>, vector<32x168xf32>, vector<28x168xf32> -> vector<28x168xf32>
    %35 = arith.addf %30, %34 : vector<28x168xf32>
    %c0_40 = arith.constant 0 : index
    %c1_41 = arith.constant 1 : index
    %c2_42 = arith.constant 2 : index
    %c0_43 = arith.constant 0 : index
    %36 = vector.load %arg1[%c0_40, %c1_41, %c2_42, %c0_43] : memref<1x3x32x32xf32, #tpu.memory_space<vmem>>, vector<1x1x28x32xf32>
    %37 = vector.shape_cast %36 : vector<1x1x28x32xf32> to vector<28x32xf32>
    %c224 = arith.constant 224 : index
    %c0_44 = arith.constant 0 : index
    %38 = vector.load %arg2[%c224, %c0_44] : memref<480x168xf32, #tpu.memory_space<vmem>>, vector<32x168xf32>
    %cst_45 = arith.constant dense<0.000000e+00> : vector<28x168xf32>
    %39 = tpu.matmul %37, %38, %cst_45 {dimension_numbers = #tpu.dot_dimension_numbers<[1], [0], [0], [1], [0, 0, 1, 1], [], []>} : vector<28x32xf32>, vector<32x168xf32>, vector<28x168xf32> -> vector<28x168xf32>
    %40 = arith.addf %35, %39 : vector<28x168xf32>
    %c0_46 = arith.constant 0 : index
    %c2_47 = arith.constant 2 : index
    %c2_48 = arith.constant 2 : index
    %c0_49 = arith.constant 0 : index
    %41 = vector.load %arg1[%c0_46, %c2_47, %c2_48, %c0_49] : memref<1x3x32x32xf32, #tpu.memory_space<vmem>>, vector<1x1x28x32xf32>
    %42 = vector.shape_cast %41 : vector<1x1x28x32xf32> to vector<28x32xf32>
    %c256 = arith.constant 256 : index
    %c0_50 = arith.constant 0 : index
    %43 = vector.load %arg2[%c256, %c0_50] : memref<480x168xf32, #tpu.memory_space<vmem>>, vector<32x168xf32>
    %cst_51 = arith.constant dense<0.000000e+00> : vector<28x168xf32>
    %44 = tpu.matmul %42, %43, %cst_51 {dimension_numbers = #tpu.dot_dimension_numbers<[1], [0], [0], [1], [0, 0, 1, 1], [], []>} : vector<28x32xf32>, vector<32x168xf32>, vector<28x168xf32> -> vector<28x168xf32>
    %45 = arith.addf %40, %44 : vector<28x168xf32>
    %c0_52 = arith.constant 0 : index
    %c0_53 = arith.constant 0 : index
    %c3 = arith.constant 3 : index
    %c0_54 = arith.constant 0 : index
    %46 = vector.load %arg1[%c0_52, %c0_53, %c3, %c0_54] : memref<1x3x32x32xf32, #tpu.memory_space<vmem>>, vector<1x1x28x32xf32>
    %47 = vector.shape_cast %46 : vector<1x1x28x32xf32> to vector<28x32xf32>
    %c288 = arith.constant 288 : index
    %c0_55 = arith.constant 0 : index
    %48 = vector.load %arg2[%c288, %c0_55] : memref<480x168xf32, #tpu.memory_space<vmem>>, vector<32x168xf32>
    %cst_56 = arith.constant dense<0.000000e+00> : vector<28x168xf32>
    %49 = tpu.matmul %47, %48, %cst_56 {dimension_numbers = #tpu.dot_dimension_numbers<[1], [0], [0], [1], [0, 0, 1, 1], [], []>} : vector<28x32xf32>, vector<32x168xf32>, vector<28x168xf32> -> vector<28x168xf32>
    %50 = arith.addf %45, %49 : vector<28x168xf32>
    %c0_57 = arith.constant 0 : index
    %c1_58 = arith.constant 1 : index
    %c3_59 = arith.constant 3 : index
    %c0_60 = arith.constant 0 : index
    %51 = vector.load %arg1[%c0_57, %c1_58, %c3_59, %c0_60] : memref<1x3x32x32xf32, #tpu.memory_space<vmem>>, vector<1x1x28x32xf32>
    %52 = vector.shape_cast %51 : vector<1x1x28x32xf32> to vector<28x32xf32>
    %c320 = arith.constant 320 : index
    %c0_61 = arith.constant 0 : index
    %53 = vector.load %arg2[%c320, %c0_61] : memref<480x168xf32, #tpu.memory_space<vmem>>, vector<32x168xf32>
    %cst_62 = arith.constant dense<0.000000e+00> : vector<28x168xf32>
    %54 = tpu.matmul %52, %53, %cst_62 {dimension_numbers = #tpu.dot_dimension_numbers<[1], [0], [0], [1], [0, 0, 1, 1], [], []>} : vector<28x32xf32>, vector<32x168xf32>, vector<28x168xf32> -> vector<28x168xf32>
    %55 = arith.addf %50, %54 : vector<28x168xf32>
    %c0_63 = arith.constant 0 : index
    %c2_64 = arith.constant 2 : index
    %c3_65 = arith.constant 3 : index
    %c0_66 = arith.constant 0 : index
    %56 = vector.load %arg1[%c0_63, %c2_64, %c3_65, %c0_66] : memref<1x3x32x32xf32, #tpu.memory_space<vmem>>, vector<1x1x28x32xf32>
    %57 = vector.shape_cast %56 : vector<1x1x28x32xf32> to vector<28x32xf32>
    %c352 = arith.constant 352 : index
    %c0_67 = arith.constant 0 : index
    %58 = vector.load %arg2[%c352, %c0_67] : memref<480x168xf32, #tpu.memory_space<vmem>>, vector<32x168xf32>
    %cst_68 = arith.constant dense<0.000000e+00> : vector<28x168xf32>
    %59 = tpu.matmul %57, %58, %cst_68 {dimension_numbers = #tpu.dot_dimension_numbers<[1], [0], [0], [1], [0, 0, 1, 1], [], []>} : vector<28x32xf32>, vector<32x168xf32>, vector<28x168xf32> -> vector<28x168xf32>
    %60 = arith.addf %55, %59 : vector<28x168xf32>
    %c0_69 = arith.constant 0 : index
    %c0_70 = arith.constant 0 : index
    %c4 = arith.constant 4 : index
    %c0_71 = arith.constant 0 : index
    %61 = vector.load %arg1[%c0_69, %c0_70, %c4, %c0_71] : memref<1x3x32x32xf32, #tpu.memory_space<vmem>>, vector<1x1x28x32xf32>
    %62 = vector.shape_cast %61 : vector<1x1x28x32xf32> to vector<28x32xf32>
    %c384 = arith.constant 384 : index
    %c0_72 = arith.constant 0 : index
    %63 = vector.load %arg2[%c384, %c0_72] : memref<480x168xf32, #tpu.memory_space<vmem>>, vector<32x168xf32>
    %cst_73 = arith.constant dense<0.000000e+00> : vector<28x168xf32>
    %64 = tpu.matmul %62, %63, %cst_73 {dimension_numbers = #tpu.dot_dimension_numbers<[1], [0], [0], [1], [0, 0, 1, 1], [], []>} : vector<28x32xf32>, vector<32x168xf32>, vector<28x168xf32> -> vector<28x168xf32>
    %65 = arith.addf %60, %64 : vector<28x168xf32>
    %c0_74 = arith.constant 0 : index
    %c1_75 = arith.constant 1 : index
    %c4_76 = arith.constant 4 : index
    %c0_77 = arith.constant 0 : index
    %66 = vector.load %arg1[%c0_74, %c1_75, %c4_76, %c0_77] : memref<1x3x32x32xf32, #tpu.memory_space<vmem>>, vector<1x1x28x32xf32>
    %67 = vector.shape_cast %66 : vector<1x1x28x32xf32> to vector<28x32xf32>
    %c416 = arith.constant 416 : index
    %c0_78 = arith.constant 0 : index
    %68 = vector.load %arg2[%c416, %c0_78] : memref<480x168xf32, #tpu.memory_space<vmem>>, vector<32x168xf32>
    %cst_79 = arith.constant dense<0.000000e+00> : vector<28x168xf32>
    %69 = tpu.matmul %67, %68, %cst_79 {dimension_numbers = #tpu.dot_dimension_numbers<[1], [0], [0], [1], [0, 0, 1, 1], [], []>} : vector<28x32xf32>, vector<32x168xf32>, vector<28x168xf32> -> vector<28x168xf32>
    %70 = arith.addf %65, %69 : vector<28x168xf32>
    %c0_80 = arith.constant 0 : index
    %c2_81 = arith.constant 2 : index
    %c4_82 = arith.constant 4 : index
    %c0_83 = arith.constant 0 : index
    %71 = vector.load %arg1[%c0_80, %c2_81, %c4_82, %c0_83] : memref<1x3x32x32xf32, #tpu.memory_space<vmem>>, vector<1x1x28x32xf32>
    %72 = vector.shape_cast %71 : vector<1x1x28x32xf32> to vector<28x32xf32>
    %c448 = arith.constant 448 : index
    %c0_84 = arith.constant 0 : index
    %73 = vector.load %arg2[%c448, %c0_84] : memref<480x168xf32, #tpu.memory_space<vmem>>, vector<32x168xf32>
    %cst_85 = arith.constant dense<0.000000e+00> : vector<28x168xf32>
    %74 = tpu.matmul %72, %73, %cst_85 {dimension_numbers = #tpu.dot_dimension_numbers<[1], [0], [0], [1], [0, 0, 1, 1], [], []>} : vector<28x32xf32>, vector<32x168xf32>, vector<28x168xf32> -> vector<28x168xf32>
    %75 = arith.addf %70, %74 : vector<28x168xf32>
    %c0_86 = arith.constant 0 : index
    %c0_87 = arith.constant 0 : index
    %76 = vector.load %arg3[%c0_86, %c0_87] : memref<1x168xf32, #tpu.memory_space<vmem>>, vector<1x168xf32>
    %77 = vector.broadcast %76 : vector<1x168xf32> to vector<28x168xf32>
    %78 = arith.addf %75, %77 : vector<28x168xf32>
    %cst_88 = arith.constant 0.000000e+00 : f32
    %79 = vector.broadcast %cst_88 : f32 to vector<28x168xf32>
    %80 = arith.maximumf %78, %79 : vector<28x168xf32>
    %c0_89 = arith.constant 0 : index
    %c0_90 = arith.constant 0 : index
    %81 = vector.load %arg6[%c0_89, %c0_90] : memref<14x28xf32, #tpu.memory_space<vmem>>, vector<14x28xf32>
    %cst_91 = arith.constant dense<0.000000e+00> : vector<14x168xf32>
    %82 = tpu.matmul %81, %80, %cst_91 {dimension_numbers = #tpu.dot_dimension_numbers<[1], [0], [0], [1], [0, 0, 1, 1], [], []>} : vector<14x28xf32>, vector<28x168xf32>, vector<14x168xf32> -> vector<14x168xf32>
    %c0_92 = arith.constant 0 : index
    %c0_93 = arith.constant 0 : index
    %83 = vector.load %arg7[%c0_92, %c0_93] : memref<14x28xf32, #tpu.memory_space<vmem>>, vector<14x28xf32>
    %cst_94 = arith.constant dense<0.000000e+00> : vector<14x168xf32>
    %84 = tpu.matmul %83, %80, %cst_94 {dimension_numbers = #tpu.dot_dimension_numbers<[1], [0], [0], [1], [0, 0, 1, 1], [], []>} : vector<14x28xf32>, vector<28x168xf32>, vector<14x168xf32> -> vector<14x168xf32>
    %85 = arith.maximumf %82, %84 : vector<14x168xf32>
    %c0_95 = arith.constant 0 : index
    %c0_96 = arith.constant 0 : index
    %86 = vector.load %arg8[%c0_95, %c0_96] : memref<168x84xf32, #tpu.memory_space<vmem>>, vector<168x84xf32>
    %cst_97 = arith.constant dense<0.000000e+00> : vector<14x84xf32>
    %87 = tpu.matmul %85, %86, %cst_97 {dimension_numbers = #tpu.dot_dimension_numbers<[1], [0], [0], [1], [0, 0, 1, 1], [], []>} : vector<14x168xf32>, vector<168x84xf32>, vector<14x84xf32> -> vector<14x84xf32>
    %c0_98 = arith.constant 0 : index
    %c0_99 = arith.constant 0 : index
    %88 = vector.load %arg9[%c0_98, %c0_99] : memref<168x84xf32, #tpu.memory_space<vmem>>, vector<168x84xf32>
    %cst_100 = arith.constant dense<0.000000e+00> : vector<14x84xf32>
    %89 = tpu.matmul %85, %88, %cst_100 {dimension_numbers = #tpu.dot_dimension_numbers<[1], [0], [0], [1], [0, 0, 1, 1], [], []>} : vector<14x168xf32>, vector<168x84xf32>, vector<14x84xf32> -> vector<14x84xf32>
    %90 = arith.maximumf %87, %89 : vector<14x84xf32>
    %cst_101 = arith.constant 0.000000e+00 : f32
    %91 = vector.broadcast %cst_101 : f32 to vector<10x120xf32>
    %92 = vector.extract_strided_slice %90 {offsets = [0, 0], sizes = [10, 84], strides = [1, 1]} : vector<14x84xf32> to vector<10x84xf32>
    %c0_102 = arith.constant 0 : index
    %c0_103 = arith.constant 0 : index
    %93 = vector.load %arg4[%c0_102, %c0_103] : memref<420x120xf32, #tpu.memory_space<vmem>>, vector<84x120xf32>
    %cst_104 = arith.constant dense<0.000000e+00> : vector<10x120xf32>
    %94 = tpu.matmul %92, %93, %cst_104 {dimension_numbers = #tpu.dot_dimension_numbers<[1], [0], [0], [1], [0, 0, 1, 1], [], []>} : vector<10x84xf32>, vector<84x120xf32>, vector<10x120xf32> -> vector<10x120xf32>
    %95 = arith.addf %91, %94 : vector<10x120xf32>
    %96 = vector.extract_strided_slice %90 {offsets = [1, 0], sizes = [10, 84], strides = [1, 1]} : vector<14x84xf32> to vector<10x84xf32>
    %c84 = arith.constant 84 : index
    %c0_105 = arith.constant 0 : index
    %97 = vector.load %arg4[%c84, %c0_105] : memref<420x120xf32, #tpu.memory_space<vmem>>, vector<84x120xf32>
    %cst_106 = arith.constant dense<0.000000e+00> : vector<10x120xf32>
    %98 = tpu.matmul %96, %97, %cst_106 {dimension_numbers = #tpu.dot_dimension_numbers<[1], [0], [0], [1], [0, 0, 1, 1], [], []>} : vector<10x84xf32>, vector<84x120xf32>, vector<10x120xf32> -> vector<10x120xf32>
    %99 = arith.addf %95, %98 : vector<10x120xf32>
    %100 = vector.extract_strided_slice %90 {offsets = [2, 0], sizes = [10, 84], strides = [1, 1]} : vector<14x84xf32> to vector<10x84xf32>
    %c168 = arith.constant 168 : index
    %c0_107 = arith.constant 0 : index
    %101 = vector.load %arg4[%c168, %c0_107] : memref<420x120xf32, #tpu.memory_space<vmem>>, vector<84x120xf32>
    %cst_108 = arith.constant dense<0.000000e+00> : vector<10x120xf32>
    %102 = tpu.matmul %100, %101, %cst_108 {dimension_numbers = #tpu.dot_dimension_numbers<[1], [0], [0], [1], [0, 0, 1, 1], [], []>} : vector<10x84xf32>, vector<84x120xf32>, vector<10x120xf32> -> vector<10x120xf32>
    %103 = arith.addf %99, %102 : vector<10x120xf32>
    %104 = vector.extract_strided_slice %90 {offsets = [3, 0], sizes = [10, 84], strides = [1, 1]} : vector<14x84xf32> to vector<10x84xf32>
    %c252 = arith.constant 252 : index
    %c0_109 = arith.constant 0 : index
    %105 = vector.load %arg4[%c252, %c0_109] : memref<420x120xf32, #tpu.memory_space<vmem>>, vector<84x120xf32>
    %cst_110 = arith.constant dense<0.000000e+00> : vector<10x120xf32>
    %106 = tpu.matmul %104, %105, %cst_110 {dimension_numbers = #tpu.dot_dimension_numbers<[1], [0], [0], [1], [0, 0, 1, 1], [], []>} : vector<10x84xf32>, vector<84x120xf32>, vector<10x120xf32> -> vector<10x120xf32>
    %107 = arith.addf %103, %106 : vector<10x120xf32>
    %108 = vector.extract_strided_slice %90 {offsets = [4, 0], sizes = [10, 84], strides = [1, 1]} : vector<14x84xf32> to vector<10x84xf32>
    %c336 = arith.constant 336 : index
    %c0_111 = arith.constant 0 : index
    %109 = vector.load %arg4[%c336, %c0_111] : memref<420x120xf32, #tpu.memory_space<vmem>>, vector<84x120xf32>
    %cst_112 = arith.constant dense<0.000000e+00> : vector<10x120xf32>
    %110 = tpu.matmul %108, %109, %cst_112 {dimension_numbers = #tpu.dot_dimension_numbers<[1], [0], [0], [1], [0, 0, 1, 1], [], []>} : vector<10x84xf32>, vector<84x120xf32>, vector<10x120xf32> -> vector<10x120xf32>
    %111 = arith.addf %107, %110 : vector<10x120xf32>
    %c0_113 = arith.constant 0 : index
    %c0_114 = arith.constant 0 : index
    %112 = vector.load %arg5[%c0_113, %c0_114] : memref<1x120xf32, #tpu.memory_space<vmem>>, vector<1x120xf32>
    %113 = vector.broadcast %112 : vector<1x120xf32> to vector<10x120xf32>
    %114 = arith.addf %111, %113 : vector<10x120xf32>
    %cst_115 = arith.constant 0.000000e+00 : f32
    %115 = vector.broadcast %cst_115 : f32 to vector<10x120xf32>
    %116 = arith.maximumf %114, %115 : vector<10x120xf32>
    %c0_116 = arith.constant 0 : index
    %c0_117 = arith.constant 0 : index
    %117 = vector.load %arg10[%c0_116, %c0_117] : memref<5x10xf32, #tpu.memory_space<vmem>>, vector<5x10xf32>
    %cst_118 = arith.constant dense<0.000000e+00> : vector<5x120xf32>
    %118 = tpu.matmul %117, %116, %cst_118 {dimension_numbers = #tpu.dot_dimension_numbers<[1], [0], [0], [1], [0, 0, 1, 1], [], []>} : vector<5x10xf32>, vector<10x120xf32>, vector<5x120xf32> -> vector<5x120xf32>
    %c0_119 = arith.constant 0 : index
    %c0_120 = arith.constant 0 : index
    %119 = vector.load %arg11[%c0_119, %c0_120] : memref<5x10xf32, #tpu.memory_space<vmem>>, vector<5x10xf32>
    %cst_121 = arith.constant dense<0.000000e+00> : vector<5x120xf32>
    %120 = tpu.matmul %119, %116, %cst_121 {dimension_numbers = #tpu.dot_dimension_numbers<[1], [0], [0], [1], [0, 0, 1, 1], [], []>} : vector<5x10xf32>, vector<10x120xf32>, vector<5x120xf32> -> vector<5x120xf32>
    %121 = arith.maximumf %118, %120 : vector<5x120xf32>
    %c0_122 = arith.constant 0 : index
    %c0_123 = arith.constant 0 : index
    %122 = vector.load %arg12[%c0_122, %c0_123] : memref<120x60xf32, #tpu.memory_space<vmem>>, vector<120x60xf32>
    %cst_124 = arith.constant dense<0.000000e+00> : vector<5x60xf32>
    %123 = tpu.matmul %121, %122, %cst_124 {dimension_numbers = #tpu.dot_dimension_numbers<[1], [0], [0], [1], [0, 0, 1, 1], [], []>} : vector<5x120xf32>, vector<120x60xf32>, vector<5x60xf32> -> vector<5x60xf32>
    %c0_125 = arith.constant 0 : index
    %c0_126 = arith.constant 0 : index
    %124 = vector.load %arg13[%c0_125, %c0_126] : memref<120x60xf32, #tpu.memory_space<vmem>>, vector<120x60xf32>
    %cst_127 = arith.constant dense<0.000000e+00> : vector<5x60xf32>
    %125 = tpu.matmul %121, %124, %cst_127 {dimension_numbers = #tpu.dot_dimension_numbers<[1], [0], [0], [1], [0, 0, 1, 1], [], []>} : vector<5x120xf32>, vector<120x60xf32>, vector<5x60xf32> -> vector<5x60xf32>
    %126 = arith.maximumf %123, %125 : vector<5x60xf32>
    %c0_128 = arith.constant 0 : index
    %c0_129 = arith.constant 0 : index
    %127 = vector.load %arg15[%c0_128, %c0_129] : memref<1x256xf32, #tpu.memory_space<vmem>>, vector<1x256xf32>
    %128 = vector.extract_strided_slice %126 {offsets = [0, 0], sizes = [1, 60], strides = [1, 1]} : vector<5x60xf32> to vector<1x60xf32>
    %c0_130 = arith.constant 0 : index
    %c0_131 = arith.constant 0 : index
    %c0_132 = arith.constant 0 : index
    %129 = vector.load %arg14[%c0_130, %c0_131, %c0_132] : memref<5x60x256xf32, #tpu.memory_space<vmem>>, vector<1x60x256xf32>
    %130 = vector.shape_cast %129 : vector<1x60x256xf32> to vector<60x256xf32>
    %cst_133 = arith.constant dense<0.000000e+00> : vector<1x256xf32>
    %131 = tpu.matmul %128, %130, %cst_133 {dimension_numbers = #tpu.dot_dimension_numbers<[1], [0], [0], [1], [0, 0, 1, 1], [], []>} : vector<1x60xf32>, vector<60x256xf32>, vector<1x256xf32> -> vector<1x256xf32>
    %132 = arith.addf %127, %131 : vector<1x256xf32>
    %133 = vector.extract_strided_slice %126 {offsets = [1, 0], sizes = [1, 60], strides = [1, 1]} : vector<5x60xf32> to vector<1x60xf32>
    %c1_134 = arith.constant 1 : index
    %c0_135 = arith.constant 0 : index
    %c0_136 = arith.constant 0 : index
    %134 = vector.load %arg14[%c1_134, %c0_135, %c0_136] : memref<5x60x256xf32, #tpu.memory_space<vmem>>, vector<1x60x256xf32>
    %135 = vector.shape_cast %134 : vector<1x60x256xf32> to vector<60x256xf32>
    %cst_137 = arith.constant dense<0.000000e+00> : vector<1x256xf32>
    %136 = tpu.matmul %133, %135, %cst_137 {dimension_numbers = #tpu.dot_dimension_numbers<[1], [0], [0], [1], [0, 0, 1, 1], [], []>} : vector<1x60xf32>, vector<60x256xf32>, vector<1x256xf32> -> vector<1x256xf32>
    %137 = arith.addf %132, %136 : vector<1x256xf32>
    %138 = vector.extract_strided_slice %126 {offsets = [2, 0], sizes = [1, 60], strides = [1, 1]} : vector<5x60xf32> to vector<1x60xf32>
    %c2_138 = arith.constant 2 : index
    %c0_139 = arith.constant 0 : index
    %c0_140 = arith.constant 0 : index
    %139 = vector.load %arg14[%c2_138, %c0_139, %c0_140] : memref<5x60x256xf32, #tpu.memory_space<vmem>>, vector<1x60x256xf32>
    %140 = vector.shape_cast %139 : vector<1x60x256xf32> to vector<60x256xf32>
    %cst_141 = arith.constant dense<0.000000e+00> : vector<1x256xf32>
    %141 = tpu.matmul %138, %140, %cst_141 {dimension_numbers = #tpu.dot_dimension_numbers<[1], [0], [0], [1], [0, 0, 1, 1], [], []>} : vector<1x60xf32>, vector<60x256xf32>, vector<1x256xf32> -> vector<1x256xf32>
    %142 = arith.addf %137, %141 : vector<1x256xf32>
    %143 = vector.extract_strided_slice %126 {offsets = [3, 0], sizes = [1, 60], strides = [1, 1]} : vector<5x60xf32> to vector<1x60xf32>
    %c3_142 = arith.constant 3 : index
    %c0_143 = arith.constant 0 : index
    %c0_144 = arith.constant 0 : index
    %144 = vector.load %arg14[%c3_142, %c0_143, %c0_144] : memref<5x60x256xf32, #tpu.memory_space<vmem>>, vector<1x60x256xf32>
    %145 = vector.shape_cast %144 : vector<1x60x256xf32> to vector<60x256xf32>
    %cst_145 = arith.constant dense<0.000000e+00> : vector<1x256xf32>
    %146 = tpu.matmul %143, %145, %cst_145 {dimension_numbers = #tpu.dot_dimension_numbers<[1], [0], [0], [1], [0, 0, 1, 1], [], []>} : vector<1x60xf32>, vector<60x256xf32>, vector<1x256xf32> -> vector<1x256xf32>
    %147 = arith.addf %142, %146 : vector<1x256xf32>
    %148 = vector.extract_strided_slice %126 {offsets = [4, 0], sizes = [1, 60], strides = [1, 1]} : vector<5x60xf32> to vector<1x60xf32>
    %c4_146 = arith.constant 4 : index
    %c0_147 = arith.constant 0 : index
    %c0_148 = arith.constant 0 : index
    %149 = vector.load %arg14[%c4_146, %c0_147, %c0_148] : memref<5x60x256xf32, #tpu.memory_space<vmem>>, vector<1x60x256xf32>
    %150 = vector.shape_cast %149 : vector<1x60x256xf32> to vector<60x256xf32>
    %cst_149 = arith.constant dense<0.000000e+00> : vector<1x256xf32>
    %151 = tpu.matmul %148, %150, %cst_149 {dimension_numbers = #tpu.dot_dimension_numbers<[1], [0], [0], [1], [0, 0, 1, 1], [], []>} : vector<1x60xf32>, vector<60x256xf32>, vector<1x256xf32> -> vector<1x256xf32>
    %152 = arith.addf %147, %151 : vector<1x256xf32>
    %cst_150 = arith.constant 0.000000e+00 : f32
    %153 = vector.broadcast %cst_150 : f32 to vector<1x256xf32>
    %154 = arith.maximumf %152, %153 : vector<1x256xf32>
    %c0_151 = arith.constant 0 : index
    %c0_152 = arith.constant 0 : index
    %155 = vector.load %arg16[%c0_151, %c0_152] : memref<256x128xf32, #tpu.memory_space<vmem>>, vector<256x128xf32>
    %cst_153 = arith.constant dense<0.000000e+00> : vector<1x128xf32>
    %156 = tpu.matmul %154, %155, %cst_153 {dimension_numbers = #tpu.dot_dimension_numbers<[1], [0], [0], [1], [0, 0, 1, 1], [], []>} : vector<1x256xf32>, vector<256x128xf32>, vector<1x128xf32> -> vector<1x128xf32>
    %c0_154 = arith.constant 0 : index
    %c0_155 = arith.constant 0 : index
    %157 = vector.load %arg17[%c0_154, %c0_155] : memref<1x128xf32, #tpu.memory_space<vmem>>, vector<1x128xf32>
    %158 = arith.addf %156, %157 : vector<1x128xf32>
    %cst_156 = arith.constant 0.000000e+00 : f32
    %159 = vector.broadcast %cst_156 : f32 to vector<1x128xf32>
    %160 = arith.maximumf %158, %159 : vector<1x128xf32>
    %c0_157 = arith.constant 0 : index
    %c0_158 = arith.constant 0 : index
    %161 = vector.load %arg18[%c0_157, %c0_158] : memref<128x10xf32, #tpu.memory_space<vmem>>, vector<128x10xf32>
    %cst_159 = arith.constant dense<0.000000e+00> : vector<1x10xf32>
    %162 = tpu.matmul %160, %161, %cst_159 {dimension_numbers = #tpu.dot_dimension_numbers<[1], [0], [0], [1], [0, 0, 1, 1], [], []>} : vector<1x128xf32>, vector<128x10xf32>, vector<1x10xf32> -> vector<1x10xf32>
    %c0_160 = arith.constant 0 : index
    %c0_161 = arith.constant 0 : index
    %163 = vector.load %arg19[%c0_160, %c0_161] : memref<1x10xf32, #tpu.memory_space<vmem>>, vector<1x10xf32>
    %164 = arith.addf %162, %163 : vector<1x10xf32>
    %c0_162 = arith.constant 0 : index
    %c0_163 = arith.constant 0 : index
    %c0_164 = arith.constant 0 : index
    %165 = vector.load %arg20[%c0_162, %c0_163, %c0_164] : memref<1x1x10xf32, #tpu.memory_space<vmem>>, vector<1x1x10xf32>
    %166 = vector.shape_cast %165 : vector<1x1x10xf32> to vector<1x10xf32>
    %167 = vector.shape_cast %164 : vector<1x10xf32> to vector<1x1x10xf32>
    tpu.vector_store %arg20[%c0_162, %c0_163, %c0_164], %167 {strides = array<i32>} : memref<1x1x10xf32, #tpu.memory_space<vmem>>, vector<1x1x10xf32>,
    return
  }
  func.func @transform_0(%arg0: i32) -> (i32, i32, i32, i32) {
    %c0_i32 = arith.constant 0 : i32
    %c0_i32_0 = arith.constant 0 : i32
    %c0_i32_1 = arith.constant 0 : i32
    %c0_i32_2 = arith.constant 0 : i32
    return %arg0, %c0_i32, %c0_i32_0, %c0_i32_1 : i32, i32, i32, i32
  }
  func.func @transform_1(%arg0: i32) -> (i32, i32) {
    %c0_i32 = arith.constant 0 : i32
    %c0_i32_0 = arith.constant 0 : i32
    %c0_i32_1 = arith.constant 0 : i32
    return %c0_i32, %c0_i32_0 : i32, i32
  }
  func.func @transform_2(%arg0: i32) -> (i32, i32) {
    %c0_i32 = arith.constant 0 : i32
    %c0_i32_0 = arith.constant 0 : i32
    %c0_i32_1 = arith.constant 0 : i32
    return %c0_i32, %c0_i32_0 : i32, i32
  }
  func.func @transform_3(%arg0: i32) -> (i32, i32) {
    %c0_i32 = arith.constant 0 : i32
    %c0_i32_0 = arith.constant 0 : i32
    %c0_i32_1 = arith.constant 0 : i32
    return %c0_i32, %c0_i32_0 : i32, i32
  }
  func.func @transform_4(%arg0: i32) -> (i32, i32) {
    %c0_i32 = arith.constant 0 : i32
    %c0_i32_0 = arith.constant 0 : i32
    %c0_i32_1 = arith.constant 0 : i32
    return %c0_i32, %c0_i32_0 : i32, i32
  }
  func.func @transform_5(%arg0: i32) -> (i32, i32) {
    %c0_i32 = arith.constant 0 : i32
    %c0_i32_0 = arith.constant 0 : i32
    %c0_i32_1 = arith.constant 0 : i32
    return %c0_i32, %c0_i32_0 : i32, i32
  }
  func.func @transform_6(%arg0: i32) -> (i32, i32) {
    %c0_i32 = arith.constant 0 : i32
    %c0_i32_0 = arith.constant 0 : i32
    %c0_i32_1 = arith.constant 0 : i32
    return %c0_i32, %c0_i32_0 : i32, i32
  }
  func.func @transform_7(%arg0: i32) -> (i32, i32) {
    %c0_i32 = arith.constant 0 : i32
    %c0_i32_0 = arith.constant 0 : i32
    %c0_i32_1 = arith.constant 0 : i32
    return %c0_i32, %c0_i32_0 : i32, i32
  }
  func.func @transform_8(%arg0: i32) -> (i32, i32) {
    %c0_i32 = arith.constant 0 : i32
    %c0_i32_0 = arith.constant 0 : i32
    %c0_i32_1 = arith.constant 0 : i32
    return %c0_i32, %c0_i32_0 : i32, i32
  }
  func.func @transform_9(%arg0: i32) -> (i32, i32) {
    %c0_i32 = arith.constant 0 : i32
    %c0_i32_0 = arith.constant 0 : i32
    %c0_i32_1 = arith.constant 0 : i32
    return %c0_i32, %c0_i32_0 : i32, i32
  }
  func.func @transform_10(%arg0: i32) -> (i32, i32) {
    %c0_i32 = arith.constant 0 : i32
    %c0_i32_0 = arith.constant 0 : i32
    %c0_i32_1 = arith.constant 0 : i32
    return %c0_i32, %c0_i32_0 : i32, i32
  }
  func.func @transform_11(%arg0: i32) -> (i32, i32) {
    %c0_i32 = arith.constant 0 : i32
    %c0_i32_0 = arith.constant 0 : i32
    %c0_i32_1 = arith.constant 0 : i32
    return %c0_i32, %c0_i32_0 : i32, i32
  }
  func.func @transform_12(%arg0: i32) -> (i32, i32) {
    %c0_i32 = arith.constant 0 : i32
    %c0_i32_0 = arith.constant 0 : i32
    %c0_i32_1 = arith.constant 0 : i32
    return %c0_i32, %c0_i32_0 : i32, i32
  }
  func.func @transform_13(%arg0: i32) -> (i32, i32, i32) {
    %c0_i32 = arith.constant 0 : i32
    %c0_i32_0 = arith.constant 0 : i32
    %c0_i32_1 = arith.constant 0 : i32
    %c0_i32_2 = arith.constant 0 : i32
    return %c0_i32, %c0_i32_0, %c0_i32_1 : i32, i32, i32
  }
  func.func @transform_14(%arg0: i32) -> (i32, i32) {
    %c0_i32 = arith.constant 0 : i32
    %c0_i32_0 = arith.constant 0 : i32
    %c0_i32_1 = arith.constant 0 : i32
    return %c0_i32, %c0_i32_0 : i32, i32
  }
  func.func @transform_15(%arg0: i32) -> (i32, i32) {
    %c0_i32 = arith.constant 0 : i32
    %c0_i32_0 = arith.constant 0 : i32
    %c0_i32_1 = arith.constant 0 : i32
    return %c0_i32, %c0_i32_0 : i32, i32
  }
  func.func @transform_16(%arg0: i32) -> (i32, i32) {
    %c0_i32 = arith.constant 0 : i32
    %c0_i32_0 = arith.constant 0 : i32
    %c0_i32_1 = arith.constant 0 : i32
    return %c0_i32, %c0_i32_0 : i32, i32
  }
  func.func @transform_17(%arg0: i32) -> (i32, i32) {
    %c0_i32 = arith.constant 0 : i32
    %c0_i32_0 = arith.constant 0 : i32
    %c0_i32_1 = arith.constant 0 : i32
    return %c0_i32, %c0_i32_0 : i32, i32
  }
  func.func @transform_18(%arg0: i32) -> (i32, i32) {
    %c0_i32 = arith.constant 0 : i32
    %c0_i32_0 = arith.constant 0 : i32
    %c0_i32_1 = arith.constant 0 : i32
    return %c0_i32, %c0_i32_0 : i32, i32
  }
  func.func @transform_19(%arg0: i32) -> (i32, i32, i32) {
    %c0_i32 = arith.constant 0 : i32
    %c0_i32_0 = arith.constant 0 : i32
    %c0_i32_1 = arith.constant 0 : i32
    return %arg0, %c0_i32, %c0_i32_0 : i32, i32, i32
  }
}

</mosaic_0001>

<llo_original>
// kernel: conv_net_forward.1
$region0: #{conv_net_forward.1}
  #allocation0 [shape = 'u32[]', space=smem, size = 0x4, offset = 0x4, fixed_abs, tag = 'smem constant byte address 0x4 - core index']
  #allocation1 [shape = 'u32[144,128]{1,0:T(1,128)}', space=vmem, size = 0x12000, scoped, tag = 'internal scratch']
  %s0 = inlined_call_operand.vmem [shape: f32[2,3,32,32], index: 0, kind: input, shape index: {}]
  %s1 = inlined_call_operand.vmem [shape: f32[480,168], index: 1, kind: input, shape index: {}]
  %s2 = inlined_call_operand.vmem [shape: f32[1,168], index: 2, kind: input, shape index: {}]
  %s3 = inlined_call_operand.vmem [shape: f32[420,120], index: 3, kind: input, shape index: {}]
  %s4 = inlined_call_operand.vmem [shape: f32[1,120], index: 4, kind: input, shape index: {}]
  %s5 = inlined_call_operand.vmem [shape: f32[14,28], index: 5, kind: input, shape index: {}]
  %s6 = inlined_call_operand.vmem [shape: f32[14,28], index: 6, kind: input, shape index: {}]
  %s7 = inlined_call_operand.vmem [shape: f32[168,84], index: 7, kind: input, shape index: {}]
  %s8 = inlined_call_operand.vmem [shape: f32[168,84], index: 8, kind: input, shape index: {}]
  %s9 = inlined_call_operand.vmem [shape: f32[5,10], index: 9, kind: input, shape index: {}]
  %s10 = inlined_call_operand.vmem [shape: f32[5,10], index: 10, kind: input, shape index: {}]
  %s11 = inlined_call_operand.vmem [shape: f32[120,60], index: 11, kind: input, shape index: {}]
  %s12 = inlined_call_operand.vmem [shape: f32[120,60], index: 12, kind: input, shape index: {}]
  %s13 = inlined_call_operand.vmem [shape: f32[5,60,256], index: 13, kind: input, shape index: {}]
  %s14 = inlined_call_operand.vmem [shape: f32[1,256], index: 14, kind: input, shape index: {}]
  %s15 = inlined_call_operand.vmem [shape: f32[256,128], index: 15, kind: input, shape index: {}]
  %s16 = inlined_call_operand.vmem [shape: f32[1,128], index: 16, kind: input, shape index: {}]
  %s17 = inlined_call_operand.vmem [shape: f32[128,10], index: 17, kind: input, shape index: {}]
  %s18 = inlined_call_operand.vmem [shape: f32[1,10], index: 18, kind: input, shape index: {}]
  %s19 = inlined_call_operand.hbm [shape: f32[2,1,10], index: 19, kind: output, shape index: {}]
  %s20 = sld [smem:[#allocation0]]
  $region109: #{conv_net_forward.1} parent=0
    _
  %s22 = ssub.s32 1, %s20
  %s23 = scalar_select 0, %s22, %s20
  $region1: #{conv_net_forward.1} parent=0
    #allocation2 [shape = 'u8[1024]{0}', space=vmem, size = 0x400, scoped, tag = 'output window, operand 0']
    #allocation3 [shape = 's32[2]{0}', space=sflag, size = 0x8, scoped, tag = 'scoped memory for conv_net_forward.1']
    %24 = vsyncpa [#allocation3], 0
    %s25 = scalar_lea.sflag [#allocation3], 1
    %26 = vsyncpa %s25, 0
    loop: start=0, step=1, limit=4
    $region2: #{conv_net_forward.1} parent=1 // loop_pre_header
      _
    $region3: #{conv_net_forward.1} parent=1 // loop_header
      %s28 = sphi 0, %s32
      %p29 = scmp.ge.s32.totalorder %s28, 4
      %s38 = sphi 0, %s40
      %s41 = sphi 0, %s38
      %s42 = sphi 0, %s41
      %s58 = sphi 0, %s42
      %s62 = sphi 0, %s62
      %s64 = sphi 0, %s62
      %s65 = sphi 0, %s64
      %s79 = sphi 0, %s65
      %s83 = sphi 0, %s83
      %s85 = sphi 0, %s83
      %s86 = sphi 0, %s85
      %s100 = sphi 0, %s86
      %s104 = sphi 0, %s104
      %s106 = sphi 0, %s104
      %s107 = sphi 0, %s106
      %s121 = sphi 0, %s107
      %s125 = sphi 0, %s125
      %s127 = sphi 0, %s125
      %s128 = sphi 0, %s127
      %s142 = sphi 0, %s128
      %s146 = sphi 0, %s146
      %s148 = sphi 0, %s146
      %s149 = sphi 0, %s148
      %s163 = sphi 0, %s149
      %s167 = sphi 0, %s167
      %s169 = sphi 0, %s167
      %s170 = sphi 0, %s169
      %s184 = sphi 0, %s170
      %s188 = sphi 0, %s188
      %s190 = sphi 0, %s188
      %s191 = sphi 0, %s190
      %s205 = sphi 0, %s191
      %s209 = sphi 0, %s209
      %s211 = sphi 0, %s209
      %s212 = sphi 0, %s211
      %s226 = sphi 0, %s212
      %s230 = sphi 0, %s230
      %s232 = sphi 0, %s230
      %s233 = sphi 0, %s232
      %s247 = sphi 0, %s233
      %s251 = sphi 0, %s251
      %s253 = sphi 0, %s251
      %s254 = sphi 0, %s253
      %s268 = sphi 0, %s254
      %s272 = sphi 0, %s272
      %s274 = sphi 0, %s272
      %s275 = sphi 0, %s274
      %s289 = sphi 0, %s275
      %s293 = sphi 0, %s293
      %s295 = sphi 0, %s293
      %s296 = sphi 0, %s295
      %s310 = sphi 0, %s296
      %s314 = sphi 0, %s314
      %s316 = sphi 0, %s314
      %s317 = sphi 0, %s316
      %s331 = sphi 0, %s317
      %s335 = sphi 0, %s335
      %s337 = sphi 0, %s335
      %s338 = sphi 0, %s337
      %s352 = sphi 0, %s338
      %s356 = sphi 0, %s356
      %s358 = sphi 0, %s356
      %s359 = sphi 0, %s358
      %s373 = sphi 0, %s359
      %s377 = sphi 0, %s377
      %s379 = sphi 0, %s377
      %s380 = sphi 0, %s379
      %s394 = sphi 0, %s380
      %s398 = sphi 0, %s398
      %s400 = sphi 0, %s398
      %s401 = sphi 0, %s400
      %s415 = sphi 0, %s401
      %s419 = sphi 0, %s419
      %s421 = sphi 0, %s419
      %s422 = sphi 0, %s421
      %s436 = sphi 0, %s422
      %s442 = sphi 0, %s444
      %s445 = sphi 0, %s442
      %s446 = sphi 0, %s445
      %s462 = sphi 0, %s446
    $region4: #{conv_net_forward.1} parent=1 // loop_header_branch
      %31 = sbr.rel (%p29) target = $region8
    $region5: #{conv_net_forward.1} parent=1 // loop_body
      %s33 = ssub.s32 %s28, 1
      %s34 = ssub.s32 %s28, 2
      %s35 = sadd.s32 %s28, 1
      %s36 = ssub.s32 %s28, %s35
      %p37 = scmp.eq.s32.totalorder %s36, 0
      %s39 = sadd.s32 %s38, 1
      %s40 = scalar_select %p37, %s38, %s39
      %p43 = pneg %p37
      %p44 = scmp.eq.s32.totalorder %s28, 1
      %p45 = por %p43, %p44
      %p46 = scmp.ne.s32.totalorder %s38, %s41
      %p47 = scmp.eq.s32.totalorder %s28, 0
      %p48 = por %p46, %p47
      %p49 = scmp.ne.s32.totalorder %s38, %s41
      %p50 = scmp.eq.s32.totalorder %s33, 1
      %p51 = por %p49, %p50
      %p52 = scmp.ne.s32.totalorder %s41, %s42
      %p53 = scmp.eq.s32.totalorder %s33, 0
      %p54 = por %p52, %p53
      %p55 = scmp.ne.s32.totalorder %s41, %s42
      %p56 = scmp.eq.s32.totalorder %s34, 1
      %p57 = por %p55, %p56
      %p59 = scmp.ne.s32.totalorder %s42, %s58
      %p60 = scmp.eq.s32.totalorder %s34, 0
      %p61 = por %p59, %p60
      %s63 = sadd.s32 %s62, 1
      %p66 = scmp.eq.s32.totalorder %s28, 1
      %p67 = scmp.ne.s32.totalorder %s62, %s64
      %p68 = scmp.eq.s32.totalorder %s28, 0
      %p69 = por %p67, %p68
      %p70 = scmp.ne.s32.totalorder %s62, %s64
      %p71 = scmp.eq.s32.totalorder %s33, 1
      %p72 = por %p70, %p71
      %p73 = scmp.ne.s32.totalorder %s64, %s65
      %p74 = scmp.eq.s32.totalorder %s33, 0
      %p75 = por %p73, %p74
      %p76 = scmp.ne.s32.totalorder %s64, %s65
      %p77 = scmp.eq.s32.totalorder %s34, 1
      %p78 = por %p76, %p77
      %p80 = scmp.ne.s32.totalorder %s65, %s79
      %p81 = scmp.eq.s32.totalorder %s34, 0
      %p82 = por %p80, %p81
      %s84 = sadd.s32 %s83, 1
      %p87 = scmp.eq.s32.totalorder %s28, 1
      %p88 = scmp.ne.s32.totalorder %s83, %s85
      %p89 = scmp.eq.s32.totalorder %s28, 0
      %p90 = por %p88, %p89
      %p91 = scmp.ne.s32.totalorder %s83, %s85
      %p92 = scmp.eq.s32.totalorder %s33, 1
      %p93 = por %p91, %p92
      %p94 = scmp.ne.s32.totalorder %s85, %s86
      %p95 = scmp.eq.s32.totalorder %s33, 0
      %p96 = por %p94, %p95
      %p97 = scmp.ne.s32.totalorder %s85, %s86
      %p98 = scmp.eq.s32.totalorder %s34, 1
      %p99 = por %p97, %p98
      %p101 = scmp.ne.s32.totalorder %s86, %s100
      %p102 = scmp.eq.s32.totalorder %s34, 0
      %p103 = por %p101, %p102
      %s105 = sadd.s32 %s104, 1
      %p108 = scmp.eq.s32.totalorder %s28, 1
      %p109 = scmp.ne.s32.totalorder %s104, %s106
      %p110 = scmp.eq.s32.totalorder %s28, 0
      %p111 = por %p109, %p110
      %p112 = scmp.ne.s32.totalorder %s104, %s106
      %p113 = scmp.eq.s32.totalorder %s33, 1
      %p114 = por %p112, %p113
      %p115 = scmp.ne.s32.totalorder %s106, %s107
      %p116 = scmp.eq.s32.totalorder %s33, 0
      %p117 = por %p115, %p116
      %p118 = scmp.ne.s32.totalorder %s106, %s107
      %p119 = scmp.eq.s32.totalorder %s34, 1
      %p120 = por %p118, %p119
      %p122 = scmp.ne.s32.totalorder %s107, %s121
      %p123 = scmp.eq.s32.totalorder %s34, 0
      %p124 = por %p122, %p123
      %s126 = sadd.s32 %s125, 1
      %p129 = scmp.eq.s32.totalorder %s28, 1
      %p130 = scmp.ne.s32.totalorder %s125, %s127
      %p131 = scmp.eq.s32.totalorder %s28, 0
      %p132 = por %p130, %p131
      %p133 = scmp.ne.s32.totalorder %s125, %s127
      %p134 = scmp.eq.s32.totalorder %s33, 1
      %p135 = por %p133, %p134
      %p136 = scmp.ne.s32.totalorder %s127, %s128
      %p137 = scmp.eq.s32.totalorder %s33, 0
      %p138 = por %p136, %p137
      %p139 = scmp.ne.s32.totalorder %s127, %s128
      %p140 = scmp.eq.s32.totalorder %s34, 1
      %p141 = por %p139, %p140
      %p143 = scmp.ne.s32.totalorder %s128, %s142
      %p144 = scmp.eq.s32.totalorder %s34, 0
      %p145 = por %p143, %p144
      %s147 = sadd.s32 %s146, 1
      %p150 = scmp.eq.s32.totalorder %s28, 1
      %p151 = scmp.ne.s32.totalorder %s146, %s148
      %p152 = scmp.eq.s32.totalorder %s28, 0
      %p153 = por %p151, %p152
      %p154 = scmp.ne.s32.totalorder %s146, %s148
      %p155 = scmp.eq.s32.totalorder %s33, 1
      %p156 = por %p154, %p155
      %p157 = scmp.ne.s32.totalorder %s148, %s149
      %p158 = scmp.eq.s32.totalorder %s33, 0
      %p159 = por %p157, %p158
      %p160 = scmp.ne.s32.totalorder %s148, %s149
      %p161 = scmp.eq.s32.totalorder %s34, 1
      %p162 = por %p160, %p161
      %p164 = scmp.ne.s32.totalorder %s149, %s163
      %p165 = scmp.eq.s32.totalorder %s34, 0
      %p166 = por %p164, %p165
      %s168 = sadd.s32 %s167, 1
      %p171 = scmp.eq.s32.totalorder %s28, 1
      %p172 = scmp.ne.s32.totalorder %s167, %s169
      %p173 = scmp.eq.s32.totalorder %s28, 0
      %p174 = por %p172, %p173
      %p175 = scmp.ne.s32.totalorder %s167, %s169
      %p176 = scmp.eq.s32.totalorder %s33, 1
      %p177 = por %p175, %p176
      %p178 = scmp.ne.s32.totalorder %s169, %s170
      %p179 = scmp.eq.s32.totalorder %s33, 0
      %p180 = por %p178, %p179
      %p181 = scmp.ne.s32.totalorder %s169, %s170
      %p182 = scmp.eq.s32.totalorder %s34, 1
      %p183 = por %p181, %p182
      %p185 = scmp.ne.s32.totalorder %s170, %s184
      %p186 = scmp.eq.s32.totalorder %s34, 0
      %p187 = por %p185, %p186
      %s189 = sadd.s32 %s188, 1
      %p192 = scmp.eq.s32.totalorder %s28, 1
      %p193 = scmp.ne.s32.totalorder %s188, %s190
      %p194 = scmp.eq.s32.totalorder %s28, 0
      %p195 = por %p193, %p194
      %p196 = scmp.ne.s32.totalorder %s188, %s190
      %p197 = scmp.eq.s32.totalorder %s33, 1
      %p198 = por %p196, %p197
      %p199 = scmp.ne.s32.totalorder %s190, %s191
      %p200 = scmp.eq.s32.totalorder %s33, 0
      %p201 = por %p199, %p200
      %p202 = scmp.ne.s32.totalorder %s190, %s191
      %p203 = scmp.eq.s32.totalorder %s34, 1
      %p204 = por %p202, %p203
      %p206 = scmp.ne.s32.totalorder %s191, %s205
      %p207 = scmp.eq.s32.totalorder %s34, 0
      %p208 = por %p206, %p207
      %s210 = sadd.s32 %s209, 1
      %p213 = scmp.eq.s32.totalorder %s28, 1
      %p214 = scmp.ne.s32.totalorder %s209, %s211
      %p215 = scmp.eq.s32.totalorder %s28, 0
      %p216 = por %p214, %p215
      %p217 = scmp.ne.s32.totalorder %s209, %s211
      %p218 = scmp.eq.s32.totalorder %s33, 1
      %p219 = por %p217, %p218
      %p220 = scmp.ne.s32.totalorder %s211, %s212
      %p221 = scmp.eq.s32.totalorder %s33, 0
      %p222 = por %p220, %p221
      %p223 = scmp.ne.s32.totalorder %s211, %s212
      %p224 = scmp.eq.s32.totalorder %s34, 1
      %p225 = por %p223, %p224
      %p227 = scmp.ne.s32.totalorder %s212, %s226
      %p228 = scmp.eq.s32.totalorder %s34, 0
      %p229 = por %p227, %p228
      %s231 = sadd.s32 %s230, 1
      %p234 = scmp.eq.s32.totalorder %s28, 1
      %p235 = scmp.ne.s32.totalorder %s230, %s232
      %p236 = scmp.eq.s32.totalorder %s28, 0
      %p237 = por %p235, %p236
      %p238 = scmp.ne.s32.totalorder %s230, %s232
      %p239 = scmp.eq.s32.totalorder %s33, 1
      %p240 = por %p238, %p239
      %p241 = scmp.ne.s32.totalorder %s232, %s233
      %p242 = scmp.eq.s32.totalorder %s33, 0
      %p243 = por %p241, %p242
      %p244 = scmp.ne.s32.totalorder %s232, %s233
      %p245 = scmp.eq.s32.totalorder %s34, 1
      %p246 = por %p244, %p245
      %p248 = scmp.ne.s32.totalorder %s233, %s247
      %p249 = scmp.eq.s32.totalorder %s34, 0
      %p250 = por %p248, %p249
      %s252 = sadd.s32 %s251, 1
      %p255 = scmp.eq.s32.totalorder %s28, 1
      %p256 = scmp.ne.s32.totalorder %s251, %s253
      %p257 = scmp.eq.s32.totalorder %s28, 0
      %p258 = por %p256, %p257
      %p259 = scmp.ne.s32.totalorder %s251, %s253
      %p260 = scmp.eq.s32.totalorder %s33, 1
      %p261 = por %p259, %p260
      %p262 = scmp.ne.s32.totalorder %s253, %s254
      %p263 = scmp.eq.s32.totalorder %s33, 0
      %p264 = por %p262, %p263
      %p265 = scmp.ne.s32.totalorder %s253, %s254
      %p266 = scmp.eq.s32.totalorder %s34, 1
      %p267 = por %p265, %p266
      %p269 = scmp.ne.s32.totalorder %s254, %s268
      %p270 = scmp.eq.s32.totalorder %s34, 0
      %p271 = por %p269, %p270
      %s273 = sadd.s32 %s272, 1
      %p276 = scmp.eq.s32.totalorder %s28, 1
      %p277 = scmp.ne.s32.totalorder %s272, %s274
      %p278 = scmp.eq.s32.totalorder %s28, 0
      %p279 = por %p277, %p278
      %p280 = scmp.ne.s32.totalorder %s272, %s274
      %p281 = scmp.eq.s32.totalorder %s33, 1
      %p282 = por %p280, %p281
      %p283 = scmp.ne.s32.totalorder %s274, %s275
      %p284 = scmp.eq.s32.totalorder %s33, 0
      %p285 = por %p283, %p284
      %p286 = scmp.ne.s32.totalorder %s274, %s275
      %p287 = scmp.eq.s32.totalorder %s34, 1
      %p288 = por %p286, %p287
      %p290 = scmp.ne.s32.totalorder %s275, %s289
      %p291 = scmp.eq.s32.totalorder %s34, 0
      %p292 = por %p290, %p291
      %s294 = sadd.s32 %s293, 1
      %p297 = scmp.eq.s32.totalorder %s28, 1
      %p298 = scmp.ne.s32.totalorder %s293, %s295
      %p299 = scmp.eq.s32.totalorder %s28, 0
      %p300 = por %p298, %p299
      %p301 = scmp.ne.s32.totalorder %s293, %s295
      %p302 = scmp.eq.s32.totalorder %s33, 1
      %p303 = por %p301, %p302
      %p304 = scmp.ne.s32.totalorder %s295, %s296
      %p305 = scmp.eq.s32.totalorder %s33, 0
      %p306 = por %p304, %p305
      %p307 = scmp.ne.s32.totalorder %s295, %s296
      %p308 = scmp.eq.s32.totalorder %s34, 1
      %p309 = por %p307, %p308
      %p311 = scmp.ne.s32.totalorder %s296, %s310
      %p312 = scmp.eq.s32.totalorder %s34, 0
      %p313 = por %p311, %p312
      %s315 = sadd.s32 %s314, 1
      %p318 = scmp.eq.s32.totalorder %s28, 1
      %p319 = scmp.ne.s32.totalorder %s314, %s316
      %p320 = scmp.eq.s32.totalorder %s28, 0
      %p321 = por %p319, %p320
      %p322 = scmp.ne.s32.totalorder %s314, %s316
      %p323 = scmp.eq.s32.totalorder %s33, 1
      %p324 = por %p322, %p323
      %p325 = scmp.ne.s32.totalorder %s316, %s317
      %p326 = scmp.eq.s32.totalorder %s33, 0
      %p327 = por %p325, %p326
      %p328 = scmp.ne.s32.totalorder %s316, %s317
      %p329 = scmp.eq.s32.totalorder %s34, 1
      %p330 = por %p328, %p329
      %p332 = scmp.ne.s32.totalorder %s317, %s331
      %p333 = scmp.eq.s32.totalorder %s34, 0
      %p334 = por %p332, %p333
      %s336 = sadd.s32 %s335, 1
      %p339 = scmp.eq.s32.totalorder %s28, 1
      %p340 = scmp.ne.s32.totalorder %s335, %s337
      %p341 = scmp.eq.s32.totalorder %s28, 0
      %p342 = por %p340, %p341
      %p343 = scmp.ne.s32.totalorder %s335, %s337
      %p344 = scmp.eq.s32.totalorder %s33, 1
      %p345 = por %p343, %p344
      %p346 = scmp.ne.s32.totalorder %s337, %s338
      %p347 = scmp.eq.s32.totalorder %s33, 0
      %p348 = por %p346, %p347
      %p349 = scmp.ne.s32.totalorder %s337, %s338
      %p350 = scmp.eq.s32.totalorder %s34, 1
      %p351 = por %p349, %p350
      %p353 = scmp.ne.s32.totalorder %s338, %s352
      %p354 = scmp.eq.s32.totalorder %s34, 0
      %p355 = por %p353, %p354
      %s357 = sadd.s32 %s356, 1
      %p360 = scmp.eq.s32.totalorder %s28, 1
      %p361 = scmp.ne.s32.totalorder %s356, %s358
      %p362 = scmp.eq.s32.totalorder %s28, 0
      %p363 = por %p361, %p362
      %p364 = scmp.ne.s32.totalorder %s356, %s358
      %p365 = scmp.eq.s32.totalorder %s33, 1
      %p366 = por %p364, %p365
      %p367 = scmp.ne.s32.totalorder %s358, %s359
      %p368 = scmp.eq.s32.totalorder %s33, 0
      %p369 = por %p367, %p368
      %p370 = scmp.ne.s32.totalorder %s358, %s359
      %p371 = scmp.eq.s32.totalorder %s34, 1
      %p372 = por %p370, %p371
      %p374 = scmp.ne.s32.totalorder %s359, %s373
      %p375 = scmp.eq.s32.totalorder %s34, 0
      %p376 = por %p374, %p375
      %s378 = sadd.s32 %s377, 1
      %p381 = scmp.eq.s32.totalorder %s28, 1
      %p382 = scmp.ne.s32.totalorder %s377, %s379
      %p383 = scmp.eq.s32.totalorder %s28, 0
      %p384 = por %p382, %p383
      %p385 = scmp.ne.s32.totalorder %s377, %s379
      %p386 = scmp.eq.s32.totalorder %s33, 1
      %p387 = por %p385, %p386
      %p388 = scmp.ne.s32.totalorder %s379, %s380
      %p389 = scmp.eq.s32.totalorder %s33, 0
      %p390 = por %p388, %p389
      %p391 = scmp.ne.s32.totalorder %s379, %s380
      %p392 = scmp.eq.s32.totalorder %s34, 1
      %p393 = por %p391, %p392
      %p395 = scmp.ne.s32.totalorder %s380, %s394
      %p396 = scmp.eq.s32.totalorder %s34, 0
      %p397 = por %p395, %p396
      %s399 = sadd.s32 %s398, 1
      %p402 = scmp.eq.s32.totalorder %s28, 1
      %p403 = scmp.ne.s32.totalorder %s398, %s400
      %p404 = scmp.eq.s32.totalorder %s28, 0
      %p405 = por %p403, %p404
      %p406 = scmp.ne.s32.totalorder %s398, %s400
      %p407 = scmp.eq.s32.totalorder %s33, 1
      %p408 = por %p406, %p407
      %p409 = scmp.ne.s32.totalorder %s400, %s401
      %p410 = scmp.eq.s32.totalorder %s33, 0
      %p411 = por %p409, %p410
      %p412 = scmp.ne.s32.totalorder %s400, %s401
      %p413 = scmp.eq.s32.totalorder %s34, 1
      %p414 = por %p412, %p413
      %p416 = scmp.ne.s32.totalorder %s401, %s415
      %p417 = scmp.eq.s32.totalorder %s34, 0
      %p418 = por %p416, %p417
      %s420 = sadd.s32 %s419, 1
      %p423 = scmp.eq.s32.totalorder %s28, 1
      %p424 = scmp.ne.s32.totalorder %s419, %s421
      %p425 = scmp.eq.s32.totalorder %s28, 0
      %p426 = por %p424, %p425
      %p427 = scmp.ne.s32.totalorder %s419, %s421
      %p428 = scmp.eq.s32.totalorder %s33, 1
      %p429 = por %p427, %p428
      %p430 = scmp.ne.s32.totalorder %s421, %s422
      %p431 = scmp.eq.s32.totalorder %s33, 0
      %p432 = por %p430, %p431
      %p433 = scmp.ne.s32.totalorder %s421, %s422
      %p434 = scmp.eq.s32.totalorder %s34, 1
      %p435 = por %p433, %p434
      %p437 = scmp.ne.s32.totalorder %s422, %s436
      %p438 = scmp.eq.s32.totalorder %s34, 0
      %p439 = por %p437, %p438
      %s440 = ssub.s32 %s28, %s35
      %p441 = scmp.eq.s32.totalorder %s440, 0
      %s443 = sadd.s32 %s442, 1
      %s444 = scalar_select %p441, %s442, %s443
      %p447 = pneg %p441
      %p448 = scmp.eq.s32.totalorder %s28, 1
      %p449 = por %p447, %p448
      %p450 = scmp.ne.s32.totalorder %s442, %s445
      %p451 = scmp.eq.s32.totalorder %s28, 0
      %p452 = por %p450, %p451
      %p453 = scmp.ne.s32.totalorder %s442, %s445
      %p454 = scmp.eq.s32.totalorder %s33, 1
      %p455 = por %p453, %p454
      %p456 = scmp.ne.s32.totalorder %s445, %s446
      %p457 = scmp.eq.s32.totalorder %s33, 0
      %p458 = por %p456, %p457
      %p459 = scmp.ne.s32.totalorder %s445, %s446
      %p460 = scmp.eq.s32.totalorder %s34, 1
      %p461 = por %p459, %p460
      %p463 = scmp.ne.s32.totalorder %s446, %s462
      %p464 = scmp.eq.s32.totalorder %s34, 0
      %p465 = por %p463, %p464
      %p466 = scmp.le.s32.totalorder 1, %s28
      %p467 = scmp.lt.s32.totalorder %s28, 3
      %p468 = pnand %p466, %p467
      %p469 = pneg %p468
      // Predicated region
      $region9: #{conv_net_forward.1} parent=5 // pred_check
        _
      $region10: #{conv_net_forward.1} parent=5 // pred_check_branch
        %471 = sbr.rel (%p468) target = $region12
      $region11: #{conv_net_forward.1} parent=5 // pred_region
        %s472 = ssub.s32 %s28, 1
        // Predicated region
        $region13: #{conv_net_forward.1} parent=11 // pred_check
          %p473 = pneg %p75
        $region14: #{conv_net_forward.1} parent=11 // pred_check_branch
          %475 = sbr.rel (%p473) target = $region16
        $region15: #{conv_net_forward.1} parent=11 // pred_region
          _
        $region16: #{conv_net_forward.1} parent=11 // pred_fallthru
          _
        // Predicated region
        $region17: #{conv_net_forward.1} parent=11 // pred_check
          %p476 = pneg %p96
        $region18: #{conv_net_forward.1} parent=11 // pred_check_branch
          %478 = sbr.rel (%p476) target = $region20
        $region19: #{conv_net_forward.1} parent=11 // pred_region
          _
        $region20: #{conv_net_forward.1} parent=11 // pred_fallthru
          _
        // Predicated region
        $region21: #{conv_net_forward.1} parent=11 // pred_check
          %p479 = pneg %p117
        $region22: #{conv_net_forward.1} parent=11 // pred_check_branch
          %481 = sbr.rel (%p479) target = $region24
        $region23: #{conv_net_forward.1} parent=11 // pred_region
          _
        $region24: #{conv_net_forward.1} parent=11 // pred_fallthru
          _
        // Predicated region
        $region25: #{conv_net_forward.1} parent=11 // pred_check
          %p482 = pneg %p138
        $region26: #{conv_net_forward.1} parent=11 // pred_check_branch
          %484 = sbr.rel (%p482) target = $region28
        $region27: #{conv_net_forward.1} parent=11 // pred_region
          _
        $region28: #{conv_net_forward.1} parent=11 // pred_fallthru
          _
        // Predicated region
        $region29: #{conv_net_forward.1} parent=11 // pred_check
          %p485 = pneg %p159
        $region30: #{conv_net_forward.1} parent=11 // pred_check_branch
          %487 = sbr.rel (%p485) target = $region32
        $region31: #{conv_net_forward.1} parent=11 // pred_region
          _
        $region32: #{conv_net_forward.1} parent=11 // pred_fallthru
          _
        // Predicated region
        $region33: #{conv_net_forward.1} parent=11 // pred_check
          %p488 = pneg %p180
        $region34: #{conv_net_forward.1} parent=11 // pred_check_branch
          %490 = sbr.rel (%p488) target = $region36
        $region35: #{conv_net_forward.1} parent=11 // pred_region
          _
        $region36: #{conv_net_forward.1} parent=11 // pred_fallthru
          _
        // Predicated region
        $region37: #{conv_net_forward.1} parent=11 // pred_check
          %p491 = pneg %p201
        $region38: #{conv_net_forward.1} parent=11 // pred_check_branch
          %493 = sbr.rel (%p491) target = $region40
        $region39: #{conv_net_forward.1} parent=11 // pred_region
          _
        $region40: #{conv_net_forward.1} parent=11 // pred_fallthru
          _
        // Predicated region
        $region41: #{conv_net_forward.1} parent=11 // pred_check
          %p494 = pneg %p222
        $region42: #{conv_net_forward.1} parent=11 // pred_check_branch
          %496 = sbr.rel (%p494) target = $region44
        $region43: #{conv_net_forward.1} parent=11 // pred_region
          _
        $region44: #{conv_net_forward.1} parent=11 // pred_fallthru
          _
        // Predicated region
        $region45: #{conv_net_forward.1} parent=11 // pred_check
          %p497 = pneg %p243
        $region46: #{conv_net_forward.1} parent=11 // pred_check_branch
          %499 = sbr.rel (%p497) target = $region48
        $region47: #{conv_net_forward.1} parent=11 // pred_region
          _
        $region48: #{conv_net_forward.1} parent=11 // pred_fallthru
          _
        // Predicated region
        $region49: #{conv_net_forward.1} parent=11 // pred_check
          %p500 = pneg %p264
        $region50: #{conv_net_forward.1} parent=11 // pred_check_branch
          %502 = sbr.rel (%p500) target = $region52
        $region51: #{conv_net_forward.1} parent=11 // pred_region
          _
        $region52: #{conv_net_forward.1} parent=11 // pred_fallthru
          _
        // Predicated region
        $region53: #{conv_net_forward.1} parent=11 // pred_check
          %p503 = pneg %p285
        $region54: #{conv_net_forward.1} parent=11 // pred_check_branch
          %505 = sbr.rel (%p503) target = $region56
        $region55: #{conv_net_forward.1} parent=11 // pred_region
          _
        $region56: #{conv_net_forward.1} parent=11 // pred_fallthru
          _
        // Predicated region
        $region57: #{conv_net_forward.1} parent=11 // pred_check
          %p506 = pneg %p306
        $region58: #{conv_net_forward.1} parent=11 // pred_check_branch
          %508 = sbr.rel (%p506) target = $region60
        $region59: #{conv_net_forward.1} parent=11 // pred_region
          _
        $region60: #{conv_net_forward.1} parent=11 // pred_fallthru
          _
        // Predicated region
        $region61: #{conv_net_forward.1} parent=11 // pred_check
          %p509 = pneg %p327
        $region62: #{conv_net_forward.1} parent=11 // pred_check_branch
          %511 = sbr.rel (%p509) target = $region64
        $region63: #{conv_net_forward.1} parent=11 // pred_region
          _
        $region64: #{conv_net_forward.1} parent=11 // pred_fallthru
          _
        // Predicated region
        $region65: #{conv_net_forward.1} parent=11 // pred_check
          %p512 = pneg %p348
        $region66: #{conv_net_forward.1} parent=11 // pred_check_branch
          %514 = sbr.rel (%p512) target = $region68
        $region67: #{conv_net_forward.1} parent=11 // pred_region
          _
        $region68: #{conv_net_forward.1} parent=11 // pred_fallthru
          _
        // Predicated region
        $region69: #{conv_net_forward.1} parent=11 // pred_check
          %p515 = pneg %p369
        $region70: #{conv_net_forward.1} parent=11 // pred_check_branch
          %517 = sbr.rel (%p515) target = $region72
        $region71: #{conv_net_forward.1} parent=11 // pred_region
          _
        $region72: #{conv_net_forward.1} parent=11 // pred_fallthru
          _
        // Predicated region
        $region73: #{conv_net_forward.1} parent=11 // pred_check
          %p518 = pneg %p390
        $region74: #{conv_net_forward.1} parent=11 // pred_check_branch
          %520 = sbr.rel (%p518) target = $region76
        $region75: #{conv_net_forward.1} parent=11 // pred_region
          _
        $region76: #{conv_net_forward.1} parent=11 // pred_fallthru
          _
        // Predicated region
        $region77: #{conv_net_forward.1} parent=11 // pred_check
          %p521 = pneg %p411
        $region78: #{conv_net_forward.1} parent=11 // pred_check_branch
          %523 = sbr.rel (%p521) target = $region80
        $region79: #{conv_net_forward.1} parent=11 // pred_region
          _
        $region80: #{conv_net_forward.1} parent=11 // pred_fallthru
          _
        // Predicated region
        $region81: #{conv_net_forward.1} parent=11 // pred_check
          %p524 = pneg %p432
        $region82: #{conv_net_forward.1} parent=11 // pred_check_branch
          %526 = sbr.rel (%p524) target = $region84
        $region83: #{conv_net_forward.1} parent=11 // pred_region
          _
        $region84: #{conv_net_forward.1} parent=11 // pred_fallthru
          _
      $region12: #{conv_net_forward.1} parent=5 // pred_fallthru
        _
      %p527 = scmp.lt.s32.totalorder %s28, 2
      // Predicated region
      $region85: #{conv_net_forward.1} parent=5 // pred_check
        %p528 = pneg %p527
      $region86: #{conv_net_forward.1} parent=5 // pred_check_branch
        %530 = sbr.rel (%p528) target = $region88
      $region87: #{conv_net_forward.1} parent=5 // pred_region
        // Predicated region
        $region89: #{conv_net_forward.1} parent=87 // pred_check
          %p531 = pneg %p48
        $region90: #{conv_net_forward.1} parent=87 // pred_check_branch
          %533 = sbr.rel (%p531) target = $region92
        $region91: #{conv_net_forward.1} parent=87 // pred_region
          %p534 = scmp.lt.s32.totalorder %s28, 1
          %s535 = scalar_select %p534, %s28, 1
          %s536 = smul.addr %s535, 12
          %s537 = smul.addr %s536, 8
          %s538 = scalar_lea.vmem %s0, %s537
        $region92: #{conv_net_forward.1} parent=87 // pred_fallthru
          _
      $region88: #{conv_net_forward.1} parent=5 // pred_fallthru
        _
      %p539 = scmp.le.s32.totalorder 1, %s28
      %p540 = scmp.lt.s32.totalorder %s28, 3
      %p541 = pnand %p539, %p540
      %p542 = pneg %p541
      // Predicated region
      $region93: #{conv_net_forward.1} parent=5 // pred_check
        _
      $region94: #{conv_net_forward.1} parent=5 // pred_check_branch
        %544 = sbr.rel (%p541) target = $region96
      $region95: #{conv_net_forward.1} parent=5 // pred_region
        %s545 = ssub.s32 %s28, 1
        %p546 = scmp.lt.s32.totalorder %s33, 1
        %s547 = scalar_select %p546, %s33, 1
        %s548 = smul.addr %s547, 12
        %s549 = smul.addr %s548, 8
        %s550 = scalar_lea.vmem %s0, %s549
        %p551 = pneg %p54
        %p552 = pneg %p51
        %p553 = pneg %p75
        %p554 = pneg %p72
        %p555 = pneg %p96
        %p556 = pneg %p93
        %p557 = pneg %p117
        %p558 = pneg %p114
        %p559 = pneg %p138
        %p560 = pneg %p135
        %p561 = pneg %p159
        %p562 = pneg %p156
        %p563 = pneg %p180
        %p564 = pneg %p177
        %p565 = pneg %p201
        %p566 = pneg %p198
        %p567 = pneg %p222
        %p568 = pneg %p219
        %p569 = pneg %p243
        %p570 = pneg %p240
        %p571 = pneg %p264
        %p572 = pneg %p261
        %p573 = pneg %p285
        %p574 = pneg %p282
        %p575 = pneg %p306
        %p576 = pneg %p303
        %p577 = pneg %p327
        %p578 = pneg %p324
        %p579 = pneg %p348
        %p580 = pneg %p345
        %p581 = pneg %p369
        %p582 = pneg %p366
        %p583 = pneg %p390
        %p584 = pneg %p387
        %p585 = pneg %p411
        %p586 = pneg %p408
        %p587 = pneg %p432
        %p588 = pneg %p429
        %p589 = pneg %p458
        %p590 = pneg %p455
        %s591 = sand.u32 %s445, 1
        %s592 = scalar_lea.sflag [#allocation3], %s591
        %s593 = sand.u32 %s445, 1
        %s594 = scalar_lea.vmem [#allocation2], %s593
        %p595 = scmp.lt.s32.totalorder %s33, 1
        %s596 = scalar_select %p595, %s33, 1
        %s597 = smul.addr %s596, 12
        %s598 = smul.addr %s597, 8
        %s599 = scalar_lea.vmem %s0, %s598
        %v600 = vld [vmem:[%s599] sm:$0xff]
        %v601 = vld [vmem:[%s599 + $0x8] sm:$0xff]
        %v602 = vld [vmem:[%s599 + $0x10] sm:$0xff]
        %v603 = vld [vmem:[%s599 + $0x18] sm:$0xf]
        %v604 = vld [vmem:[%s1] sm:$0xff]
        %v605 = vld [vmem:[%s1 + $0x8] sm:$0xff]
        %v606 = vld [vmem:[%s1 + $0x10] sm:$0xff]
        %v607 = vld [vmem:[%s1 + $0x18] sm:$0xff]
        %v608 = vld [vmem:[%s1 + $0x20] sm:$0xff]
        %v609 = vld [vmem:[%s1 + $0x28] sm:$0xff]
        %v610 = vld [vmem:[%s1 + $0x30] sm:$0xff]
        %v611 = vld [vmem:[%s1 + $0x38] sm:$0xff]
        %s612 = scalar_lea.vmem %s599, 32
        %v613 = vld [vmem:[%s612] sm:$0xff]
        %v614 = vld [vmem:[%s612 + $0x8] sm:$0xff]
        %v615 = vld [vmem:[%s612 + $0x10] sm:$0xff]
        %v616 = vld [vmem:[%s612 + $0x18] sm:$0xf]
        %v617 = vld [vmem:[%s1 + $0x40] sm:$0xff]
        %v618 = vld [vmem:[%s1 + $0x48] sm:$0xff]
        %v619 = vld [vmem:[%s1 + $0x50] sm:$0xff]
        %v620 = vld [vmem:[%s1 + $0x58] sm:$0xff]
        %v621 = vld [vmem:[%s1 + $0x60] sm:$0xff]
        %v622 = vld [vmem:[%s1 + $0x68] sm:$0xff]
        %v623 = vld [vmem:[%s1 + $0x70] sm:$0xff]
        %v624 = vld [vmem:[%s1 + $0x78] sm:$0xff]
        %vm625 = vcmask 261120
        %v627 = vsel %vm625, %v613, 0
        %v630 = vsel %vm625, %v614, 0
        %v633 = vsel %vm625, %v615, 0
        %v636 = vsel %vm625, %v616, 0
        %638 = vmatprep.subr.mxu0 %v618
        %639 = vmatpush1.msra.mxu0 %v617
        %640 = vmatprep.subr.mxu0 %v620
        %641 = vmatpush1.msra.mxu0 %v619
        %642 = vmatprep.subr.mxu0 %v622
        %643 = vmatpush1.msra.mxu0 %v621
        %644 = vmatprep.subr.mxu0 %v624
        %645 = vmatpush1.msra.mxu0 %v623
        %646 = vmatprep.subr.mxu0 0.0
        %647 = vmatpush1.msra.mxu0 0.0
        %648 = vmatprep.subr.mxu0 0.0
        %649 = vmatpush1.msra.mxu0 0.0
        %650 = vmatprep.subr.mxu0 0.0
        %651 = vmatpush1.msra.mxu0 0.0
        %652 = vmatprep.subr.mxu0 0.0
        %653 = vmatpush1.msra.mxu0 0.0
        %654 = vmatprep.subr.mxu0 0.0
        %655 = vmatpush1.msra.mxu0 0.0
        %656 = vmatprep.subr.mxu0 0.0
        %657 = vmatpush1.msra.mxu0 0.0
        %658 = vmatprep.subr.mxu0 0.0
        %659 = vmatpush1.msra.mxu0 0.0
        %660 = vmatprep.subr.mxu0 0.0
        %661 = vmatpush1.msra.mxu0 0.0
        %662 = vmatprep.subr.mxu0 0.0
        %663 = vmatpush1.msra.mxu0 0.0
        %664 = vmatprep.subr.mxu0 0.0
        %665 = vmatpush1.msra.mxu0 0.0
        %666 = vmatprep.subr.mxu0 0.0
        %667 = vmatpush1.msra.mxu0 0.0
        %668 = vmatprep.subr.mxu0 0.0
        %669 = vmatpush1.msra.mxu0 0.0
        %670 = vmatprep.subr.mxu0 0.0
        %671 = vmatpush1.msra.mxu0 0.0
        %672 = vmatprep.subr.mxu0 0.0
        %673 = vmatpush1.msra.mxu0 0.0
        %674 = vmatprep.subr.mxu0 0.0
        %675 = vmatpush1.msra.mxu0 0.0
        %676 = vmatprep.subr.mxu0 0.0
        %677 = vmatpush1.msra.mxu0 0.0
        %678 = vmatprep.subr.mxu0 0.0
        %679 = vmatpush1.msra.mxu0 0.0
        %680 = vmatprep.subr.mxu0 0.0
        %681 = vmatpush1.msra.mxu0 0.0
        %682 = vmatprep.subr.mxu0 0.0
        %683 = vmatpush1.msra.mxu0 0.0
        %684 = vmatprep.subr.mxu0 0.0
        %685 = vmatpush1.msra.mxu0 0.0
        %686 = vmatprep.subr.mxu0 0.0
        %687 = vmatpush1.msra.mxu0 0.0
        %688 = vmatprep.subr.mxu0 0.0
        %689 = vmatpush1.msra.mxu0 0.0
        %690 = vmatprep.subr.mxu0 0.0
        %691 = vmatpush1.msra.mxu0 0.0
        %692 = vmatprep.subr.mxu0 0.0
        %693 = vmatpush1.msra.mxu0 0.0
        %694 = vmatprep.subr.mxu0 0.0
        %695 = vmatpush1.msra.mxu0 0.0
        %696 = vmatprep.subr.mxu0 0.0
        %697 = vmatpush1.msra.mxu0 0.0
        %698 = vmatprep.subr.mxu0 0.0
        %699 = vmatpush1.msra.mxu0 0.0
        %700 = vmatprep.subr.mxu0 0.0
        %701 = vmatpush1.msra.mxu0 0.0
        %702 = vmatprep.mubr.f32.mxu0 0.0
        %703 = vmatmul.mubr.f32.gmra.mrb[0].mxu0 %v627
        %v704 = vpop.f32.mrb[0].mxu0
        %v705 = vadd.f32 0.0, %v704
        %v706 = vpop.f32.mrb[0].mxu0
        %v707 = vadd.f32 0.0, %v706
        %708 = vmatprep.mubr.f32.mxu0 0.0
        %709 = vmatmul.mubr.f32.gmra.mrb[0].mxu0 %v630
        %v710 = vpop.f32.mrb[0].mxu0
        %v711 = vadd.f32 0.0, %v710
        %v712 = vpop.f32.mrb[0].mxu0
        %v713 = vadd.f32 0.0, %v712
        %714 = vmatprep.mubr.f32.mxu0 0.0
        %715 = vmatmul.mubr.f32.gmra.mrb[0].mxu0 %v633
        %v716 = vpop.f32.mrb[0].mxu0
        %v717 = vadd.f32 0.0, %v716
        %v718 = vpop.f32.mrb[0].mxu0
        %v719 = vadd.f32 0.0, %v718
        %720 = vmatprep.mubr.f32.mxu0 0.0
        %721 = vmatmul.mubr.f32.gmra.mrb[0].mxu0 %v636
        %v722 = vpop.f32.mrb[0].mxu0
        %v723 = vadd.f32 0.0, %v722
        %v724 = vpop.f32.mrb[0].mxu0
        %v725 = vadd.f32 0.0, %v724
        %726 = vdwg.mxu0
        %v728 = vsel %vm625, %v600, 0
        %v731 = vsel %vm625, %v601, 0
        %v734 = vsel %vm625, %v602, 0
        %v737 = vsel %vm625, %v603, 0
        %739 = vmatprep.subr.mxu0 %v605
        %740 = vmatpush1.msra.mxu0 %v604
        %741 = vmatprep.subr.mxu0 %v607
        %742 = vmatpush1.msra.mxu0 %v606
        %743 = vmatprep.subr.mxu0 %v609
        %744 = vmatpush1.msra.mxu0 %v608
        %745 = vmatprep.subr.mxu0 %v611
        %746 = vmatpush1.msra.mxu0 %v610
        %747 = vmatprep.subr.mxu0 0.0
        %748 = vmatpush1.msra.mxu0 0.0
        %749 = vmatprep.subr.mxu0 0.0
        %750 = vmatpush1.msra.mxu0 0.0
        %751 = vmatprep.subr.mxu0 0.0
        %752 = vmatpush1.msra.mxu0 0.0
        %753 = vmatprep.subr.mxu0 0.0
        %754 = vmatpush1.msra.mxu0 0.0
        %755 = vmatprep.subr.mxu0 0.0
        %756 = vmatpush1.msra.mxu0 0.0
        %757 = vmatprep.subr.mxu0 0.0
        %758 = vmatpush1.msra.mxu0 0.0
        %759 = vmatprep.subr.mxu0 0.0
        %760 = vmatpush1.msra.mxu0 0.0
        %761 = vmatprep.subr.mxu0 0.0
        %762 = vmatpush1.msra.mxu0 0.0
        %763 = vmatprep.subr.mxu0 0.0
        %764 = vmatpush1.msra.mxu0 0.0
        %765 = vmatprep.subr.mxu0 0.0
        %766 = vmatpush1.msra.mxu0 0.0
        %767 = vmatprep.subr.mxu0 0.0
        %768 = vmatpush1.msra.mxu0 0.0
        %769 = vmatprep.subr.mxu0 0.0
        %770 = vmatpush1.msra.mxu0 0.0
        %771 = vmatprep.subr.mxu0 0.0
        %772 = vmatpush1.msra.mxu0 0.0
        %773 = vmatprep.subr.mxu0 0.0
        %774 = vmatpush1.msra.mxu0 0.0
        %775 = vmatprep.subr.mxu0 0.0
        %776 = vmatpush1.msra.mxu0 0.0
        %777 = vmatprep.subr.mxu0 0.0
        %778 = vmatpush1.msra.mxu0 0.0
        %779 = vmatprep.subr.mxu0 0.0
        %780 = vmatpush1.msra.mxu0 0.0
        %781 = vmatprep.subr.mxu0 0.0
        %782 = vmatpush1.msra.mxu0 0.0
        %783 = vmatprep.subr.mxu0 0.0
        %784 = vmatpush1.msra.mxu0 0.0
        %785 = vmatprep.subr.mxu0 0.0
        %786 = vmatpush1.msra.mxu0 0.0
        %787 = vmatprep.subr.mxu0 0.0
        %788 = vmatpush1.msra.mxu0 0.0
        %789 = vmatprep.subr.mxu0 0.0
        %790 = vmatpush1.msra.mxu0 0.0
        %791 = vmatprep.subr.mxu0 0.0
        %792 = vmatpush1.msra.mxu0 0.0
        %793 = vmatprep.subr.mxu0 0.0
        %794 = vmatpush1.msra.mxu0 0.0
        %795 = vmatprep.subr.mxu0 0.0
        %796 = vmatpush1.msra.mxu0 0.0
        %797 = vmatprep.subr.mxu0 0.0
        %798 = vmatpush1.msra.mxu0 0.0
        %799 = vmatprep.subr.mxu0 0.0
        %800 = vmatpush1.msra.mxu0 0.0
        %801 = vmatprep.subr.mxu0 0.0
        %802 = vmatpush1.msra.mxu0 0.0
        %803 = vmatprep.mubr.f32.mxu0 0.0
        %804 = vmatmul.mubr.f32.gmra.mrb[0].mxu0 %v728
        %v805 = vpop.f32.mrb[0].mxu0
        %v806 = vadd.f32 %v705, %v805
        %v807 = vpop.f32.mrb[0].mxu0
        %v808 = vadd.f32 %v707, %v807
        %809 = vmatprep.mubr.f32.mxu0 0.0
        %810 = vmatmul.mubr.f32.gmra.mrb[0].mxu0 %v731
        %v811 = vpop.f32.mrb[0].mxu0
        %v812 = vadd.f32 %v711, %v811
        %v813 = vpop.f32.mrb[0].mxu0
        %v814 = vadd.f32 %v713, %v813
        %815 = vmatprep.mubr.f32.mxu0 0.0
        %816 = vmatmul.mubr.f32.gmra.mrb[0].mxu0 %v734
        %v817 = vpop.f32.mrb[0].mxu0
        %v818 = vadd.f32 %v717, %v817
        %v819 = vpop.f32.mrb[0].mxu0
        %v820 = vadd.f32 %v719, %v819
        %821 = vmatprep.mubr.f32.mxu0 0.0
        %822 = vmatmul.mubr.f32.gmra.mrb[0].mxu0 %v737
        %v823 = vpop.f32.mrb[0].mxu0
        %v824 = vadd.f32 %v723, %v823
        %v825 = vpop.f32.mrb[0].mxu0
        %v826 = vadd.f32 %v725, %v825
        %827 = vdwg.mxu0
        %s828 = scalar_lea.vmem %s599, 64
        %v829 = vld [vmem:[%s828] sm:$0xff]
        %v830 = vld [vmem:[%s828 + $0x8] sm:$0xff]
        %v831 = vld [vmem:[%s828 + $0x10] sm:$0xff]
        %v832 = vld [vmem:[%s828 + $0x18] sm:$0xf]
        %v833 = vld [vmem:[%s1 + $0x80] sm:$0xff]
        %v834 = vld [vmem:[%s1 + $0x88] sm:$0xff]
        %v835 = vld [vmem:[%s1 + $0x90] sm:$0xff]
        %v836 = vld [vmem:[%s1 + $0x98] sm:$0xff]
        %v837 = vld [vmem:[%s1 + $0xa0] sm:$0xff]
        %v838 = vld [vmem:[%s1 + $0xa8] sm:$0xff]
        %v839 = vld [vmem:[%s1 + $0xb0] sm:$0xff]
        %v840 = vld [vmem:[%s1 + $0xb8] sm:$0xff]
        %v842 = vsel %vm625, %v829, 0
        %v845 = vsel %vm625, %v830, 0
        %v848 = vsel %vm625, %v831, 0
        %v851 = vsel %vm625, %v832, 0
        %853 = vmatprep.subr.mxu0 %v834
        %854 = vmatpush1.msra.mxu0 %v833
        %855 = vmatprep.subr.mxu0 %v836
        %856 = vmatpush1.msra.mxu0 %v835
        %857 = vmatprep.subr.mxu0 %v838
        %858 = vmatpush1.msra.mxu0 %v837
        %859 = vmatprep.subr.mxu0 %v840
        %860 = vmatpush1.msra.mxu0 %v839
        %861 = vmatprep.subr.mxu0 0.0
        %862 = vmatpush1.msra.mxu0 0.0
        %863 = vmatprep.subr.mxu0 0.0
        %864 = vmatpush1.msra.mxu0 0.0
        %865 = vmatprep.subr.mxu0 0.0
        %866 = vmatpush1.msra.mxu0 0.0
        %867 = vmatprep.subr.mxu0 0.0
        %868 = vmatpush1.msra.mxu0 0.0
        %869 = vmatprep.subr.mxu0 0.0
        %870 = vmatpush1.msra.mxu0 0.0
        %871 = vmatprep.subr.mxu0 0.0
        %872 = vmatpush1.msra.mxu0 0.0
        %873 = vmatprep.subr.mxu0 0.0
        %874 = vmatpush1.msra.mxu0 0.0
        %875 = vmatprep.subr.mxu0 0.0
        %876 = vmatpush1.msra.mxu0 0.0
        %877 = vmatprep.subr.mxu0 0.0
        %878 = vmatpush1.msra.mxu0 0.0
        %879 = vmatprep.subr.mxu0 0.0
        %880 = vmatpush1.msra.mxu0 0.0
        %881 = vmatprep.subr.mxu0 0.0
        %882 = vmatpush1.msra.mxu0 0.0
        %883 = vmatprep.subr.mxu0 0.0
        %884 = vmatpush1.msra.mxu0 0.0
        %885 = vmatprep.subr.mxu0 0.0
        %886 = vmatpush1.msra.mxu0 0.0
        %887 = vmatprep.subr.mxu0 0.0
        %888 = vmatpush1.msra.mxu0 0.0
        %889 = vmatprep.subr.mxu0 0.0
        %890 = vmatpush1.msra.mxu0 0.0
        %891 = vmatprep.subr.mxu0 0.0
        %892 = vmatpush1.msra.mxu0 0.0
        %893 = vmatprep.subr.mxu0 0.0
        %894 = vmatpush1.msra.mxu0 0.0
        %895 = vmatprep.subr.mxu0 0.0
        %896 = vmatpush1.msra.mxu0 0.0
        %897 = vmatprep.subr.mxu0 0.0
        %898 = vmatpush1.msra.mxu0 0.0
        %899 = vmatprep.subr.mxu0 0.0
        %900 = vmatpush1.msra.mxu0 0.0
        %901 = vmatprep.subr.mxu0 0.0
        %902 = vmatpush1.msra.mxu0 0.0
        %903 = vmatprep.subr.mxu0 0.0
        %904 = vmatpush1.msra.mxu0 0.0
        %905 = vmatprep.subr.mxu0 0.0
        %906 = vmatpush1.msra.mxu0 0.0
        %907 = vmatprep.subr.mxu0 0.0
        %908 = vmatpush1.msra.mxu0 0.0
        %909 = vmatprep.subr.mxu0 0.0
        %910 = vmatpush1.msra.mxu0 0.0
        %911 = vmatprep.subr.mxu0 0.0
        %912 = vmatpush1.msra.mxu0 0.0
        %913 = vmatprep.subr.mxu0 0.0
        %914 = vmatpush1.msra.mxu0 0.0
        %915 = vmatprep.subr.mxu0 0.0
        %916 = vmatpush1.msra.mxu0 0.0
        %917 = vmatprep.mubr.f32.mxu0 0.0
        %918 = vmatmul.mubr.f32.gmra.mrb[0].mxu0 %v842
        %v919 = vpop.f32.mrb[0].mxu0
        %v920 = vadd.f32 0.0, %v919
        %v921 = vpop.f32.mrb[0].mxu0
        %v922 = vadd.f32 0.0, %v921
        %923 = vmatprep.mubr.f32.mxu0 0.0
        %924 = vmatmul.mubr.f32.gmra.mrb[0].mxu0 %v845
        %v925 = vpop.f32.mrb[0].mxu0
        %v926 = vadd.f32 0.0, %v925
        %v927 = vpop.f32.mrb[0].mxu0
        %v928 = vadd.f32 0.0, %v927
        %929 = vmatprep.mubr.f32.mxu0 0.0
        %930 = vmatmul.mubr.f32.gmra.mrb[0].mxu0 %v848
        %v931 = vpop.f32.mrb[0].mxu0
        %v932 = vadd.f32 0.0, %v931
        %v933 = vpop.f32.mrb[0].mxu0
        %v934 = vadd.f32 0.0, %v933
        %935 = vmatprep.mubr.f32.mxu0 0.0
        %936 = vmatmul.mubr.f32.gmra.mrb[0].mxu0 %v851
        %v937 = vpop.f32.mrb[0].mxu0
        %v938 = vadd.f32 0.0, %v937
        %v939 = vpop.f32.mrb[0].mxu0
        %v940 = vadd.f32 0.0, %v939
        %941 = vdwg.mxu0
        %v942 = vadd.f32 %v806, %v920
        %v943 = vadd.f32 %v808, %v922
        %v944 = vadd.f32 %v812, %v926
        %v945 = vadd.f32 %v814, %v928
        %v946 = vadd.f32 %v818, %v932
        %v947 = vadd.f32 %v820, %v934
        %v948 = vadd.f32 %v824, %v938
        %v949 = vadd.f32 %v826, %v940
        %v950 = vld [vmem:[%s599 + $0x1] sm:$0xff]
        %v951 = vld [vmem:[%s599 + $0x9] sm:$0xff]
        %v952 = vld [vmem:[%s599 + $0x11] sm:$0xff]
        %v953 = vld [vmem:[%s599 + $0x19] sm:$0xf]
        %v954 = vld [vmem:[%s1 + $0xc0] sm:$0xff]
        %v955 = vld [vmem:[%s1 + $0xc8] sm:$0xff]
        %v956 = vld [vmem:[%s1 + $0xd0] sm:$0xff]
        %v957 = vld [vmem:[%s1 + $0xd8] sm:$0xff]
        %v958 = vld [vmem:[%s1 + $0xe0] sm:$0xff]
        %v959 = vld [vmem:[%s1 + $0xe8] sm:$0xff]
        %v960 = vld [vmem:[%s1 + $0xf0] sm:$0xff]
        %v961 = vld [vmem:[%s1 + $0xf8] sm:$0xff]
        %v963 = vsel %vm625, %v950, 0
        %v966 = vsel %vm625, %v951, 0
        %v969 = vsel %vm625, %v952, 0
        %v972 = vsel %vm625, %v953, 0
        %974 = vmatprep.subr.mxu0 %v955
        %975 = vmatpush1.msra.mxu0 %v954
        %976 = vmatprep.subr.mxu0 %v957
        %977 = vmatpush1.msra.mxu0 %v956
        %978 = vmatprep.subr.mxu0 %v959
        %979 = vmatpush1.msra.mxu0 %v958
        %980 = vmatprep.subr.mxu0 %v961
        %981 = vmatpush1.msra.mxu0 %v960
        %982 = vmatprep.subr.mxu0 0.0
        %983 = vmatpush1.msra.mxu0 0.0
        %984 = vmatprep.subr.mxu0 0.0
        %985 = vmatpush1.msra.mxu0 0.0
        %986 = vmatprep.subr.mxu0 0.0
        %987 = vmatpush1.msra.mxu0 0.0
        %988 = vmatprep.subr.mxu0 0.0
        %989 = vmatpush1.msra.mxu0 0.0
        %990 = vmatprep.subr.mxu0 0.0
        %991 = vmatpush1.msra.mxu0 0.0
        %992 = vmatprep.subr.mxu0 0.0
        %993 = vmatpush1.msra.mxu0 0.0
        %994 = vmatprep.subr.mxu0 0.0
        %995 = vmatpush1.msra.mxu0 0.0
        %996 = vmatprep.subr.mxu0 0.0
        %997 = vmatpush1.msra.mxu0 0.0
        %998 = vmatprep.subr.mxu0 0.0
        %999 = vmatpush1.msra.mxu0 0.0
        %1000 = vmatprep.subr.mxu0 0.0
        %1001 = vmatpush1.msra.mxu0 0.0
        %1002 = vmatprep.subr.mxu0 0.0
        %1003 = vmatpush1.msra.mxu0 0.0
        %1004 = vmatprep.subr.mxu0 0.0
        %1005 = vmatpush1.msra.mxu0 0.0
        %1006 = vmatprep.subr.mxu0 0.0
        %1007 = vmatpush1.msra.mxu0 0.0
        %1008 = vmatprep.subr.mxu0 0.0
        %1009 = vmatpush1.msra.mxu0 0.0
        %1010 = vmatprep.subr.mxu0 0.0
        %1011 = vmatpush1.msra.mxu0 0.0
        %1012 = vmatprep.subr.mxu0 0.0
        %1013 = vmatpush1.msra.mxu0 0.0
        %1014 = vmatprep.subr.mxu0 0.0
        %1015 = vmatpush1.msra.mxu0 0.0
        %1016 = vmatprep.subr.mxu0 0.0
        %1017 = vmatpush1.msra.mxu0 0.0
        %1018 = vmatprep.subr.mxu0 0.0
        %1019 = vmatpush1.msra.mxu0 0.0
        %1020 = vmatprep.subr.mxu0 0.0
        %1021 = vmatpush1.msra.mxu0 0.0
        %1022 = vmatprep.subr.mxu0 0.0
        %1023 = vmatpush1.msra.mxu0 0.0
        %1024 = vmatprep.subr.mxu0 0.0
        %1025 = vmatpush1.msra.mxu0 0.0
        %1026 = vmatprep.subr.mxu0 0.0
        %1027 = vmatpush1.msra.mxu0 0.0
        %1028 = vmatprep.subr.mxu0 0.0
        %1029 = vmatpush1.msra.mxu0 0.0
        %1030 = vmatprep.subr.mxu0 0.0
        %1031 = vmatpush1.msra.mxu0 0.0
        %1032 = vmatprep.subr.mxu0 0.0
        %1033 = vmatpush1.msra.mxu0 0.0
        %1034 = vmatprep.subr.mxu0 0.0
        %1035 = vmatpush1.msra.mxu0 0.0
        %1036 = vmatprep.subr.mxu0 0.0
        %1037 = vmatpush1.msra.mxu0 0.0
        %1038 = vmatprep.mubr.f32.mxu0 0.0
        %1039 = vmatmul.mubr.f32.gmra.mrb[0].mxu0 %v963
        %v1040 = vpop.f32.mrb[0].mxu0
        %v1041 = vadd.f32 0.0, %v1040
        %v1042 = vpop.f32.mrb[0].mxu0
        %v1043 = vadd.f32 0.0, %v1042
        %1044 = vmatprep.mubr.f32.mxu0 0.0
        %1045 = vmatmul.mubr.f32.gmra.mrb[0].mxu0 %v966
        %v1046 = vpop.f32.mrb[0].mxu0
        %v1047 = vadd.f32 0.0, %v1046
        %v1048 = vpop.f32.mrb[0].mxu0
        %v1049 = vadd.f32 0.0, %v1048
        %1050 = vmatprep.mubr.f32.mxu0 0.0
        %1051 = vmatmul.mubr.f32.gmra.mrb[0].mxu0 %v969
        %v1052 = vpop.f32.mrb[0].mxu0
        %v1053 = vadd.f32 0.0, %v1052
        %v1054 = vpop.f32.mrb[0].mxu0
        %v1055 = vadd.f32 0.0, %v1054
        %1056 = vmatprep.mubr.f32.mxu0 0.0
        %1057 = vmatmul.mubr.f32.gmra.mrb[0].mxu0 %v972
        %v1058 = vpop.f32.mrb[0].mxu0
        %v1059 = vadd.f32 0.0, %v1058
        %v1060 = vpop.f32.mrb[0].mxu0
        %v1061 = vadd.f32 0.0, %v1060
        %1062 = vdwg.mxu0
        %v1063 = vadd.f32 %v942, %v1041
        %v1064 = vadd.f32 %v943, %v1043
        %v1065 = vadd.f32 %v944, %v1047
        %v1066 = vadd.f32 %v945, %v1049
        %v1067 = vadd.f32 %v946, %v1053
        %v1068 = vadd.f32 %v947, %v1055
        %v1069 = vadd.f32 %v948, %v1059
        %v1070 = vadd.f32 %v949, %v1061
        %v1071 = vld [vmem:[%s612 + $0x1] sm:$0xff]
        %v1072 = vld [vmem:[%s612 + $0x9] sm:$0xff]
        %v1073 = vld [vmem:[%s612 + $0x11] sm:$0xff]
        %v1074 = vld [vmem:[%s612 + $0x19] sm:$0xf]
        %v1075 = vld [vmem:[%s1 + $0x100] sm:$0xff]
        %v1076 = vld [vmem:[%s1 + $0x108] sm:$0xff]
        %v1077 = vld [vmem:[%s1 + $0x110] sm:$0xff]
        %v1078 = vld [vmem:[%s1 + $0x118] sm:$0xff]
        %v1079 = vld [vmem:[%s1 + $0x120] sm:$0xff]
        %v1080 = vld [vmem:[%s1 + $0x128] sm:$0xff]
        %v1081 = vld [vmem:[%s1 + $0x130] sm:$0xff]
        %v1082 = vld [vmem:[%s1 + $0x138] sm:$0xff]
        %v1084 = vsel %vm625, %v1071, 0
        %v1087 = vsel %vm625, %v1072, 0
        %v1090 = vsel %vm625, %v1073, 0
        %v1093 = vsel %vm625, %v1074, 0
        %1095 = vmatprep.subr.mxu0 %v1076
        %1096 = vmatpush1.msra.mxu0 %v1075
        %1097 = vmatprep.subr.mxu0 %v1078
        %1098 = vmatpush1.msra.mxu0 %v1077
        %1099 = vmatprep.subr.mxu0 %v1080
        %1100 = vmatpush1.msra.mxu0 %v1079
        %1101 = vmatprep.subr.mxu0 %v1082
        %1102 = vmatpush1.msra.mxu0 %v1081
        %1103 = vmatprep.subr.mxu0 0.0
        %1104 = vmatpush1.msra.mxu0 0.0
        %1105 = vmatprep.subr.mxu0 0.0
        %1106 = vmatpush1.msra.mxu0 0.0
        %1107 = vmatprep.subr.mxu0 0.0
        %1108 = vmatpush1.msra.mxu0 0.0
        %1109 = vmatprep.subr.mxu0 0.0
        %1110 = vmatpush1.msra.mxu0 0.0
        %1111 = vmatprep.subr.mxu0 0.0
        %1112 = vmatpush1.msra.mxu0 0.0
        %1113 = vmatprep.subr.mxu0 0.0
        %1114 = vmatpush1.msra.mxu0 0.0
        %1115 = vmatprep.subr.mxu0 0.0
        %1116 = vmatpush1.msra.mxu0 0.0
        %1117 = vmatprep.subr.mxu0 0.0
        %1118 = vmatpush1.msra.mxu0 0.0
        %1119 = vmatprep.subr.mxu0 0.0
        %1120 = vmatpush1.msra.mxu0 0.0
        %1121 = vmatprep.subr.mxu0 0.0
        %1122 = vmatpush1.msra.mxu0 0.0
        %1123 = vmatprep.subr.mxu0 0.0
        %1124 = vmatpush1.msra.mxu0 0.0
        %1125 = vmatprep.subr.mxu0 0.0
        %1126 = vmatpush1.msra.mxu0 0.0
        %1127 = vmatprep.subr.mxu0 0.0
        %1128 = vmatpush1.msra.mxu0 0.0
        %1129 = vmatprep.subr.mxu0 0.0
        %1130 = vmatpush1.msra.mxu0 0.0
        %1131 = vmatprep.subr.mxu0 0.0
        %1132 = vmatpush1.msra.mxu0 0.0
        %1133 = vmatprep.subr.mxu0 0.0
        %1134 = vmatpush1.msra.mxu0 0.0
        %1135 = vmatprep.subr.mxu0 0.0
        %1136 = vmatpush1.msra.mxu0 0.0
        %1137 = vmatprep.subr.mxu0 0.0
        %1138 = vmatpush1.msra.mxu0 0.0
        %1139 = vmatprep.subr.mxu0 0.0
        %1140 = vmatpush1.msra.mxu0 0.0
        %1141 = vmatprep.subr.mxu0 0.0
        %1142 = vmatpush1.msra.mxu0 0.0
        %1143 = vmatprep.subr.mxu0 0.0
        %1144 = vmatpush1.msra.mxu0 0.0
        %1145 = vmatprep.subr.mxu0 0.0
        %1146 = vmatpush1.msra.mxu0 0.0
        %1147 = vmatprep.subr.mxu0 0.0
        %1148 = vmatpush1.msra.mxu0 0.0
        %1149 = vmatprep.subr.mxu0 0.0
        %1150 = vmatpush1.msra.mxu0 0.0
        %1151 = vmatprep.subr.mxu0 0.0
        %1152 = vmatpush1.msra.mxu0 0.0
        %1153 = vmatprep.subr.mxu0 0.0
        %1154 = vmatpush1.msra.mxu0 0.0
        %1155 = vmatprep.subr.mxu0 0.0
        %1156 = vmatpush1.msra.mxu0 0.0
        %1157 = vmatprep.subr.mxu0 0.0
        %1158 = vmatpush1.msra.mxu0 0.0
        %1159 = vmatprep.mubr.f32.mxu0 0.0
        %1160 = vmatmul.mubr.f32.gmra.mrb[0].mxu0 %v1084
        %v1161 = vpop.f32.mrb[0].mxu0
        %v1162 = vadd.f32 0.0, %v1161
        %v1163 = vpop.f32.mrb[0].mxu0
        %v1164 = vadd.f32 0.0, %v1163
        %1165 = vmatprep.mubr.f32.mxu0 0.0
        %1166 = vmatmul.mubr.f32.gmra.mrb[0].mxu0 %v1087
        %v1167 = vpop.f32.mrb[0].mxu0
        %v1168 = vadd.f32 0.0, %v1167
        %v1169 = vpop.f32.mrb[0].mxu0
        %v1170 = vadd.f32 0.0, %v1169
        %1171 = vmatprep.mubr.f32.mxu0 0.0
        %1172 = vmatmul.mubr.f32.gmra.mrb[0].mxu0 %v1090
        %v1173 = vpop.f32.mrb[0].mxu0
        %v1174 = vadd.f32 0.0, %v1173
        %v1175 = vpop.f32.mrb[0].mxu0
        %v1176 = vadd.f32 0.0, %v1175
        %1177 = vmatprep.mubr.f32.mxu0 0.0
        %1178 = vmatmul.mubr.f32.gmra.mrb[0].mxu0 %v1093
        %v1179 = vpop.f32.mrb[0].mxu0
        %v1180 = vadd.f32 0.0, %v1179
        %v1181 = vpop.f32.mrb[0].mxu0
        %v1182 = vadd.f32 0.0, %v1181
        %1183 = vdwg.mxu0
        %v1184 = vadd.f32 %v1063, %v1162
        %v1185 = vadd.f32 %v1064, %v1164
        %v1186 = vadd.f32 %v1065, %v1168
        %v1187 = vadd.f32 %v1066, %v1170
        %v1188 = vadd.f32 %v1067, %v1174
        %v1189 = vadd.f32 %v1068, %v1176
        %v1190 = vadd.f32 %v1069, %v1180
        %v1191 = vadd.f32 %v1070, %v1182
        %v1192 = vld [vmem:[%s828 + $0x1] sm:$0xff]
        %v1193 = vld [vmem:[%s828 + $0x9] sm:$0xff]
        %v1194 = vld [vmem:[%s828 + $0x11] sm:$0xff]
        %v1195 = vld [vmem:[%s828 + $0x19] sm:$0xf]
        %v1196 = vld [vmem:[%s1 + $0x140] sm:$0xff]
        %v1197 = vld [vmem:[%s1 + $0x148] sm:$0xff]
        %v1198 = vld [vmem:[%s1 + $0x150] sm:$0xff]
        %v1199 = vld [vmem:[%s1 + $0x158] sm:$0xff]
        %v1200 = vld [vmem:[%s1 + $0x160] sm:$0xff]
        %v1201 = vld [vmem:[%s1 + $0x168] sm:$0xff]
        %v1202 = vld [vmem:[%s1 + $0x170] sm:$0xff]
        %v1203 = vld [vmem:[%s1 + $0x178] sm:$0xff]
        %v1205 = vsel %vm625, %v1192, 0
        %v1208 = vsel %vm625, %v1193, 0
        %v1211 = vsel %vm625, %v1194, 0
        %v1214 = vsel %vm625, %v1195, 0
        %1216 = vmatprep.subr.mxu0 %v1197
        %1217 = vmatpush1.msra.mxu0 %v1196
        %1218 = vmatprep.subr.mxu0 %v1199
        %1219 = vmatpush1.msra.mxu0 %v1198
        %1220 = vmatprep.subr.mxu0 %v1201
        %1221 = vmatpush1.msra.mxu0 %v1200
        %1222 = vmatprep.subr.mxu0 %v1203
        %1223 = vmatpush1.msra.mxu0 %v1202
        %1224 = vmatprep.subr.mxu0 0.0
        %1225 = vmatpush1.msra.mxu0 0.0
        %1226 = vmatprep.subr.mxu0 0.0
        %1227 = vmatpush1.msra.mxu0 0.0
        %1228 = vmatprep.subr.mxu0 0.0
        %1229 = vmatpush1.msra.mxu0 0.0
        %1230 = vmatprep.subr.mxu0 0.0
        %1231 = vmatpush1.msra.mxu0 0.0
        %1232 = vmatprep.subr.mxu0 0.0
        %1233 = vmatpush1.msra.mxu0 0.0
        %1234 = vmatprep.subr.mxu0 0.0
        %1235 = vmatpush1.msra.mxu0 0.0
        %1236 = vmatprep.subr.mxu0 0.0
        %1237 = vmatpush1.msra.mxu0 0.0
        %1238 = vmatprep.subr.mxu0 0.0
        %1239 = vmatpush1.msra.mxu0 0.0
        %1240 = vmatprep.subr.mxu0 0.0
        %1241 = vmatpush1.msra.mxu0 0.0
        %1242 = vmatprep.subr.mxu0 0.0
        %1243 = vmatpush1.msra.mxu0 0.0
        %1244 = vmatprep.subr.mxu0 0.0
        %1245 = vmatpush1.msra.mxu0 0.0
        %1246 = vmatprep.subr.mxu0 0.0
        %1247 = vmatpush1.msra.mxu0 0.0
        %1248 = vmatprep.subr.mxu0 0.0
        %1249 = vmatpush1.msra.mxu0 0.0
        %1250 = vmatprep.subr.mxu0 0.0
        %1251 = vmatpush1.msra.mxu0 0.0
        %1252 = vmatprep.subr.mxu0 0.0
        %1253 = vmatpush1.msra.mxu0 0.0
        %1254 = vmatprep.subr.mxu0 0.0
        %1255 = vmatpush1.msra.mxu0 0.0
        %1256 = vmatprep.subr.mxu0 0.0
        %1257 = vmatpush1.msra.mxu0 0.0
        %1258 = vmatprep.subr.mxu0 0.0
        %1259 = vmatpush1.msra.mxu0 0.0
        %1260 = vmatprep.subr.mxu0 0.0
        %1261 = vmatpush1.msra.mxu0 0.0
        %1262 = vmatprep.subr.mxu0 0.0
        %1263 = vmatpush1.msra.mxu0 0.0
        %1264 = vmatprep.subr.mxu0 0.0
        %1265 = vmatpush1.msra.mxu0 0.0
        %1266 = vmatprep.subr.mxu0 0.0
        %1267 = vmatpush1.msra.mxu0 0.0
        %1268 = vmatprep.subr.mxu0 0.0
        %1269 = vmatpush1.msra.mxu0 0.0
        %1270 = vmatprep.subr.mxu0 0.0
        %1271 = vmatpush1.msra.mxu0 0.0
        %1272 = vmatprep.subr.mxu0 0.0
        %1273 = vmatpush1.msra.mxu0 0.0
        %1274 = vmatprep.subr.mxu0 0.0
        %1275 = vmatpush1.msra.mxu0 0.0
        %1276 = vmatprep.subr.mxu0 0.0
        %1277 = vmatpush1.msra.mxu0 0.0
        %1278 = vmatprep.subr.mxu0 0.0
        %1279 = vmatpush1.msra.mxu0 0.0
        %1280 = vmatprep.mubr.f32.mxu0 0.0
        %1281 = vmatmul.mubr.f32.gmra.mrb[0].mxu0 %v1205
        %v1282 = vpop.f32.mrb[0].mxu0
        %v1283 = vadd.f32 0.0, %v1282
        %v1284 = vpop.f32.mrb[0].mxu0
        %v1285 = vadd.f32 0.0, %v1284
        %1286 = vmatprep.mubr.f32.mxu0 0.0
        %1287 = vmatmul.mubr.f32.gmra.mrb[0].mxu0 %v1208
        %v1288 = vpop.f32.mrb[0].mxu0
        %v1289 = vadd.f32 0.0, %v1288
        %v1290 = vpop.f32.mrb[0].mxu0
        %v1291 = vadd.f32 0.0, %v1290
        %1292 = vmatprep.mubr.f32.mxu0 0.0
        %1293 = vmatmul.mubr.f32.gmra.mrb[0].mxu0 %v1211
        %v1294 = vpop.f32.mrb[0].mxu0
        %v1295 = vadd.f32 0.0, %v1294
        %v1296 = vpop.f32.mrb[0].mxu0
        %v1297 = vadd.f32 0.0, %v1296
        %1298 = vmatprep.mubr.f32.mxu0 0.0
        %1299 = vmatmul.mubr.f32.gmra.mrb[0].mxu0 %v1214
        %v1300 = vpop.f32.mrb[0].mxu0
        %v1301 = vadd.f32 0.0, %v1300
        %v1302 = vpop.f32.mrb[0].mxu0
        %v1303 = vadd.f32 0.0, %v1302
        %1304 = vdwg.mxu0
        %v1305 = vadd.f32 %v1184, %v1283
        %v1306 = vadd.f32 %v1185, %v1285
        %v1307 = vadd.f32 %v1186, %v1289
        %v1308 = vadd.f32 %v1187, %v1291
        %v1309 = vadd.f32 %v1188, %v1295
        %v1310 = vadd.f32 %v1189, %v1297
        %v1311 = vadd.f32 %v1190, %v1301
        %v1312 = vadd.f32 %v1191, %v1303
        %v1313 = vld [vmem:[%s599 + $0x2] sm:$0xff]
        %v1314 = vld [vmem:[%s599 + $0xa] sm:$0xff]
        %v1315 = vld [vmem:[%s599 + $0x12] sm:$0xff]
        %v1316 = vld [vmem:[%s599 + $0x1a] sm:$0xf]
        %v1317 = vld [vmem:[%s1 + $0x180] sm:$0xff]
        %v1318 = vld [vmem:[%s1 + $0x188] sm:$0xff]
        %v1319 = vld [vmem:[%s1 + $0x190] sm:$0xff]
        %v1320 = vld [vmem:[%s1 + $0x198] sm:$0xff]
        %v1321 = vld [vmem:[%s1 + $0x1a0] sm:$0xff]
        %v1322 = vld [vmem:[%s1 + $0x1a8] sm:$0xff]
        %v1323 = vld [vmem:[%s1 + $0x1b0] sm:$0xff]
        %v1324 = vld [vmem:[%s1 + $0x1b8] sm:$0xff]
        %v1326 = vsel %vm625, %v1313, 0
        %v1329 = vsel %vm625, %v1314, 0
        %v1332 = vsel %vm625, %v1315, 0
        %v1335 = vsel %vm625, %v1316, 0
        %1337 = vmatprep.subr.mxu0 %v1318
        %1338 = vmatpush1.msra.mxu0 %v1317
        %1339 = vmatprep.subr.mxu0 %v1320
        %1340 = vmatpush1.msra.mxu0 %v1319
        %1341 = vmatprep.subr.mxu0 %v1322
        %1342 = vmatpush1.msra.mxu0 %v1321
        %1343 = vmatprep.subr.mxu0 %v1324
        %1344 = vmatpush1.msra.mxu0 %v1323
        %1345 = vmatprep.subr.mxu0 0.0
        %1346 = vmatpush1.msra.mxu0 0.0
        %1347 = vmatprep.subr.mxu0 0.0
        %1348 = vmatpush1.msra.mxu0 0.0
        %1349 = vmatprep.subr.mxu0 0.0
        %1350 = vmatpush1.msra.mxu0 0.0
        %1351 = vmatprep.subr.mxu0 0.0
        %1352 = vmatpush1.msra.mxu0 0.0
        %1353 = vmatprep.subr.mxu0 0.0
        %1354 = vmatpush1.msra.mxu0 0.0
        %1355 = vmatprep.subr.mxu0 0.0
        %1356 = vmatpush1.msra.mxu0 0.0
        %1357 = vmatprep.subr.mxu0 0.0
        %1358 = vmatpush1.msra.mxu0 0.0
        %1359 = vmatprep.subr.mxu0 0.0
        %1360 = vmatpush1.msra.mxu0 0.0
        %1361 = vmatprep.subr.mxu0 0.0
        %1362 = vmatpush1.msra.mxu0 0.0
        %1363 = vmatprep.subr.mxu0 0.0
        %1364 = vmatpush1.msra.mxu0 0.0
        %1365 = vmatprep.subr.mxu0 0.0
        %1366 = vmatpush1.msra.mxu0 0.0
        %1367 = vmatprep.subr.mxu0 0.0
        %1368 = vmatpush1.msra.mxu0 0.0
        %1369 = vmatprep.subr.mxu0 0.0
        %1370 = vmatpush1.msra.mxu0 0.0
        %1371 = vmatprep.subr.mxu0 0.0
        %1372 = vmatpush1.msra.mxu0 0.0
        %1373 = vmatprep.subr.mxu0 0.0
        %1374 = vmatpush1.msra.mxu0 0.0
        %1375 = vmatprep.subr.mxu0 0.0
        %1376 = vmatpush1.msra.mxu0 0.0
        %1377 = vmatprep.subr.mxu0 0.0
        %1378 = vmatpush1.msra.mxu0 0.0
        %1379 = vmatprep.subr.mxu0 0.0
        %1380 = vmatpush1.msra.mxu0 0.0
        %1381 = vmatprep.subr.mxu0 0.0
        %1382 = vmatpush1.msra.mxu0 0.0
        %1383 = vmatprep.subr.mxu0 0.0
        %1384 = vmatpush1.msra.mxu0 0.0
        %1385 = vmatprep.subr.mxu0 0.0
        %1386 = vmatpush1.msra.mxu0 0.0
        %1387 = vmatprep.subr.mxu0 0.0
        %1388 = vmatpush1.msra.mxu0 0.0
        %1389 = vmatprep.subr.mxu0 0.0
        %1390 = vmatpush1.msra.mxu0 0.0
        %1391 = vmatprep.subr.mxu0 0.0
        %1392 = vmatpush1.msra.mxu0 0.0
        %1393 = vmatprep.subr.mxu0 0.0
        %1394 = vmatpush1.msra.mxu0 0.0
        %1395 = vmatprep.subr.mxu0 0.0
        %1396 = vmatpush1.msra.mxu0 0.0
        %1397 = vmatprep.subr.mxu0 0.0
        %1398 = vmatpush1.msra.mxu0 0.0
        %1399 = vmatprep.subr.mxu0 0.0
        %1400 = vmatpush1.msra.mxu0 0.0
        %1401 = vmatprep.mubr.f32.mxu0 0.0
        %1402 = vmatmul.mubr.f32.gmra.mrb[0].mxu0 %v1326
        %v1403 = vpop.f32.mrb[0].mxu0
        %v1404 = vadd.f32 0.0, %v1403
        %v1405 = vpop.f32.mrb[0].mxu0
        %v1406 = vadd.f32 0.0, %v1405
        %1407 = vmatprep.mubr.f32.mxu0 0.0
        %1408 = vmatmul.mubr.f32.gmra.mrb[0].mxu0 %v1329
        %v1409 = vpop.f32.mrb[0].mxu0
        %v1410 = vadd.f32 0.0, %v1409
        %v1411 = vpop.f32.mrb[0].mxu0
        %v1412 = vadd.f32 0.0, %v1411
        %1413 = vmatprep.mubr.f32.mxu0 0.0
        %1414 = vmatmul.mubr.f32.gmra.mrb[0].mxu0 %v1332
        %v1415 = vpop.f32.mrb[0].mxu0
        %v1416 = vadd.f32 0.0, %v1415
        %v1417 = vpop.f32.mrb[0].mxu0
        %v1418 = vadd.f32 0.0, %v1417
        %1419 = vmatprep.mubr.f32.mxu0 0.0
        %1420 = vmatmul.mubr.f32.gmra.mrb[0].mxu0 %v1335
        %v1421 = vpop.f32.mrb[0].mxu0
        %v1422 = vadd.f32 0.0, %v1421
        %v1423 = vpop.f32.mrb[0].mxu0
        %v1424 = vadd.f32 0.0, %v1423
        %1425 = vdwg.mxu0
        %v1426 = vadd.f32 %v1305, %v1404
        %v1427 = vadd.f32 %v1306, %v1406
        %v1428 = vadd.f32 %v1307, %v1410
        %v1429 = vadd.f32 %v1308, %v1412
        %v1430 = vadd.f32 %v1309, %v1416
        %v1431 = vadd.f32 %v1310, %v1418
        %v1432 = vadd.f32 %v1311, %v1422
        %v1433 = vadd.f32 %v1312, %v1424
        %v1434 = vld [vmem:[%s612 + $0x2] sm:$0xff]
        %v1435 = vld [vmem:[%s612 + $0xa] sm:$0xff]
        %v1436 = vld [vmem:[%s612 + $0x12] sm:$0xff]
        %v1437 = vld [vmem:[%s612 + $0x1a] sm:$0xf]
        %v1438 = vld [vmem:[%s1 + $0x1c0] sm:$0xff]
        %v1439 = vld [vmem:[%s1 + $0x1c8] sm:$0xff]
        %v1440 = vld [vmem:[%s1 + $0x1d0] sm:$0xff]
        %v1441 = vld [vmem:[%s1 + $0x1d8] sm:$0xff]
        %v1442 = vld [vmem:[%s1 + $0x1e0] sm:$0xff]
        %v1443 = vld [vmem:[%s1 + $0x1e8] sm:$0xff]
        %v1444 = vld [vmem:[%s1 + $0x1f0] sm:$0xff]
        %v1445 = vld [vmem:[%s1 + $0x1f8] sm:$0xff]
        %v1447 = vsel %vm625, %v1434, 0
        %v1450 = vsel %vm625, %v1435, 0
        %v1453 = vsel %vm625, %v1436, 0
        %v1456 = vsel %vm625, %v1437, 0
        %1458 = vmatprep.subr.mxu0 %v1439
        %1459 = vmatpush1.msra.mxu0 %v1438
        %1460 = vmatprep.subr.mxu0 %v1441
        %1461 = vmatpush1.msra.mxu0 %v1440
        %1462 = vmatprep.subr.mxu0 %v1443
        %1463 = vmatpush1.msra.mxu0 %v1442
        %1464 = vmatprep.subr.mxu0 %v1445
        %1465 = vmatpush1.msra.mxu0 %v1444
        %1466 = vmatprep.subr.mxu0 0.0
        %1467 = vmatpush1.msra.mxu0 0.0
        %1468 = vmatprep.subr.mxu0 0.0
        %1469 = vmatpush1.msra.mxu0 0.0
        %1470 = vmatprep.subr.mxu0 0.0
        %1471 = vmatpush1.msra.mxu0 0.0
        %1472 = vmatprep.subr.mxu0 0.0
        %1473 = vmatpush1.msra.mxu0 0.0
        %1474 = vmatprep.subr.mxu0 0.0
        %1475 = vmatpush1.msra.mxu0 0.0
        %1476 = vmatprep.subr.mxu0 0.0
        %1477 = vmatpush1.msra.mxu0 0.0
        %1478 = vmatprep.subr.mxu0 0.0
        %1479 = vmatpush1.msra.mxu0 0.0
        %1480 = vmatprep.subr.mxu0 0.0
        %1481 = vmatpush1.msra.mxu0 0.0
        %1482 = vmatprep.subr.mxu0 0.0
        %1483 = vmatpush1.msra.mxu0 0.0
        %1484 = vmatprep.subr.mxu0 0.0
        %1485 = vmatpush1.msra.mxu0 0.0
        %1486 = vmatprep.subr.mxu0 0.0
        %1487 = vmatpush1.msra.mxu0 0.0
        %1488 = vmatprep.subr.mxu0 0.0
        %1489 = vmatpush1.msra.mxu0 0.0
        %1490 = vmatprep.subr.mxu0 0.0
        %1491 = vmatpush1.msra.mxu0 0.0
        %1492 = vmatprep.subr.mxu0 0.0
        %1493 = vmatpush1.msra.mxu0 0.0
        %1494 = vmatprep.subr.mxu0 0.0
        %1495 = vmatpush1.msra.mxu0 0.0
        %1496 = vmatprep.subr.mxu0 0.0
        %1497 = vmatpush1.msra.mxu0 0.0
        %1498 = vmatprep.subr.mxu0 0.0
        %1499 = vmatpush1.msra.mxu0 0.0
        %1500 = vmatprep.subr.mxu0 0.0
        %1501 = vmatpush1.msra.mxu0 0.0
        %1502 = vmatprep.subr.mxu0 0.0
        %1503 = vmatpush1.msra.mxu0 0.0
        %1504 = vmatprep.subr.mxu0 0.0
        %1505 = vmatpush1.msra.mxu0 0.0
        %1506 = vmatprep.subr.mxu0 0.0
        %1507 = vmatpush1.msra.mxu0 0.0
        %1508 = vmatprep.subr.mxu0 0.0
        %1509 = vmatpush1.msra.mxu0 0.0
        %1510 = vmatprep.subr.mxu0 0.0
        %1511 = vmatpush1.msra.mxu0 0.0
        %1512 = vmatprep.subr.mxu0 0.0
        %1513 = vmatpush1.msra.mxu0 0.0
        %1514 = vmatprep.subr.mxu0 0.0
        %1515 = vmatpush1.msra.mxu0 0.0
        %1516 = vmatprep.subr.mxu0 0.0
        %1517 = vmatpush1.msra.mxu0 0.0
        %1518 = vmatprep.subr.mxu0 0.0
        %1519 = vmatpush1.msra.mxu0 0.0
        %1520 = vmatprep.subr.mxu0 0.0
        %1521 = vmatpush1.msra.mxu0 0.0
        %1522 = vmatprep.mubr.f32.mxu0 0.0
        %1523 = vmatmul.mubr.f32.gmra.mrb[0].mxu0 %v1447
        %v1524 = vpop.f32.mrb[0].mxu0
        %v1525 = vadd.f32 0.0, %v1524
        %v1526 = vpop.f32.mrb[0].mxu0
        %v1527 = vadd.f32 0.0, %v1526
        %1528 = vmatprep.mubr.f32.mxu0 0.0
        %1529 = vmatmul.mubr.f32.gmra.mrb[0].mxu0 %v1450
        %v1530 = vpop.f32.mrb[0].mxu0
        %v1531 = vadd.f32 0.0, %v1530
        %v1532 = vpop.f32.mrb[0].mxu0
        %v1533 = vadd.f32 0.0, %v1532
        %1534 = vmatprep.mubr.f32.mxu0 0.0
        %1535 = vmatmul.mubr.f32.gmra.mrb[0].mxu0 %v1453
        %v1536 = vpop.f32.mrb[0].mxu0
        %v1537 = vadd.f32 0.0, %v1536
        %v1538 = vpop.f32.mrb[0].mxu0
        %v1539 = vadd.f32 0.0, %v1538
        %1540 = vmatprep.mubr.f32.mxu0 0.0
        %1541 = vmatmul.mubr.f32.gmra.mrb[0].mxu0 %v1456
        %v1542 = vpop.f32.mrb[0].mxu0
        %v1543 = vadd.f32 0.0, %v1542
        %v1544 = vpop.f32.mrb[0].mxu0
        %v1545 = vadd.f32 0.0, %v1544
        %1546 = vdwg.mxu0
        %v1547 = vadd.f32 %v1426, %v1525
        %v1548 = vadd.f32 %v1427, %v1527
        %v1549 = vadd.f32 %v1428, %v1531
        %v1550 = vadd.f32 %v1429, %v1533
        %v1551 = vadd.f32 %v1430, %v1537
        %v1552 = vadd.f32 %v1431, %v1539
        %v1553 = vadd.f32 %v1432, %v1543
        %v1554 = vadd.f32 %v1433, %v1545
        %v1555 = vld [vmem:[%s828 + $0x2] sm:$0xff]
        %v1556 = vld [vmem:[%s828 + $0xa] sm:$0xff]
        %v1557 = vld [vmem:[%s828 + $0x12] sm:$0xff]
        %v1558 = vld [vmem:[%s828 + $0x1a] sm:$0xf]
        %v1559 = vld [vmem:[%s1 + $0x200] sm:$0xff]
        %v1560 = vld [vmem:[%s1 + $0x208] sm:$0xff]
        %v1561 = vld [vmem:[%s1 + $0x210] sm:$0xff]
        %v1562 = vld [vmem:[%s1 + $0x218] sm:$0xff]
        %v1563 = vld [vmem:[%s1 + $0x220] sm:$0xff]
        %v1564 = vld [vmem:[%s1 + $0x228] sm:$0xff]
        %v1565 = vld [vmem:[%s1 + $0x230] sm:$0xff]
        %v1566 = vld [vmem:[%s1 + $0x238] sm:$0xff]
        %v1568 = vsel %vm625, %v1555, 0
        %v1571 = vsel %vm625, %v1556, 0
        %v1574 = vsel %vm625, %v1557, 0
        %v1577 = vsel %vm625, %v1558, 0
        %1579 = vmatprep.subr.mxu0 %v1560
        %1580 = vmatpush1.msra.mxu0 %v1559
        %1581 = vmatprep.subr.mxu0 %v1562
        %1582 = vmatpush1.msra.mxu0 %v1561
        %1583 = vmatprep.subr.mxu0 %v1564
        %1584 = vmatpush1.msra.mxu0 %v1563
        %1585 = vmatprep.subr.mxu0 %v1566
        %1586 = vmatpush1.msra.mxu0 %v1565
        %1587 = vmatprep.subr.mxu0 0.0
        %1588 = vmatpush1.msra.mxu0 0.0
        %1589 = vmatprep.subr.mxu0 0.0
        %1590 = vmatpush1.msra.mxu0 0.0
        %1591 = vmatprep.subr.mxu0 0.0
        %1592 = vmatpush1.msra.mxu0 0.0
        %1593 = vmatprep.subr.mxu0 0.0
        %1594 = vmatpush1.msra.mxu0 0.0
        %1595 = vmatprep.subr.mxu0 0.0
        %1596 = vmatpush1.msra.mxu0 0.0
        %1597 = vmatprep.subr.mxu0 0.0
        %1598 = vmatpush1.msra.mxu0 0.0
        %1599 = vmatprep.subr.mxu0 0.0
        %1600 = vmatpush1.msra.mxu0 0.0
        %1601 = vmatprep.subr.mxu0 0.0
        %1602 = vmatpush1.msra.mxu0 0.0
        %1603 = vmatprep.subr.mxu0 0.0
        %1604 = vmatpush1.msra.mxu0 0.0
        %1605 = vmatprep.subr.mxu0 0.0
        %1606 = vmatpush1.msra.mxu0 0.0
        %1607 = vmatprep.subr.mxu0 0.0
        %1608 = vmatpush1.msra.mxu0 0.0
        %1609 = vmatprep.subr.mxu0 0.0
        %1610 = vmatpush1.msra.mxu0 0.0
        %1611 = vmatprep.subr.mxu0 0.0
        %1612 = vmatpush1.msra.mxu0 0.0
        %1613 = vmatprep.subr.mxu0 0.0
        %1614 = vmatpush1.msra.mxu0 0.0
        %1615 = vmatprep.subr.mxu0 0.0
        %1616 = vmatpush1.msra.mxu0 0.0
        %1617 = vmatprep.subr.mxu0 0.0
        %1618 = vmatpush1.msra.mxu0 0.0
        %1619 = vmatprep.subr.mxu0 0.0
        %1620 = vmatpush1.msra.mxu0 0.0
        %1621 = vmatprep.subr.mxu0 0.0
        %1622 = vmatpush1.msra.mxu0 0.0
        %1623 = vmatprep.subr.mxu0 0.0
        %1624 = vmatpush1.msra.mxu0 0.0
        %1625 = vmatprep.subr.mxu0 0.0
        %1626 = vmatpush1.msra.mxu0 0.0
        %1627 = vmatprep.subr.mxu0 0.0
        %1628 = vmatpush1.msra.mxu0 0.0
        %1629 = vmatprep.subr.mxu0 0.0
        %1630 = vmatpush1.msra.mxu0 0.0
        %1631 = vmatprep.subr.mxu0 0.0
        %1632 = vmatpush1.msra.mxu0 0.0
        %1633 = vmatprep.subr.mxu0 0.0
        %1634 = vmatpush1.msra.mxu0 0.0
        %1635 = vmatprep.subr.mxu0 0.0
        %1636 = vmatpush1.msra.mxu0 0.0
        %1637 = vmatprep.subr.mxu0 0.0
        %1638 = vmatpush1.msra.mxu0 0.0
        %1639 = vmatprep.subr.mxu0 0.0
        %1640 = vmatpush1.msra.mxu0 0.0
        %1641 = vmatprep.subr.mxu0 0.0
        %1642 = vmatpush1.msra.mxu0 0.0
        %1643 = vmatprep.mubr.f32.mxu0 0.0
        %1644 = vmatmul.mubr.f32.gmra.mrb[0].mxu0 %v1568
        %v1645 = vpop.f32.mrb[0].mxu0
        %v1646 = vadd.f32 0.0, %v1645
        %v1647 = vpop.f32.mrb[0].mxu0
        %v1648 = vadd.f32 0.0, %v1647
        %1649 = vmatprep.mubr.f32.mxu0 0.0
        %1650 = vmatmul.mubr.f32.gmra.mrb[0].mxu0 %v1571
        %v1651 = vpop.f32.mrb[0].mxu0
        %v1652 = vadd.f32 0.0, %v1651
        %v1653 = vpop.f32.mrb[0].mxu0
        %v1654 = vadd.f32 0.0, %v1653
        %1655 = vmatprep.mubr.f32.mxu0 0.0
        %1656 = vmatmul.mubr.f32.gmra.mrb[0].mxu0 %v1574
        %v1657 = vpop.f32.mrb[0].mxu0
        %v1658 = vadd.f32 0.0, %v1657
        %v1659 = vpop.f32.mrb[0].mxu0
        %v1660 = vadd.f32 0.0, %v1659
        %1661 = vmatprep.mubr.f32.mxu0 0.0
        %1662 = vmatmul.mubr.f32.gmra.mrb[0].mxu0 %v1577
        %v1663 = vpop.f32.mrb[0].mxu0
        %v1664 = vadd.f32 0.0, %v1663
        %v1665 = vpop.f32.mrb[0].mxu0
        %v1666 = vadd.f32 0.0, %v1665
        %1667 = vdwg.mxu0
        %v1668 = vadd.f32 %v1547, %v1646
        %v1669 = vadd.f32 %v1548, %v1648
        %v1670 = vadd.f32 %v1549, %v1652
        %v1671 = vadd.f32 %v1550, %v1654
        %v1672 = vadd.f32 %v1551, %v1658
        %v1673 = vadd.f32 %v1552, %v1660
        %v1674 = vadd.f32 %v1553, %v1664
        %v1675 = vadd.f32 %v1554, %v1666
        %v1676 = vld [vmem:[%s599 + $0x3] sm:$0xff]
        %v1677 = vld [vmem:[%s599 + $0xb] sm:$0xff]
        %v1678 = vld [vmem:[%s599 + $0x13] sm:$0xff]
        %v1679 = vld [vmem:[%s599 + $0x1b] sm:$0xf]
        %v1680 = vld [vmem:[%s1 + $0x240] sm:$0xff]
        %v1681 = vld [vmem:[%s1 + $0x248] sm:$0xff]
        %v1682 = vld [vmem:[%s1 + $0x250] sm:$0xff]
        %v1683 = vld [vmem:[%s1 + $0x258] sm:$0xff]
        %v1684 = vld [vmem:[%s1 + $0x260] sm:$0xff]
        %v1685 = vld [vmem:[%s1 + $0x268] sm:$0xff]
        %v1686 = vld [vmem:[%s1 + $0x270] sm:$0xff]
        %v1687 = vld [vmem:[%s1 + $0x278] sm:$0xff]
        %v1689 = vsel %vm625, %v1676, 0
        %v1692 = vsel %vm625, %v1677, 0
        %v1695 = vsel %vm625, %v1678, 0
        %v1698 = vsel %vm625, %v1679, 0
        %1700 = vmatprep.subr.mxu0 %v1681
        %1701 = vmatpush1.msra.mxu0 %v1680
        %1702 = vmatprep.subr.mxu0 %v1683
        %1703 = vmatpush1.msra.mxu0 %v1682
        %1704 = vmatprep.subr.mxu0 %v1685
        %1705 = vmatpush1.msra.mxu0 %v1684
        %1706 = vmatprep.subr.mxu0 %v1687
        %1707 = vmatpush1.msra.mxu0 %v1686
        %1708 = vmatprep.subr.mxu0 0.0
        %1709 = vmatpush1.msra.mxu0 0.0
        %1710 = vmatprep.subr.mxu0 0.0
        %1711 = vmatpush1.msra.mxu0 0.0
        %1712 = vmatprep.subr.mxu0 0.0
        %1713 = vmatpush1.msra.mxu0 0.0
        %1714 = vmatprep.subr.mxu0 0.0
        %1715 = vmatpush1.msra.mxu0 0.0
        %1716 = vmatprep.subr.mxu0 0.0
        %1717 = vmatpush1.msra.mxu0 0.0
        %1718 = vmatprep.subr.mxu0 0.0
        %1719 = vmatpush1.msra.mxu0 0.0
        %1720 = vmatprep.subr.mxu0 0.0
        %1721 = vmatpush1.msra.mxu0 0.0
        %1722 = vmatprep.subr.mxu0 0.0
        %1723 = vmatpush1.msra.mxu0 0.0
        %1724 = vmatprep.subr.mxu0 0.0
        %1725 = vmatpush1.msra.mxu0 0.0
        %1726 = vmatprep.subr.mxu0 0.0
        %1727 = vmatpush1.msra.mxu0 0.0
        %1728 = vmatprep.subr.mxu0 0.0
        %1729 = vmatpush1.msra.mxu0 0.0
        %1730 = vmatprep.subr.mxu0 0.0
        %1731 = vmatpush1.msra.mxu0 0.0
        %1732 = vmatprep.subr.mxu0 0.0
        %1733 = vmatpush1.msra.mxu0 0.0
        %1734 = vmatprep.subr.mxu0 0.0
        %1735 = vmatpush1.msra.mxu0 0.0
        %1736 = vmatprep.subr.mxu0 0.0
        %1737 = vmatpush1.msra.mxu0 0.0
        %1738 = vmatprep.subr.mxu0 0.0
        %1739 = vmatpush1.msra.mxu0 0.0
        %1740 = vmatprep.subr.mxu0 0.0
        %1741 = vmatpush1.msra.mxu0 0.0
        %1742 = vmatprep.subr.mxu0 0.0
        %1743 = vmatpush1.msra.mxu0 0.0
        %1744 = vmatprep.subr.mxu0 0.0
        %1745 = vmatpush1.msra.mxu0 0.0
        %1746 = vmatprep.subr.mxu0 0.0
        %1747 = vmatpush1.msra.mxu0 0.0
        %1748 = vmatprep.subr.mxu0 0.0
        %1749 = vmatpush1.msra.mxu0 0.0
        %1750 = vmatprep.subr.mxu0 0.0
        %1751 = vmatpush1.msra.mxu0 0.0
        %1752 = vmatprep.subr.mxu0 0.0
        %1753 = vmatpush1.msra.mxu0 0.0
        %1754 = vmatprep.subr.mxu0 0.0
        %1755 = vmatpush1.msra.mxu0 0.0
        %1756 = vmatprep.subr.mxu0 0.0
        %1757 = vmatpush1.msra.mxu0 0.0
        %1758 = vmatprep.subr.mxu0 0.0
        %1759 = vmatpush1.msra.mxu0 0.0
        %1760 = vmatprep.subr.mxu0 0.0
        %1761 = vmatpush1.msra.mxu0 0.0
        %1762 = vmatprep.subr.mxu0 0.0
        %1763 = vmatpush1.msra.mxu0 0.0
        %1764 = vmatprep.mubr.f32.mxu0 0.0
        %1765 = vmatmul.mubr.f32.gmra.mrb[0].mxu0 %v1689
        %v1766 = vpop.f32.mrb[0].mxu0
        %v1767 = vadd.f32 0.0, %v1766
        %v1768 = vpop.f32.mrb[0].mxu0
        %v1769 = vadd.f32 0.0, %v1768
        %1770 = vmatprep.mubr.f32.mxu0 0.0
        %1771 = vmatmul.mubr.f32.gmra.mrb[0].mxu0 %v1692
        %v1772 = vpop.f32.mrb[0].mxu0
        %v1773 = vadd.f32 0.0, %v1772
        %v1774 = vpop.f32.mrb[0].mxu0
        %v1775 = vadd.f32 0.0, %v1774
        %1776 = vmatprep.mubr.f32.mxu0 0.0
        %1777 = vmatmul.mubr.f32.gmra.mrb[0].mxu0 %v1695
        %v1778 = vpop.f32.mrb[0].mxu0
        %v1779 = vadd.f32 0.0, %v1778
        %v1780 = vpop.f32.mrb[0].mxu0
        %v1781 = vadd.f32 0.0, %v1780
        %1782 = vmatprep.mubr.f32.mxu0 0.0
        %1783 = vmatmul.mubr.f32.gmra.mrb[0].mxu0 %v1698
        %v1784 = vpop.f32.mrb[0].mxu0
        %v1785 = vadd.f32 0.0, %v1784
        %v1786 = vpop.f32.mrb[0].mxu0
        %v1787 = vadd.f32 0.0, %v1786
        %1788 = vdwg.mxu0
        %v1789 = vadd.f32 %v1668, %v1767
        %v1790 = vadd.f32 %v1669, %v1769
        %v1791 = vadd.f32 %v1670, %v1773
        %v1792 = vadd.f32 %v1671, %v1775
        %v1793 = vadd.f32 %v1672, %v1779
        %v1794 = vadd.f32 %v1673, %v1781
        %v1795 = vadd.f32 %v1674, %v1785
        %v1796 = vadd.f32 %v1675, %v1787
        %v1797 = vld [vmem:[%s612 + $0x3] sm:$0xff]
        %v1798 = vld [vmem:[%s612 + $0xb] sm:$0xff]
        %v1799 = vld [vmem:[%s612 + $0x13] sm:$0xff]
        %v1800 = vld [vmem:[%s612 + $0x1b] sm:$0xf]
        %v1801 = vld [vmem:[%s1 + $0x280] sm:$0xff]
        %v1802 = vld [vmem:[%s1 + $0x288] sm:$0xff]
        %v1803 = vld [vmem:[%s1 + $0x290] sm:$0xff]
        %v1804 = vld [vmem:[%s1 + $0x298] sm:$0xff]
        %v1805 = vld [vmem:[%s1 + $0x2a0] sm:$0xff]
        %v1806 = vld [vmem:[%s1 + $0x2a8] sm:$0xff]
        %v1807 = vld [vmem:[%s1 + $0x2b0] sm:$0xff]
        %v1808 = vld [vmem:[%s1 + $0x2b8] sm:$0xff]
        %v1810 = vsel %vm625, %v1797, 0
        %v1813 = vsel %vm625, %v1798, 0
        %v1816 = vsel %vm625, %v1799, 0
        %v1819 = vsel %vm625, %v1800, 0
        %1821 = vmatprep.subr.mxu0 %v1802
        %1822 = vmatpush1.msra.mxu0 %v1801
        %1823 = vmatprep.subr.mxu0 %v1804
        %1824 = vmatpush1.msra.mxu0 %v1803
        %1825 = vmatprep.subr.mxu0 %v1806
        %1826 = vmatpush1.msra.mxu0 %v1805
        %1827 = vmatprep.subr.mxu0 %v1808
        %1828 = vmatpush1.msra.mxu0 %v1807
        %1829 = vmatprep.subr.mxu0 0.0
        %1830 = vmatpush1.msra.mxu0 0.0
        %1831 = vmatprep.subr.mxu0 0.0
        %1832 = vmatpush1.msra.mxu0 0.0
        %1833 = vmatprep.subr.mxu0 0.0
        %1834 = vmatpush1.msra.mxu0 0.0
        %1835 = vmatprep.subr.mxu0 0.0
        %1836 = vmatpush1.msra.mxu0 0.0
        %1837 = vmatprep.subr.mxu0 0.0
        %1838 = vmatpush1.msra.mxu0 0.0
        %1839 = vmatprep.subr.mxu0 0.0
        %1840 = vmatpush1.msra.mxu0 0.0
        %1841 = vmatprep.subr.mxu0 0.0
        %1842 = vmatpush1.msra.mxu0 0.0
        %1843 = vmatprep.subr.mxu0 0.0
        %1844 = vmatpush1.msra.mxu0 0.0
        %1845 = vmatprep.subr.mxu0 0.0
        %1846 = vmatpush1.msra.mxu0 0.0
        %1847 = vmatprep.subr.mxu0 0.0
        %1848 = vmatpush1.msra.mxu0 0.0
        %1849 = vmatprep.subr.mxu0 0.0
        %1850 = vmatpush1.msra.mxu0 0.0
        %1851 = vmatprep.subr.mxu0 0.0
        %1852 = vmatpush1.msra.mxu0 0.0
        %1853 = vmatprep.subr.mxu0 0.0
        %1854 = vmatpush1.msra.mxu0 0.0
        %1855 = vmatprep.subr.mxu0 0.0
        %1856 = vmatpush1.msra.mxu0 0.0
        %1857 = vmatprep.subr.mxu0 0.0
        %1858 = vmatpush1.msra.mxu0 0.0
        %1859 = vmatprep.subr.mxu0 0.0
        %1860 = vmatpush1.msra.mxu0 0.0
        %1861 = vmatprep.subr.mxu0 0.0
        %1862 = vmatpush1.msra.mxu0 0.0
        %1863 = vmatprep.subr.mxu0 0.0
        %1864 = vmatpush1.msra.mxu0 0.0
        %1865 = vmatprep.subr.mxu0 0.0
        %1866 = vmatpush1.msra.mxu0 0.0
        %1867 = vmatprep.subr.mxu0 0.0
        %1868 = vmatpush1.msra.mxu0 0.0
        %1869 = vmatprep.subr.mxu0 0.0
        %1870 = vmatpush1.msra.mxu0 0.0
        %1871 = vmatprep.subr.mxu0 0.0
        %1872 = vmatpush1.msra.mxu0 0.0
        %1873 = vmatprep.subr.mxu0 0.0
        %1874 = vmatpush1.msra.mxu0 0.0
        %1875 = vmatprep.subr.mxu0 0.0
        %1876 = vmatpush1.msra.mxu0 0.0
        %1877 = vmatprep.subr.mxu0 0.0
        %1878 = vmatpush1.msra.mxu0 0.0
        %1879 = vmatprep.subr.mxu0 0.0
        %1880 = vmatpush1.msra.mxu0 0.0
        %1881 = vmatprep.subr.mxu0 0.0
        %1882 = vmatpush1.msra.mxu0 0.0
        %1883 = vmatprep.subr.mxu0 0.0
        %1884 = vmatpush1.msra.mxu0 0.0
        %1885 = vmatprep.mubr.f32.mxu0 0.0
        %1886 = vmatmul.mubr.f32.gmra.mrb[0].mxu0 %v1810
        %v1887 = vpop.f32.mrb[0].mxu0
        %v1888 = vadd.f32 0.0, %v1887
        %v1889 = vpop.f32.mrb[0].mxu0
        %v1890 = vadd.f32 0.0, %v1889
        %1891 = vmatprep.mubr.f32.mxu0 0.0
        %1892 = vmatmul.mubr.f32.gmra.mrb[0].mxu0 %v1813
        %v1893 = vpop.f32.mrb[0].mxu0
        %v1894 = vadd.f32 0.0, %v1893
        %v1895 = vpop.f32.mrb[0].mxu0
        %v1896 = vadd.f32 0.0, %v1895
        %1897 = vmatprep.mubr.f32.mxu0 0.0
        %1898 = vmatmul.mubr.f32.gmra.mrb[0].mxu0 %v1816
        %v1899 = vpop.f32.mrb[0].mxu0
        %v1900 = vadd.f32 0.0, %v1899
        %v1901 = vpop.f32.mrb[0].mxu0
        %v1902 = vadd.f32 0.0, %v1901
        %1903 = vmatprep.mubr.f32.mxu0 0.0
        %1904 = vmatmul.mubr.f32.gmra.mrb[0].mxu0 %v1819
        %v1905 = vpop.f32.mrb[0].mxu0
        %v1906 = vadd.f32 0.0, %v1905
        %v1907 = vpop.f32.mrb[0].mxu0
        %v1908 = vadd.f32 0.0, %v1907
        %1909 = vdwg.mxu0
        %v1910 = vadd.f32 %v1789, %v1888
        %v1911 = vadd.f32 %v1790, %v1890
        %v1912 = vadd.f32 %v1791, %v1894
        %v1913 = vadd.f32 %v1792, %v1896
        %v1914 = vadd.f32 %v1793, %v1900
        %v1915 = vadd.f32 %v1794, %v1902
        %v1916 = vadd.f32 %v1795, %v1906
        %v1917 = vadd.f32 %v1796, %v1908
        %v1918 = vld [vmem:[%s828 + $0x3] sm:$0xff]
        %v1919 = vld [vmem:[%s828 + $0xb] sm:$0xff]
        %v1920 = vld [vmem:[%s828 + $0x13] sm:$0xff]
        %v1921 = vld [vmem:[%s828 + $0x1b] sm:$0xf]
        %v1922 = vld [vmem:[%s1 + $0x2c0] sm:$0xff]
        %v1923 = vld [vmem:[%s1 + $0x2c8] sm:$0xff]
        %v1924 = vld [vmem:[%s1 + $0x2d0] sm:$0xff]
        %v1925 = vld [vmem:[%s1 + $0x2d8] sm:$0xff]
        %v1926 = vld [vmem:[%s1 + $0x2e0] sm:$0xff]
        %v1927 = vld [vmem:[%s1 + $0x2e8] sm:$0xff]
        %v1928 = vld [vmem:[%s1 + $0x2f0] sm:$0xff]
        %v1929 = vld [vmem:[%s1 + $0x2f8] sm:$0xff]
        %v1931 = vsel %vm625, %v1918, 0
        %v1934 = vsel %vm625, %v1919, 0
        %v1937 = vsel %vm625, %v1920, 0
        %v1940 = vsel %vm625, %v1921, 0
        %1942 = vmatprep.subr.mxu0 %v1923
        %1943 = vmatpush1.msra.mxu0 %v1922
        %1944 = vmatprep.subr.mxu0 %v1925
        %1945 = vmatpush1.msra.mxu0 %v1924
        %1946 = vmatprep.subr.mxu0 %v1927
        %1947 = vmatpush1.msra.mxu0 %v1926
        %1948 = vmatprep.subr.mxu0 %v1929
        %1949 = vmatpush1.msra.mxu0 %v1928
        %1950 = vmatprep.subr.mxu0 0.0
        %1951 = vmatpush1.msra.mxu0 0.0
        %1952 = vmatprep.subr.mxu0 0.0
        %1953 = vmatpush1.msra.mxu0 0.0
        %1954 = vmatprep.subr.mxu0 0.0
        %1955 = vmatpush1.msra.mxu0 0.0
        %1956 = vmatprep.subr.mxu0 0.0
        %1957 = vmatpush1.msra.mxu0 0.0
        %1958 = vmatprep.subr.mxu0 0.0
        %1959 = vmatpush1.msra.mxu0 0.0
        %1960 = vmatprep.subr.mxu0 0.0
        %1961 = vmatpush1.msra.mxu0 0.0
        %1962 = vmatprep.subr.mxu0 0.0
        %1963 = vmatpush1.msra.mxu0 0.0
        %1964 = vmatprep.subr.mxu0 0.0
        %1965 = vmatpush1.msra.mxu0 0.0
        %1966 = vmatprep.subr.mxu0 0.0
        %1967 = vmatpush1.msra.mxu0 0.0
        %1968 = vmatprep.subr.mxu0 0.0
        %1969 = vmatpush1.msra.mxu0 0.0
        %1970 = vmatprep.subr.mxu0 0.0
        %1971 = vmatpush1.msra.mxu0 0.0
        %1972 = vmatprep.subr.mxu0 0.0
        %1973 = vmatpush1.msra.mxu0 0.0
        %1974 = vmatprep.subr.mxu0 0.0
        %1975 = vmatpush1.msra.mxu0 0.0
        %1976 = vmatprep.subr.mxu0 0.0
        %1977 = vmatpush1.msra.mxu0 0.0
        %1978 = vmatprep.subr.mxu0 0.0
        %1979 = vmatpush1.msra.mxu0 0.0
        %1980 = vmatprep.subr.mxu0 0.0
        %1981 = vmatpush1.msra.mxu0 0.0
        %1982 = vmatprep.subr.mxu0 0.0
        %1983 = vmatpush1.msra.mxu0 0.0
        %1984 = vmatprep.subr.mxu0 0.0
        %1985 = vmatpush1.msra.mxu0 0.0
        %1986 = vmatprep.subr.mxu0 0.0
        %1987 = vmatpush1.msra.mxu0 0.0
        %1988 = vmatprep.subr.mxu0 0.0
        %1989 = vmatpush1.msra.mxu0 0.0
        %1990 = vmatprep.subr.mxu0 0.0
        %1991 = vmatpush1.msra.mxu0 0.0
        %1992 = vmatprep.subr.mxu0 0.0
        %1993 = vmatpush1.msra.mxu0 0.0
        %1994 = vmatprep.subr.mxu0 0.0
        %1995 = vmatpush1.msra.mxu0 0.0
        %1996 = vmatprep.subr.mxu0 0.0
        %1997 = vmatpush1.msra.mxu0 0.0
        %1998 = vmatprep.subr.mxu0 0.0
        %1999 = vmatpush1.msra.mxu0 0.0
        %2000 = vmatprep.subr.mxu0 0.0
        %2001 = vmatpush1.msra.mxu0 0.0
        %2002 = vmatprep.subr.mxu0 0.0
        %2003 = vmatpush1.msra.mxu0 0.0
        %2004 = vmatprep.subr.mxu0 0.0
        %2005 = vmatpush1.msra.mxu0 0.0
        %2006 = vmatprep.mubr.f32.mxu0 0.0
        %2007 = vmatmul.mubr.f32.gmra.mrb[0].mxu0 %v1931
        %v2008 = vpop.f32.mrb[0].mxu0
        %v2009 = vadd.f32 0.0, %v2008
        %v2010 = vpop.f32.mrb[0].mxu0
        %v2011 = vadd.f32 0.0, %v2010
        %2012 = vmatprep.mubr.f32.mxu0 0.0
        %2013 = vmatmul.mubr.f32.gmra.mrb[0].mxu0 %v1934
        %v2014 = vpop.f32.mrb[0].mxu0
        %v2015 = vadd.f32 0.0, %v2014
        %v2016 = vpop.f32.mrb[0].mxu0
        %v2017 = vadd.f32 0.0, %v2016
        %2018 = vmatprep.mubr.f32.mxu0 0.0
        %2019 = vmatmul.mubr.f32.gmra.mrb[0].mxu0 %v1937
        %v2020 = vpop.f32.mrb[0].mxu0
        %v2021 = vadd.f32 0.0, %v2020
        %v2022 = vpop.f32.mrb[0].mxu0
        %v2023 = vadd.f32 0.0, %v2022
        %2024 = vmatprep.mubr.f32.mxu0 0.0
        %2025 = vmatmul.mubr.f32.gmra.mrb[0].mxu0 %v1940
        %v2026 = vpop.f32.mrb[0].mxu0
        %v2027 = vadd.f32 0.0, %v2026
        %v2028 = vpop.f32.mrb[0].mxu0
        %v2029 = vadd.f32 0.0, %v2028
        %2030 = vdwg.mxu0
        %v2031 = vadd.f32 %v1910, %v2009
        %v2032 = vadd.f32 %v1911, %v2011
        %v2033 = vadd.f32 %v1912, %v2015
        %v2034 = vadd.f32 %v1913, %v2017
        %v2035 = vadd.f32 %v1914, %v2021
        %v2036 = vadd.f32 %v1915, %v2023
        %v2037 = vadd.f32 %v1916, %v2027
        %v2038 = vadd.f32 %v1917, %v2029
        %v2039 = vld [vmem:[%s599 + $0x4] sm:$0xff]
        %v2040 = vld [vmem:[%s599 + $0xc] sm:$0xff]
        %v2041 = vld [vmem:[%s599 + $0x14] sm:$0xff]
        %v2042 = vld [vmem:[%s599 + $0x1c] sm:$0xf]
        %v2043 = vld [vmem:[%s1 + $0x300] sm:$0xff]
        %v2044 = vld [vmem:[%s1 + $0x308] sm:$0xff]
        %v2045 = vld [vmem:[%s1 + $0x310] sm:$0xff]
        %v2046 = vld [vmem:[%s1 + $0x318] sm:$0xff]
        %v2047 = vld [vmem:[%s1 + $0x320] sm:$0xff]
        %v2048 = vld [vmem:[%s1 + $0x328] sm:$0xff]
        %v2049 = vld [vmem:[%s1 + $0x330] sm:$0xff]
        %v2050 = vld [vmem:[%s1 + $0x338] sm:$0xff]
        %v2052 = vsel %vm625, %v2039, 0
        %v2055 = vsel %vm625, %v2040, 0
        %v2058 = vsel %vm625, %v2041, 0
        %v2061 = vsel %vm625, %v2042, 0
        %2063 = vmatprep.subr.mxu0 %v2044
        %2064 = vmatpush1.msra.mxu0 %v2043
        %2065 = vmatprep.subr.mxu0 %v2046
        %2066 = vmatpush1.msra.mxu0 %v2045
        %2067 = vmatprep.subr.mxu0 %v2048
        %2068 = vmatpush1.msra.mxu0 %v2047
        %2069 = vmatprep.subr.mxu0 %v2050
        %2070 = vmatpush1.msra.mxu0 %v2049
        %2071 = vmatprep.subr.mxu0 0.0
        %2072 = vmatpush1.msra.mxu0 0.0
        %2073 = vmatprep.subr.mxu0 0.0
        %2074 = vmatpush1.msra.mxu0 0.0
        %2075 = vmatprep.subr.mxu0 0.0
        %2076 = vmatpush1.msra.mxu0 0.0
        %2077 = vmatprep.subr.mxu0 0.0
        %2078 = vmatpush1.msra.mxu0 0.0
        %2079 = vmatprep.subr.mxu0 0.0
        %2080 = vmatpush1.msra.mxu0 0.0
        %2081 = vmatprep.subr.mxu0 0.0
        %2082 = vmatpush1.msra.mxu0 0.0
        %2083 = vmatprep.subr.mxu0 0.0
        %2084 = vmatpush1.msra.mxu0 0.0
        %2085 = vmatprep.subr.mxu0 0.0
        %2086 = vmatpush1.msra.mxu0 0.0
        %2087 = vmatprep.subr.mxu0 0.0
        %2088 = vmatpush1.msra.mxu0 0.0
        %2089 = vmatprep.subr.mxu0 0.0
        %2090 = vmatpush1.msra.mxu0 0.0
        %2091 = vmatprep.subr.mxu0 0.0
        %2092 = vmatpush1.msra.mxu0 0.0
        %2093 = vmatprep.subr.mxu0 0.0
        %2094 = vmatpush1.msra.mxu0 0.0
        %2095 = vmatprep.subr.mxu0 0.0
        %2096 = vmatpush1.msra.mxu0 0.0
        %2097 = vmatprep.subr.mxu0 0.0
        %2098 = vmatpush1.msra.mxu0 0.0
        %2099 = vmatprep.subr.mxu0 0.0
        %2100 = vmatpush1.msra.mxu0 0.0
        %2101 = vmatprep.subr.mxu0 0.0
        %2102 = vmatpush1.msra.mxu0 0.0
        %2103 = vmatprep.subr.mxu0 0.0
        %2104 = vmatpush1.msra.mxu0 0.0
        %2105 = vmatprep.subr.mxu0 0.0
        %2106 = vmatpush1.msra.mxu0 0.0
        %2107 = vmatprep.subr.mxu0 0.0
        %2108 = vmatpush1.msra.mxu0 0.0
        %2109 = vmatprep.subr.mxu0 0.0
        %2110 = vmatpush1.msra.mxu0 0.0
        %2111 = vmatprep.subr.mxu0 0.0
        %2112 = vmatpush1.msra.mxu0 0.0
        %2113 = vmatprep.subr.mxu0 0.0
        %2114 = vmatpush1.msra.mxu0 0.0
        %2115 = vmatprep.subr.mxu0 0.0
        %2116 = vmatpush1.msra.mxu0 0.0
        %2117 = vmatprep.subr.mxu0 0.0
        %2118 = vmatpush1.msra.mxu0 0.0
        %2119 = vmatprep.subr.mxu0 0.0
        %2120 = vmatpush1.msra.mxu0 0.0
        %2121 = vmatprep.subr.mxu0 0.0
        %2122 = vmatpush1.msra.mxu0 0.0
        %2123 = vmatprep.subr.mxu0 0.0
        %2124 = vmatpush1.msra.mxu0 0.0
        %2125 = vmatprep.subr.mxu0 0.0
        %2126 = vmatpush1.msra.mxu0 0.0
        %2127 = vmatprep.mubr.f32.mxu0 0.0
        %2128 = vmatmul.mubr.f32.gmra.mrb[0].mxu0 %v2052
        %v2129 = vpop.f32.mrb[0].mxu0
        %v2130 = vadd.f32 0.0, %v2129
        %v2131 = vpop.f32.mrb[0].mxu0
        %v2132 = vadd.f32 0.0, %v2131
        %2133 = vmatprep.mubr.f32.mxu0 0.0
        %2134 = vmatmul.mubr.f32.gmra.mrb[0].mxu0 %v2055
        %v2135 = vpop.f32.mrb[0].mxu0
        %v2136 = vadd.f32 0.0, %v2135
        %v2137 = vpop.f32.mrb[0].mxu0
        %v2138 = vadd.f32 0.0, %v2137
        %2139 = vmatprep.mubr.f32.mxu0 0.0
        %2140 = vmatmul.mubr.f32.gmra.mrb[0].mxu0 %v2058
        %v2141 = vpop.f32.mrb[0].mxu0
        %v2142 = vadd.f32 0.0, %v2141
        %v2143 = vpop.f32.mrb[0].mxu0
        %v2144 = vadd.f32 0.0, %v2143
        %2145 = vmatprep.mubr.f32.mxu0 0.0
        %2146 = vmatmul.mubr.f32.gmra.mrb[0].mxu0 %v2061
        %v2147 = vpop.f32.mrb[0].mxu0
        %v2148 = vadd.f32 0.0, %v2147
        %v2149 = vpop.f32.mrb[0].mxu0
        %v2150 = vadd.f32 0.0, %v2149
        %2151 = vdwg.mxu0
        %v2152 = vadd.f32 %v2031, %v2130
        %v2153 = vadd.f32 %v2032, %v2132
        %v2154 = vadd.f32 %v2033, %v2136
        %v2155 = vadd.f32 %v2034, %v2138
        %v2156 = vadd.f32 %v2035, %v2142
        %v2157 = vadd.f32 %v2036, %v2144
        %v2158 = vadd.f32 %v2037, %v2148
        %v2159 = vadd.f32 %v2038, %v2150
        %v2160 = vld [vmem:[%s612 + $0x4] sm:$0xff]
        %v2161 = vld [vmem:[%s612 + $0xc] sm:$0xff]
        %v2162 = vld [vmem:[%s612 + $0x14] sm:$0xff]
        %v2163 = vld [vmem:[%s612 + $0x1c] sm:$0xf]
        %v2164 = vld [vmem:[%s1 + $0x340] sm:$0xff]
        %v2165 = vld [vmem:[%s1 + $0x348] sm:$0xff]
        %v2166 = vld [vmem:[%s1 + $0x350] sm:$0xff]
        %v2167 = vld [vmem:[%s1 + $0x358] sm:$0xff]
        %v2168 = vld [vmem:[%s1 + $0x360] sm:$0xff]
        %v2169 = vld [vmem:[%s1 + $0x368] sm:$0xff]
        %v2170 = vld [vmem:[%s1 + $0x370] sm:$0xff]
        %v2171 = vld [vmem:[%s1 + $0x378] sm:$0xff]
        %v2173 = vsel %vm625, %v2160, 0
        %v2176 = vsel %vm625, %v2161, 0
        %v2179 = vsel %vm625, %v2162, 0
        %v2182 = vsel %vm625, %v2163, 0
        %2184 = vmatprep.subr.mxu0 %v2165
        %2185 = vmatpush1.msra.mxu0 %v2164
        %2186 = vmatprep.subr.mxu0 %v2167
        %2187 = vmatpush1.msra.mxu0 %v2166
        %2188 = vmatprep.subr.mxu0 %v2169
        %2189 = vmatpush1.msra.mxu0 %v2168
        %2190 = vmatprep.subr.mxu0 %v2171
        %2191 = vmatpush1.msra.mxu0 %v2170
        %2192 = vmatprep.subr.mxu0 0.0
        %2193 = vmatpush1.msra.mxu0 0.0
        %2194 = vmatprep.subr.mxu0 0.0
        %2195 = vmatpush1.msra.mxu0 0.0
        %2196 = vmatprep.subr.mxu0 0.0
        %2197 = vmatpush1.msra.mxu0 0.0
        %2198 = vmatprep.subr.mxu0 0.0
        %2199 = vmatpush1.msra.mxu0 0.0
        %2200 = vmatprep.subr.mxu0 0.0
        %2201 = vmatpush1.msra.mxu0 0.0
        %2202 = vmatprep.subr.mxu0 0.0
        %2203 = vmatpush1.msra.mxu0 0.0
        %2204 = vmatprep.subr.mxu0 0.0
        %2205 = vmatpush1.msra.mxu0 0.0
        %2206 = vmatprep.subr.mxu0 0.0
        %2207 = vmatpush1.msra.mxu0 0.0
        %2208 = vmatprep.subr.mxu0 0.0
        %2209 = vmatpush1.msra.mxu0 0.0
        %2210 = vmatprep.subr.mxu0 0.0
        %2211 = vmatpush1.msra.mxu0 0.0
        %2212 = vmatprep.subr.mxu0 0.0
        %2213 = vmatpush1.msra.mxu0 0.0
        %2214 = vmatprep.subr.mxu0 0.0
        %2215 = vmatpush1.msra.mxu0 0.0
        %2216 = vmatprep.subr.mxu0 0.0
        %2217 = vmatpush1.msra.mxu0 0.0
        %2218 = vmatprep.subr.mxu0 0.0
        %2219 = vmatpush1.msra.mxu0 0.0
        %2220 = vmatprep.subr.mxu0 0.0
        %2221 = vmatpush1.msra.mxu0 0.0
        %2222 = vmatprep.subr.mxu0 0.0
        %2223 = vmatpush1.msra.mxu0 0.0
        %2224 = vmatprep.subr.mxu0 0.0
        %2225 = vmatpush1.msra.mxu0 0.0
        %2226 = vmatprep.subr.mxu0 0.0
        %2227 = vmatpush1.msra.mxu0 0.0
        %2228 = vmatprep.subr.mxu0 0.0
        %2229 = vmatpush1.msra.mxu0 0.0
        %2230 = vmatprep.subr.mxu0 0.0
        %2231 = vmatpush1.msra.mxu0 0.0
        %2232 = vmatprep.subr.mxu0 0.0
        %2233 = vmatpush1.msra.mxu0 0.0
        %2234 = vmatprep.subr.mxu0 0.0
        %2235 = vmatpush1.msra.mxu0 0.0
        %2236 = vmatprep.subr.mxu0 0.0
        %2237 = vmatpush1.msra.mxu0 0.0
        %2238 = vmatprep.subr.mxu0 0.0
        %2239 = vmatpush1.msra.mxu0 0.0
        %2240 = vmatprep.subr.mxu0 0.0
        %2241 = vmatpush1.msra.mxu0 0.0
        %2242 = vmatprep.subr.mxu0 0.0
        %2243 = vmatpush1.msra.mxu0 0.0
        %2244 = vmatprep.subr.mxu0 0.0
        %2245 = vmatpush1.msra.mxu0 0.0
        %2246 = vmatprep.subr.mxu0 0.0
        %2247 = vmatpush1.msra.mxu0 0.0
        %2248 = vmatprep.mubr.f32.mxu0 0.0
        %2249 = vmatmul.mubr.f32.gmra.mrb[0].mxu0 %v2173
        %v2250 = vpop.f32.mrb[0].mxu0
        %v2251 = vadd.f32 0.0, %v2250
        %v2252 = vpop.f32.mrb[0].mxu0
        %v2253 = vadd.f32 0.0, %v2252
        %2254 = vmatprep.mubr.f32.mxu0 0.0
        %2255 = vmatmul.mubr.f32.gmra.mrb[0].mxu0 %v2176
        %v2256 = vpop.f32.mrb[0].mxu0
        %v2257 = vadd.f32 0.0, %v2256
        %v2258 = vpop.f32.mrb[0].mxu0
        %v2259 = vadd.f32 0.0, %v2258
        %2260 = vmatprep.mubr.f32.mxu0 0.0
        %2261 = vmatmul.mubr.f32.gmra.mrb[0].mxu0 %v2179
        %v2262 = vpop.f32.mrb[0].mxu0
        %v2263 = vadd.f32 0.0, %v2262
        %v2264 = vpop.f32.mrb[0].mxu0
        %v2265 = vadd.f32 0.0, %v2264
        %2266 = vmatprep.mubr.f32.mxu0 0.0
        %2267 = vmatmul.mubr.f32.gmra.mrb[0].mxu0 %v2182
        %v2268 = vpop.f32.mrb[0].mxu0
        %v2269 = vadd.f32 0.0, %v2268
        %v2270 = vpop.f32.mrb[0].mxu0
        %v2271 = vadd.f32 0.0, %v2270
        %2272 = vdwg.mxu0
        %v2273 = vadd.f32 %v2152, %v2251
        %v2274 = vadd.f32 %v2153, %v2253
        %v2275 = vadd.f32 %v2154, %v2257
        %v2276 = vadd.f32 %v2155, %v2259
        %v2277 = vadd.f32 %v2156, %v2263
        %v2278 = vadd.f32 %v2157, %v2265
        %v2279 = vadd.f32 %v2158, %v2269
        %v2280 = vadd.f32 %v2159, %v2271
        %v2281 = vld [vmem:[%s828 + $0x4] sm:$0xff]
        %v2282 = vld [vmem:[%s828 + $0xc] sm:$0xff]
        %v2283 = vld [vmem:[%s828 + $0x14] sm:$0xff]
        %v2284 = vld [vmem:[%s828 + $0x1c] sm:$0xf]
        %v2285 = vld [vmem:[%s1 + $0x380] sm:$0xff]
        %v2286 = vld [vmem:[%s1 + $0x388] sm:$0xff]
        %v2287 = vld [vmem:[%s1 + $0x390] sm:$0xff]
        %v2288 = vld [vmem:[%s1 + $0x398] sm:$0xff]
        %v2289 = vld [vmem:[%s1 + $0x3a0] sm:$0xff]
        %v2290 = vld [vmem:[%s1 + $0x3a8] sm:$0xff]
        %v2291 = vld [vmem:[%s1 + $0x3b0] sm:$0xff]
        %v2292 = vld [vmem:[%s1 + $0x3b8] sm:$0xff]
        %v2294 = vsel %vm625, %v2281, 0
        %v2297 = vsel %vm625, %v2282, 0
        %v2300 = vsel %vm625, %v2283, 0
        %v2303 = vsel %vm625, %v2284, 0
        %2305 = vmatprep.subr.mxu0 %v2286
        %2306 = vmatpush1.msra.mxu0 %v2285
        %2307 = vmatprep.subr.mxu0 %v2288
        %2308 = vmatpush1.msra.mxu0 %v2287
        %2309 = vmatprep.subr.mxu0 %v2290
        %2310 = vmatpush1.msra.mxu0 %v2289
        %2311 = vmatprep.subr.mxu0 %v2292
        %2312 = vmatpush1.msra.mxu0 %v2291
        %2313 = vmatprep.subr.mxu0 0.0
        %2314 = vmatpush1.msra.mxu0 0.0
        %2315 = vmatprep.subr.mxu0 0.0
        %2316 = vmatpush1.msra.mxu0 0.0
        %2317 = vmatprep.subr.mxu0 0.0
        %2318 = vmatpush1.msra.mxu0 0.0
        %2319 = vmatprep.subr.mxu0 0.0
        %2320 = vmatpush1.msra.mxu0 0.0
        %2321 = vmatprep.subr.mxu0 0.0
        %2322 = vmatpush1.msra.mxu0 0.0
        %2323 = vmatprep.subr.mxu0 0.0
        %2324 = vmatpush1.msra.mxu0 0.0
        %2325 = vmatprep.subr.mxu0 0.0
        %2326 = vmatpush1.msra.mxu0 0.0
        %2327 = vmatprep.subr.mxu0 0.0
        %2328 = vmatpush1.msra.mxu0 0.0
        %2329 = vmatprep.subr.mxu0 0.0
        %2330 = vmatpush1.msra.mxu0 0.0
        %2331 = vmatprep.subr.mxu0 0.0
        %2332 = vmatpush1.msra.mxu0 0.0
        %2333 = vmatprep.subr.mxu0 0.0
        %2334 = vmatpush1.msra.mxu0 0.0
        %2335 = vmatprep.subr.mxu0 0.0
        %2336 = vmatpush1.msra.mxu0 0.0
        %2337 = vmatprep.subr.mxu0 0.0
        %2338 = vmatpush1.msra.mxu0 0.0
        %2339 = vmatprep.subr.mxu0 0.0
        %2340 = vmatpush1.msra.mxu0 0.0
        %2341 = vmatprep.subr.mxu0 0.0
        %2342 = vmatpush1.msra.mxu0 0.0
        %2343 = vmatprep.subr.mxu0 0.0
        %2344 = vmatpush1.msra.mxu0 0.0
        %2345 = vmatprep.subr.mxu0 0.0
        %2346 = vmatpush1.msra.mxu0 0.0
        %2347 = vmatprep.subr.mxu0 0.0
        %2348 = vmatpush1.msra.mxu0 0.0
        %2349 = vmatprep.subr.mxu0 0.0
        %2350 = vmatpush1.msra.mxu0 0.0
        %2351 = vmatprep.subr.mxu0 0.0
        %2352 = vmatpush1.msra.mxu0 0.0
        %2353 = vmatprep.subr.mxu0 0.0
        %2354 = vmatpush1.msra.mxu0 0.0
        %2355 = vmatprep.subr.mxu0 0.0
        %2356 = vmatpush1.msra.mxu0 0.0
        %2357 = vmatprep.subr.mxu0 0.0
        %2358 = vmatpush1.msra.mxu0 0.0
        %2359 = vmatprep.subr.mxu0 0.0
        %2360 = vmatpush1.msra.mxu0 0.0
        %2361 = vmatprep.subr.mxu0 0.0
        %2362 = vmatpush1.msra.mxu0 0.0
        %2363 = vmatprep.subr.mxu0 0.0
        %2364 = vmatpush1.msra.mxu0 0.0
        %2365 = vmatprep.subr.mxu0 0.0
        %2366 = vmatpush1.msra.mxu0 0.0
        %2367 = vmatprep.subr.mxu0 0.0
        %2368 = vmatpush1.msra.mxu0 0.0
        %2369 = vmatprep.mubr.f32.mxu0 0.0
        %2370 = vmatmul.mubr.f32.gmra.mrb[0].mxu0 %v2294
        %v2371 = vpop.f32.mrb[0].mxu0
        %v2372 = vadd.f32 0.0, %v2371
        %v2373 = vpop.f32.mrb[0].mxu0
        %v2374 = vadd.f32 0.0, %v2373
        %2375 = vmatprep.mubr.f32.mxu0 0.0
        %2376 = vmatmul.mubr.f32.gmra.mrb[0].mxu0 %v2297
        %v2377 = vpop.f32.mrb[0].mxu0
        %v2378 = vadd.f32 0.0, %v2377
        %v2379 = vpop.f32.mrb[0].mxu0
        %v2380 = vadd.f32 0.0, %v2379
        %2381 = vmatprep.mubr.f32.mxu0 0.0
        %2382 = vmatmul.mubr.f32.gmra.mrb[0].mxu0 %v2300
        %v2383 = vpop.f32.mrb[0].mxu0
        %v2384 = vadd.f32 0.0, %v2383
        %v2385 = vpop.f32.mrb[0].mxu0
        %v2386 = vadd.f32 0.0, %v2385
        %2387 = vmatprep.mubr.f32.mxu0 0.0
        %2388 = vmatmul.mubr.f32.gmra.mrb[0].mxu0 %v2303
        %v2389 = vpop.f32.mrb[0].mxu0
        %v2390 = vadd.f32 0.0, %v2389
        %v2391 = vpop.f32.mrb[0].mxu0
        %v2392 = vadd.f32 0.0, %v2391
        %2393 = vdwg.mxu0
        %v2394 = vadd.f32 %v2273, %v2372
        %v2395 = vadd.f32 %v2274, %v2374
        %v2396 = vadd.f32 %v2275, %v2378
        %v2397 = vadd.f32 %v2276, %v2380
        %v2398 = vadd.f32 %v2277, %v2384
        %v2399 = vadd.f32 %v2278, %v2386
        %v2400 = vadd.f32 %v2279, %v2390
        %v2401 = vadd.f32 %v2280, %v2392
        %v2402 = vld [vmem:[%s2] sm:$0x3]
        %v2404 = vlaneseq
        %v2405 = vshrl.u32 %v2404, 7
        %v2406 = vsub.s32 0, %v2405
        %v2407 = vrot.slane %v2402, %v2406
        %v2408 = vlaneseq
        %v2409 = vshrl.u32 %v2408, 7
        %v2410 = vsub.s32 1, %v2409
        %v2411 = vrot.slane %v2402, %v2410
        %v2414 = vadd.f32 %v2394, %v2407
        %v2415 = vadd.f32 %v2395, %v2411
        %v2416 = vadd.f32 %v2396, %v2407
        %v2417 = vadd.f32 %v2397, %v2411
        %v2418 = vadd.f32 %v2398, %v2407
        %v2419 = vadd.f32 %v2399, %v2411
        %v2420 = vadd.f32 %v2400, %v2407
        %v2421 = vadd.f32 %v2401, %v2411
        %v2422 = vmax.f32 %v2414, 0.0
        %v2423 = vmax.f32 %v2415, 0.0
        %v2424 = vmax.f32 %v2416, 0.0
        %v2425 = vmax.f32 %v2417, 0.0
        %v2426 = vmax.f32 %v2418, 0.0
        %v2427 = vmax.f32 %v2419, 0.0
        %v2428 = vmax.f32 %v2420, 0.0
        %v2429 = vmax.f32 %v2421, 0.0
        %v2430 = vld [vmem:[%s5] sm:$0xff]
        %v2431 = vld [vmem:[%s5 + $0x8] sm:$0x3f]
        %vm2432 = vcmask 228352
        %v2434 = vsel %vm2432, %v2430, 0
        %v2437 = vsel %vm2432, %v2431, 0
        %vm2439 = vcmask 1043456
        %v2441 = vsel %vm2439, %v2428, 0
        %v2444 = vsel %vm2439, %v2429, 0
        %2446 = vmatprep.subr.mxu0 %v2423
        %2447 = vmatpush1.msra.mxu0 %v2422
        %2448 = vmatprep.subr.mxu0 %v2425
        %2449 = vmatpush1.msra.mxu0 %v2424
        %2450 = vmatprep.subr.mxu0 %v2427
        %2451 = vmatpush1.msra.mxu0 %v2426
        %2452 = vmatprep.subr.mxu0 %v2444
        %2453 = vmatpush1.msra.mxu0 %v2441
        %2454 = vmatprep.subr.mxu0 0.0
        %2455 = vmatpush1.msra.mxu0 0.0
        %2456 = vmatprep.subr.mxu0 0.0
        %2457 = vmatpush1.msra.mxu0 0.0
        %2458 = vmatprep.subr.mxu0 0.0
        %2459 = vmatpush1.msra.mxu0 0.0
        %2460 = vmatprep.subr.mxu0 0.0
        %2461 = vmatpush1.msra.mxu0 0.0
        %2462 = vmatprep.subr.mxu0 0.0
        %2463 = vmatpush1.msra.mxu0 0.0
        %2464 = vmatprep.subr.mxu0 0.0
        %2465 = vmatpush1.msra.mxu0 0.0
        %2466 = vmatprep.subr.mxu0 0.0
        %2467 = vmatpush1.msra.mxu0 0.0
        %2468 = vmatprep.subr.mxu0 0.0
        %2469 = vmatpush1.msra.mxu0 0.0
        %2470 = vmatprep.subr.mxu0 0.0
        %2471 = vmatpush1.msra.mxu0 0.0
        %2472 = vmatprep.subr.mxu0 0.0
        %2473 = vmatpush1.msra.mxu0 0.0
        %2474 = vmatprep.subr.mxu0 0.0
        %2475 = vmatpush1.msra.mxu0 0.0
        %2476 = vmatprep.subr.mxu0 0.0
        %2477 = vmatpush1.msra.mxu0 0.0
        %2478 = vmatprep.subr.mxu0 0.0
        %2479 = vmatpush1.msra.mxu0 0.0
        %2480 = vmatprep.subr.mxu0 0.0
        %2481 = vmatpush1.msra.mxu0 0.0
        %2482 = vmatprep.subr.mxu0 0.0
        %2483 = vmatpush1.msra.mxu0 0.0
        %2484 = vmatprep.subr.mxu0 0.0
        %2485 = vmatpush1.msra.mxu0 0.0
        %2486 = vmatprep.subr.mxu0 0.0
        %2487 = vmatpush1.msra.mxu0 0.0
        %2488 = vmatprep.subr.mxu0 0.0
        %2489 = vmatpush1.msra.mxu0 0.0
        %2490 = vmatprep.subr.mxu0 0.0
        %2491 = vmatpush1.msra.mxu0 0.0
        %2492 = vmatprep.subr.mxu0 0.0
        %2493 = vmatpush1.msra.mxu0 0.0
        %2494 = vmatprep.subr.mxu0 0.0
        %2495 = vmatpush1.msra.mxu0 0.0
        %2496 = vmatprep.subr.mxu0 0.0
        %2497 = vmatpush1.msra.mxu0 0.0
        %2498 = vmatprep.subr.mxu0 0.0
        %2499 = vmatpush1.msra.mxu0 0.0
        %2500 = vmatprep.subr.mxu0 0.0
        %2501 = vmatpush1.msra.mxu0 0.0
        %2502 = vmatprep.subr.mxu0 0.0
        %2503 = vmatpush1.msra.mxu0 0.0
        %2504 = vmatprep.subr.mxu0 0.0
        %2505 = vmatpush1.msra.mxu0 0.0
        %2506 = vmatprep.subr.mxu0 0.0
        %2507 = vmatpush1.msra.mxu0 0.0
        %2508 = vmatprep.subr.mxu0 0.0
        %2509 = vmatpush1.msra.mxu0 0.0
        %2510 = vmatprep.mubr.f32.mxu0 0.0
        %2511 = vmatmul.mubr.f32.gmra.mrb[0].mxu0 %v2434
        %v2512 = vpop.f32.mrb[0].mxu0
        %v2513 = vadd.f32 0.0, %v2512
        %v2514 = vpop.f32.mrb[0].mxu0
        %v2515 = vadd.f32 0.0, %v2514
        %2516 = vmatprep.mubr.f32.mxu0 0.0
        %2517 = vmatmul.mubr.f32.gmra.mrb[0].mxu0 %v2437
        %v2518 = vpop.f32.mrb[0].mxu0
        %v2519 = vadd.f32 0.0, %v2518
        %v2520 = vpop.f32.mrb[0].mxu0
        %v2521 = vadd.f32 0.0, %v2520
        %2522 = vdwg.mxu0
        %v2523 = vld [vmem:[%s6] sm:$0xff]
        %v2524 = vld [vmem:[%s6 + $0x8] sm:$0x3f]
        %v2526 = vsel %vm2432, %v2523, 0
        %v2529 = vsel %vm2432, %v2524, 0
        %2531 = vmatprep.subr.mxu0 %v2423
        %2532 = vmatpush1.msra.mxu0 %v2422
        %2533 = vmatprep.subr.mxu0 %v2425
        %2534 = vmatpush1.msra.mxu0 %v2424
        %2535 = vmatprep.subr.mxu0 %v2427
        %2536 = vmatpush1.msra.mxu0 %v2426
        %2537 = vmatprep.subr.mxu0 %v2444
        %2538 = vmatpush1.msra.mxu0 %v2441
        %2539 = vmatprep.subr.mxu0 0.0
        %2540 = vmatpush1.msra.mxu0 0.0
        %2541 = vmatprep.subr.mxu0 0.0
        %2542 = vmatpush1.msra.mxu0 0.0
        %2543 = vmatprep.subr.mxu0 0.0
        %2544 = vmatpush1.msra.mxu0 0.0
        %2545 = vmatprep.subr.mxu0 0.0
        %2546 = vmatpush1.msra.mxu0 0.0
        %2547 = vmatprep.subr.mxu0 0.0
        %2548 = vmatpush1.msra.mxu0 0.0
        %2549 = vmatprep.subr.mxu0 0.0
        %2550 = vmatpush1.msra.mxu0 0.0
        %2551 = vmatprep.subr.mxu0 0.0
        %2552 = vmatpush1.msra.mxu0 0.0
        %2553 = vmatprep.subr.mxu0 0.0
        %2554 = vmatpush1.msra.mxu0 0.0
        %2555 = vmatprep.subr.mxu0 0.0
        %2556 = vmatpush1.msra.mxu0 0.0
        %2557 = vmatprep.subr.mxu0 0.0
        %2558 = vmatpush1.msra.mxu0 0.0
        %2559 = vmatprep.subr.mxu0 0.0
        %2560 = vmatpush1.msra.mxu0 0.0
        %2561 = vmatprep.subr.mxu0 0.0
        %2562 = vmatpush1.msra.mxu0 0.0
        %2563 = vmatprep.subr.mxu0 0.0
        %2564 = vmatpush1.msra.mxu0 0.0
        %2565 = vmatprep.subr.mxu0 0.0
        %2566 = vmatpush1.msra.mxu0 0.0
        %2567 = vmatprep.subr.mxu0 0.0
        %2568 = vmatpush1.msra.mxu0 0.0
        %2569 = vmatprep.subr.mxu0 0.0
        %2570 = vmatpush1.msra.mxu0 0.0
        %2571 = vmatprep.subr.mxu0 0.0
        %2572 = vmatpush1.msra.mxu0 0.0
        %2573 = vmatprep.subr.mxu0 0.0
        %2574 = vmatpush1.msra.mxu0 0.0
        %2575 = vmatprep.subr.mxu0 0.0
        %2576 = vmatpush1.msra.mxu0 0.0
        %2577 = vmatprep.subr.mxu0 0.0
        %2578 = vmatpush1.msra.mxu0 0.0
        %2579 = vmatprep.subr.mxu0 0.0
        %2580 = vmatpush1.msra.mxu0 0.0
        %2581 = vmatprep.subr.mxu0 0.0
        %2582 = vmatpush1.msra.mxu0 0.0
        %2583 = vmatprep.subr.mxu0 0.0
        %2584 = vmatpush1.msra.mxu0 0.0
        %2585 = vmatprep.subr.mxu0 0.0
        %2586 = vmatpush1.msra.mxu0 0.0
        %2587 = vmatprep.subr.mxu0 0.0
        %2588 = vmatpush1.msra.mxu0 0.0
        %2589 = vmatprep.subr.mxu0 0.0
        %2590 = vmatpush1.msra.mxu0 0.0
        %2591 = vmatprep.subr.mxu0 0.0
        %2592 = vmatpush1.msra.mxu0 0.0
        %2593 = vmatprep.subr.mxu0 0.0
        %2594 = vmatpush1.msra.mxu0 0.0
        %2595 = vmatprep.mubr.f32.mxu0 0.0
        %2596 = vmatmul.mubr.f32.gmra.mrb[0].mxu0 %v2526
        %v2597 = vpop.f32.mrb[0].mxu0
        %v2598 = vadd.f32 0.0, %v2597
        %v2599 = vpop.f32.mrb[0].mxu0
        %v2600 = vadd.f32 0.0, %v2599
        %2601 = vmatprep.mubr.f32.mxu0 0.0
        %2602 = vmatmul.mubr.f32.gmra.mrb[0].mxu0 %v2529
        %v2603 = vpop.f32.mrb[0].mxu0
        %v2604 = vadd.f32 0.0, %v2603
        %v2605 = vpop.f32.mrb[0].mxu0
        %v2606 = vadd.f32 0.0, %v2605
        %2607 = vdwg.mxu0
        %v2608 = vmax.f32 %v2513, %v2598
        %v2609 = vmax.f32 %v2515, %v2600
        %v2610 = vmax.f32 %v2519, %v2604
        %v2611 = vmax.f32 %v2521, %v2606
        %v2612 = vld [vmem:[%s7] sm:$0xff]
        %v2613 = vld [vmem:[%s7 + $0x8] sm:$0xff]
        %v2614 = vld [vmem:[%s7 + $0x10] sm:$0xff]
        %v2615 = vld [vmem:[%s7 + $0x18] sm:$0xff]
        %v2616 = vld [vmem:[%s7 + $0x20] sm:$0xff]
        %v2617 = vld [vmem:[%s7 + $0x28] sm:$0xff]
        %v2618 = vld [vmem:[%s7 + $0x30] sm:$0xff]
        %v2619 = vld [vmem:[%s7 + $0x38] sm:$0xff]
        %v2620 = vld [vmem:[%s7 + $0x40] sm:$0xff]
        %v2621 = vld [vmem:[%s7 + $0x48] sm:$0xff]
        %v2622 = vld [vmem:[%s7 + $0x50] sm:$0xff]
        %v2623 = vld [vmem:[%s7 + $0x58] sm:$0xff]
        %v2624 = vld [vmem:[%s7 + $0x60] sm:$0xff]
        %v2625 = vld [vmem:[%s7 + $0x68] sm:$0xff]
        %v2626 = vld [vmem:[%s7 + $0x70] sm:$0xff]
        %v2627 = vld [vmem:[%s7 + $0x78] sm:$0xff]
        %v2628 = vld [vmem:[%s7 + $0x80] sm:$0xff]
        %v2629 = vld [vmem:[%s7 + $0x88] sm:$0xff]
        %v2630 = vld [vmem:[%s7 + $0x90] sm:$0xff]
        %v2631 = vld [vmem:[%s7 + $0x98] sm:$0xff]
        %v2632 = vld [vmem:[%s7 + $0xa0] sm:$0xff]
        %vm2633 = vcmask 326656
        %v2635 = vsel %vm2633, %v2609, 0
        %v2638 = vsel %vm2633, %v2611, 0
        %2640 = vmatprep.subr.mxu0 0.0
        %2641 = vmatpush1.msra.mxu0 %v2612
        %2642 = vmatprep.subr.mxu0 0.0
        %2643 = vmatpush1.msra.mxu0 %v2613
        %2644 = vmatprep.subr.mxu0 0.0
        %2645 = vmatpush1.msra.mxu0 %v2614
        %2646 = vmatprep.subr.mxu0 0.0
        %2647 = vmatpush1.msra.mxu0 %v2615
        %2648 = vmatprep.subr.mxu0 0.0
        %2649 = vmatpush1.msra.mxu0 %v2616
        %2650 = vmatprep.subr.mxu0 0.0
        %2651 = vmatpush1.msra.mxu0 %v2617
        %2652 = vmatprep.subr.mxu0 0.0
        %2653 = vmatpush1.msra.mxu0 %v2618
        %2654 = vmatprep.subr.mxu0 0.0
        %2655 = vmatpush1.msra.mxu0 %v2619
        %2656 = vmatprep.subr.mxu0 0.0
        %2657 = vmatpush1.msra.mxu0 %v2620
        %2658 = vmatprep.subr.mxu0 0.0
        %2659 = vmatpush1.msra.mxu0 %v2621
        %2660 = vmatprep.subr.mxu0 0.0
        %2661 = vmatpush1.msra.mxu0 %v2622
        %2662 = vmatprep.subr.mxu0 0.0
        %2663 = vmatpush1.msra.mxu0 %v2623
        %2664 = vmatprep.subr.mxu0 0.0
        %2665 = vmatpush1.msra.mxu0 %v2624
        %2666 = vmatprep.subr.mxu0 0.0
        %2667 = vmatpush1.msra.mxu0 %v2625
        %2668 = vmatprep.subr.mxu0 0.0
        %2669 = vmatpush1.msra.mxu0 %v2626
        %2670 = vmatprep.subr.mxu0 0.0
        %2671 = vmatpush1.msra.mxu0 %v2627
        %2672 = vmatprep.subr.mxu0 0.0
        %2673 = vmatpush1.msra.mxu0 %v2628
        %2674 = vmatprep.subr.mxu0 0.0
        %2675 = vmatpush1.msra.mxu0 %v2629
        %2676 = vmatprep.subr.mxu0 0.0
        %2677 = vmatpush1.msra.mxu0 %v2630
        %2678 = vmatprep.subr.mxu0 0.0
        %2679 = vmatpush1.msra.mxu0 %v2631
        %2680 = vmatprep.subr.mxu0 0.0
        %2681 = vmatpush1.msra.mxu0 %v2632
        %2682 = vmatprep.subr.mxu0 0.0
        %2683 = vmatpush1.msra.mxu0 0.0
        %2684 = vmatprep.subr.mxu0 0.0
        %2685 = vmatpush1.msra.mxu0 0.0
        %2686 = vmatprep.subr.mxu0 0.0
        %2687 = vmatpush1.msra.mxu0 0.0
        %2688 = vmatprep.subr.mxu0 0.0
        %2689 = vmatpush1.msra.mxu0 0.0
        %2690 = vmatprep.subr.mxu0 0.0
        %2691 = vmatpush1.msra.mxu0 0.0
        %2692 = vmatprep.subr.mxu0 0.0
        %2693 = vmatpush1.msra.mxu0 0.0
        %2694 = vmatprep.subr.mxu0 0.0
        %2695 = vmatpush1.msra.mxu0 0.0
        %2696 = vmatprep.subr.mxu0 0.0
        %2697 = vmatpush1.msra.mxu0 0.0
        %2698 = vmatprep.subr.mxu0 0.0
        %2699 = vmatpush1.msra.mxu0 0.0
        %2700 = vmatprep.subr.mxu0 0.0
        %2701 = vmatpush1.msra.mxu0 0.0
        %2702 = vmatprep.subr.mxu0 0.0
        %2703 = vmatpush1.msra.mxu0 0.0
        %2704 = vmatprep.mubr.f32.mxu0 %v2635
        %2705 = vmatmul.mubr.f32.gmra.mrb[0].mxu0 %v2608
        %v2706 = vpop.f32.mrb[0].mxu0
        %v2707 = vadd.f32 0.0, %v2706
        %v2708 = vpop.f32.mrb[0].mxu0
        %2709 = vmatprep.mubr.f32.mxu0 %v2638
        %2710 = vmatmul.mubr.f32.gmra.mrb[0].mxu0 %v2610
        %v2711 = vpop.f32.mrb[0].mxu0
        %v2712 = vadd.f32 0.0, %v2711
        %v2713 = vpop.f32.mrb[0].mxu0
        %2714 = vdwg.mxu0
        %v2715 = vld [vmem:[%s8] sm:$0xff]
        %v2716 = vld [vmem:[%s8 + $0x8] sm:$0xff]
        %v2717 = vld [vmem:[%s8 + $0x10] sm:$0xff]
        %v2718 = vld [vmem:[%s8 + $0x18] sm:$0xff]
        %v2719 = vld [vmem:[%s8 + $0x20] sm:$0xff]
        %v2720 = vld [vmem:[%s8 + $0x28] sm:$0xff]
        %v2721 = vld [vmem:[%s8 + $0x30] sm:$0xff]
        %v2722 = vld [vmem:[%s8 + $0x38] sm:$0xff]
        %v2723 = vld [vmem:[%s8 + $0x40] sm:$0xff]
        %v2724 = vld [vmem:[%s8 + $0x48] sm:$0xff]
        %v2725 = vld [vmem:[%s8 + $0x50] sm:$0xff]
        %v2726 = vld [vmem:[%s8 + $0x58] sm:$0xff]
        %v2727 = vld [vmem:[%s8 + $0x60] sm:$0xff]
        %v2728 = vld [vmem:[%s8 + $0x68] sm:$0xff]
        %v2729 = vld [vmem:[%s8 + $0x70] sm:$0xff]
        %v2730 = vld [vmem:[%s8 + $0x78] sm:$0xff]
        %v2731 = vld [vmem:[%s8 + $0x80] sm:$0xff]
        %v2732 = vld [vmem:[%s8 + $0x88] sm:$0xff]
        %v2733 = vld [vmem:[%s8 + $0x90] sm:$0xff]
        %v2734 = vld [vmem:[%s8 + $0x98] sm:$0xff]
        %v2735 = vld [vmem:[%s8 + $0xa0] sm:$0xff]
        %2736 = vmatprep.subr.mxu0 0.0
        %2737 = vmatpush1.msra.mxu0 %v2715
        %2738 = vmatprep.subr.mxu0 0.0
        %2739 = vmatpush1.msra.mxu0 %v2716
        %2740 = vmatprep.subr.mxu0 0.0
        %2741 = vmatpush1.msra.mxu0 %v2717
        %2742 = vmatprep.subr.mxu0 0.0
        %2743 = vmatpush1.msra.mxu0 %v2718
        %2744 = vmatprep.subr.mxu0 0.0
        %2745 = vmatpush1.msra.mxu0 %v2719
        %2746 = vmatprep.subr.mxu0 0.0
        %2747 = vmatpush1.msra.mxu0 %v2720
        %2748 = vmatprep.subr.mxu0 0.0
        %2749 = vmatpush1.msra.mxu0 %v2721
        %2750 = vmatprep.subr.mxu0 0.0
        %2751 = vmatpush1.msra.mxu0 %v2722
        %2752 = vmatprep.subr.mxu0 0.0
        %2753 = vmatpush1.msra.mxu0 %v2723
        %2754 = vmatprep.subr.mxu0 0.0
        %2755 = vmatpush1.msra.mxu0 %v2724
        %2756 = vmatprep.subr.mxu0 0.0
        %2757 = vmatpush1.msra.mxu0 %v2725
        %2758 = vmatprep.subr.mxu0 0.0
        %2759 = vmatpush1.msra.mxu0 %v2726
        %2760 = vmatprep.subr.mxu0 0.0
        %2761 = vmatpush1.msra.mxu0 %v2727
        %2762 = vmatprep.subr.mxu0 0.0
        %2763 = vmatpush1.msra.mxu0 %v2728
        %2764 = vmatprep.subr.mxu0 0.0
        %2765 = vmatpush1.msra.mxu0 %v2729
        %2766 = vmatprep.subr.mxu0 0.0
        %2767 = vmatpush1.msra.mxu0 %v2730
        %2768 = vmatprep.subr.mxu0 0.0
        %2769 = vmatpush1.msra.mxu0 %v2731
        %2770 = vmatprep.subr.mxu0 0.0
        %2771 = vmatpush1.msra.mxu0 %v2732
        %2772 = vmatprep.subr.mxu0 0.0
        %2773 = vmatpush1.msra.mxu0 %v2733
        %2774 = vmatprep.subr.mxu0 0.0
        %2775 = vmatpush1.msra.mxu0 %v2734
        %2776 = vmatprep.subr.mxu0 0.0
        %2777 = vmatpush1.msra.mxu0 %v2735
        %2778 = vmatprep.subr.mxu0 0.0
        %2779 = vmatpush1.msra.mxu0 0.0
        %2780 = vmatprep.subr.mxu0 0.0
        %2781 = vmatpush1.msra.mxu0 0.0
        %2782 = vmatprep.subr.mxu0 0.0
        %2783 = vmatpush1.msra.mxu0 0.0
        %2784 = vmatprep.subr.mxu0 0.0
        %2785 = vmatpush1.msra.mxu0 0.0
        %2786 = vmatprep.subr.mxu0 0.0
        %2787 = vmatpush1.msra.mxu0 0.0
        %2788 = vmatprep.subr.mxu0 0.0
        %2789 = vmatpush1.msra.mxu0 0.0
        %2790 = vmatprep.subr.mxu0 0.0
        %2791 = vmatpush1.msra.mxu0 0.0
        %2792 = vmatprep.subr.mxu0 0.0
        %2793 = vmatpush1.msra.mxu0 0.0
        %2794 = vmatprep.subr.mxu0 0.0
        %2795 = vmatpush1.msra.mxu0 0.0
        %2796 = vmatprep.subr.mxu0 0.0
        %2797 = vmatpush1.msra.mxu0 0.0
        %2798 = vmatprep.subr.mxu0 0.0
        %2799 = vmatpush1.msra.mxu0 0.0
        %2800 = vmatprep.mubr.f32.mxu0 %v2635
        %2801 = vmatmul.mubr.f32.gmra.mrb[0].mxu0 %v2608
        %v2802 = vpop.f32.mrb[0].mxu0
        %v2803 = vadd.f32 0.0, %v2802
        %v2804 = vpop.f32.mrb[0].mxu0
        %2805 = vmatprep.mubr.f32.mxu0 %v2638
        %2806 = vmatmul.mubr.f32.gmra.mrb[0].mxu0 %v2610
        %v2807 = vpop.f32.mrb[0].mxu0
        %v2808 = vadd.f32 0.0, %v2807
        %v2809 = vpop.f32.mrb[0].mxu0
        %2810 = vdwg.mxu0
        %v2811 = vmax.f32 %v2707, %v2803
        %v2812 = vmax.f32 %v2712, %v2808
        %v2813 = vld [vmem:[%s3] sm:$0xff]
        %v2814 = vld [vmem:[%s3 + $0x8] sm:$0xff]
        %v2815 = vld [vmem:[%s3 + $0x10] sm:$0xff]
        %v2816 = vld [vmem:[%s3 + $0x18] sm:$0xff]
        %v2817 = vld [vmem:[%s3 + $0x20] sm:$0xff]
        %v2818 = vld [vmem:[%s3 + $0x28] sm:$0xff]
        %v2819 = vld [vmem:[%s3 + $0x30] sm:$0xff]
        %v2820 = vld [vmem:[%s3 + $0x38] sm:$0xff]
        %v2821 = vld [vmem:[%s3 + $0x40] sm:$0xff]
        %v2822 = vld [vmem:[%s3 + $0x48] sm:$0xff]
        %v2823 = vld [vmem:[%s3 + $0x50] sm:$0xf]
        %v2824 = vld [vmem:[%s3 + $0x54] sm:$0xff]
        %v2825 = vld [vmem:[%s3 + $0x5c] sm:$0xff]
        %v2826 = vld [vmem:[%s3 + $0x64] sm:$0xff]
        %v2827 = vld [vmem:[%s3 + $0x6c] sm:$0xff]
        %v2828 = vld [vmem:[%s3 + $0x74] sm:$0xff]
        %v2829 = vld [vmem:[%s3 + $0x7c] sm:$0xff]
        %v2830 = vld [vmem:[%s3 + $0x84] sm:$0xff]
        %v2831 = vld [vmem:[%s3 + $0x8c] sm:$0xff]
        %v2832 = vld [vmem:[%s3 + $0x94] sm:$0xff]
        %v2833 = vld [vmem:[%s3 + $0x9c] sm:$0xff]
        %v2834 = vld [vmem:[%s3 + $0xa4] sm:$0xf]
        %vm2837 = vcmask 1046528
        %v2838 = vrot.slane %v2811, 1
        %v2839 = vrot.slane %v2812, 1
        %v2840 = vsel %vm2837, %v2838, %v2839
        %vm2841 = vcmask 687104
        %v2842 = vsel %vm2841, %v2840, 0
        %v2844 = vsel %vm2841, %v2839, 0
        %v2847 = vsel %vm2439, %v2834, 0
        %2849 = vmatprep.subr.mxu0 0.0
        %2850 = vmatpush1.msra.mxu0 %v2824
        %2851 = vmatprep.subr.mxu0 0.0
        %2852 = vmatpush1.msra.mxu0 %v2825
        %2853 = vmatprep.subr.mxu0 0.0
        %2854 = vmatpush1.msra.mxu0 %v2826
        %2855 = vmatprep.subr.mxu0 0.0
        %2856 = vmatpush1.msra.mxu0 %v2827
        %2857 = vmatprep.subr.mxu0 0.0
        %2858 = vmatpush1.msra.mxu0 %v2828
        %2859 = vmatprep.subr.mxu0 0.0
        %2860 = vmatpush1.msra.mxu0 %v2829
        %2861 = vmatprep.subr.mxu0 0.0
        %2862 = vmatpush1.msra.mxu0 %v2830
        %2863 = vmatprep.subr.mxu0 0.0
        %2864 = vmatpush1.msra.mxu0 %v2831
        %2865 = vmatprep.subr.mxu0 0.0
        %2866 = vmatpush1.msra.mxu0 %v2832
        %2867 = vmatprep.subr.mxu0 0.0
        %2868 = vmatpush1.msra.mxu0 %v2833
        %2869 = vmatprep.subr.mxu0 0.0
        %2870 = vmatpush1.msra.mxu0 %v2847
        %2871 = vmatprep.subr.mxu0 0.0
        %2872 = vmatpush1.msra.mxu0 0.0
        %2873 = vmatprep.subr.mxu0 0.0
        %2874 = vmatpush1.msra.mxu0 0.0
        %2875 = vmatprep.subr.mxu0 0.0
        %2876 = vmatpush1.msra.mxu0 0.0
        %2877 = vmatprep.subr.mxu0 0.0
        %2878 = vmatpush1.msra.mxu0 0.0
        %2879 = vmatprep.subr.mxu0 0.0
        %2880 = vmatpush1.msra.mxu0 0.0
        %2881 = vmatprep.subr.mxu0 0.0
        %2882 = vmatpush1.msra.mxu0 0.0
        %2883 = vmatprep.subr.mxu0 0.0
        %2884 = vmatpush1.msra.mxu0 0.0
        %2885 = vmatprep.subr.mxu0 0.0
        %2886 = vmatpush1.msra.mxu0 0.0
        %2887 = vmatprep.subr.mxu0 0.0
        %2888 = vmatpush1.msra.mxu0 0.0
        %2889 = vmatprep.subr.mxu0 0.0
        %2890 = vmatpush1.msra.mxu0 0.0
        %2891 = vmatprep.subr.mxu0 0.0
        %2892 = vmatpush1.msra.mxu0 0.0
        %2893 = vmatprep.subr.mxu0 0.0
        %2894 = vmatpush1.msra.mxu0 0.0
        %2895 = vmatprep.subr.mxu0 0.0
        %2896 = vmatpush1.msra.mxu0 0.0
        %2897 = vmatprep.subr.mxu0 0.0
        %2898 = vmatpush1.msra.mxu0 0.0
        %2899 = vmatprep.subr.mxu0 0.0
        %2900 = vmatpush1.msra.mxu0 0.0
        %2901 = vmatprep.subr.mxu0 0.0
        %2902 = vmatpush1.msra.mxu0 0.0
        %2903 = vmatprep.subr.mxu0 0.0
        %2904 = vmatpush1.msra.mxu0 0.0
        %2905 = vmatprep.subr.mxu0 0.0
        %2906 = vmatpush1.msra.mxu0 0.0
        %2907 = vmatprep.subr.mxu0 0.0
        %2908 = vmatpush1.msra.mxu0 0.0
        %2909 = vmatprep.subr.mxu0 0.0
        %2910 = vmatpush1.msra.mxu0 0.0
        %2911 = vmatprep.subr.mxu0 0.0
        %2912 = vmatpush1.msra.mxu0 0.0
        %2913 = vmatprep.mubr.f32.mxu0 0.0
        %2914 = vmatmul.mubr.f32.gmra.mrb[0].mxu0 %v2842
        %v2915 = vpop.f32.mrb[0].mxu0
        %v2916 = vadd.f32 0.0, %v2915
        %v2917 = vpop.f32.mrb[0].mxu0
        %2918 = vmatprep.mubr.f32.mxu0 0.0
        %2919 = vmatmul.mubr.f32.gmra.mrb[0].mxu0 %v2844
        %v2920 = vpop.f32.mrb[0].mxu0
        %v2921 = vadd.f32 0.0, %v2920
        %v2922 = vpop.f32.mrb[0].mxu0
        %2923 = vdwg.mxu0
        %v2924 = vsel %vm2841, %v2811, 0
        %v2926 = vsel %vm2841, %v2812, 0
        %v2929 = vsel %vm2439, %v2823, 0
        %2931 = vmatprep.subr.mxu0 0.0
        %2932 = vmatpush1.msra.mxu0 %v2813
        %2933 = vmatprep.subr.mxu0 0.0
        %2934 = vmatpush1.msra.mxu0 %v2814
        %2935 = vmatprep.subr.mxu0 0.0
        %2936 = vmatpush1.msra.mxu0 %v2815
        %2937 = vmatprep.subr.mxu0 0.0
        %2938 = vmatpush1.msra.mxu0 %v2816
        %2939 = vmatprep.subr.mxu0 0.0
        %2940 = vmatpush1.msra.mxu0 %v2817
        %2941 = vmatprep.subr.mxu0 0.0
        %2942 = vmatpush1.msra.mxu0 %v2818
        %2943 = vmatprep.subr.mxu0 0.0
        %2944 = vmatpush1.msra.mxu0 %v2819
        %2945 = vmatprep.subr.mxu0 0.0
        %2946 = vmatpush1.msra.mxu0 %v2820
        %2947 = vmatprep.subr.mxu0 0.0
        %2948 = vmatpush1.msra.mxu0 %v2821
        %2949 = vmatprep.subr.mxu0 0.0
        %2950 = vmatpush1.msra.mxu0 %v2822
        %2951 = vmatprep.subr.mxu0 0.0
        %2952 = vmatpush1.msra.mxu0 %v2929
        %2953 = vmatprep.subr.mxu0 0.0
        %2954 = vmatpush1.msra.mxu0 0.0
        %2955 = vmatprep.subr.mxu0 0.0
        %2956 = vmatpush1.msra.mxu0 0.0
        %2957 = vmatprep.subr.mxu0 0.0
        %2958 = vmatpush1.msra.mxu0 0.0
        %2959 = vmatprep.subr.mxu0 0.0
        %2960 = vmatpush1.msra.mxu0 0.0
        %2961 = vmatprep.subr.mxu0 0.0
        %2962 = vmatpush1.msra.mxu0 0.0
        %2963 = vmatprep.subr.mxu0 0.0
        %2964 = vmatpush1.msra.mxu0 0.0
        %2965 = vmatprep.subr.mxu0 0.0
        %2966 = vmatpush1.msra.mxu0 0.0
        %2967 = vmatprep.subr.mxu0 0.0
        %2968 = vmatpush1.msra.mxu0 0.0
        %2969 = vmatprep.subr.mxu0 0.0
        %2970 = vmatpush1.msra.mxu0 0.0
        %2971 = vmatprep.subr.mxu0 0.0
        %2972 = vmatpush1.msra.mxu0 0.0
        %2973 = vmatprep.subr.mxu0 0.0
        %2974 = vmatpush1.msra.mxu0 0.0
        %2975 = vmatprep.subr.mxu0 0.0
        %2976 = vmatpush1.msra.mxu0 0.0
        %2977 = vmatprep.subr.mxu0 0.0
        %2978 = vmatpush1.msra.mxu0 0.0
        %2979 = vmatprep.subr.mxu0 0.0
        %2980 = vmatpush1.msra.mxu0 0.0
        %2981 = vmatprep.subr.mxu0 0.0
        %2982 = vmatpush1.msra.mxu0 0.0
        %2983 = vmatprep.subr.mxu0 0.0
        %2984 = vmatpush1.msra.mxu0 0.0
        %2985 = vmatprep.subr.mxu0 0.0
        %2986 = vmatpush1.msra.mxu0 0.0
        %2987 = vmatprep.subr.mxu0 0.0
        %2988 = vmatpush1.msra.mxu0 0.0
        %2989 = vmatprep.subr.mxu0 0.0
        %2990 = vmatpush1.msra.mxu0 0.0
        %2991 = vmatprep.subr.mxu0 0.0
        %2992 = vmatpush1.msra.mxu0 0.0
        %2993 = vmatprep.subr.mxu0 0.0
        %2994 = vmatpush1.msra.mxu0 0.0
        %2995 = vmatprep.mubr.f32.mxu0 0.0
        %2996 = vmatmul.mubr.f32.gmra.mrb[0].mxu0 %v2924
        %v2997 = vpop.f32.mrb[0].mxu0
        %v2998 = vadd.f32 %v2916, %v2997
        %v2999 = vpop.f32.mrb[0].mxu0
        %3000 = vmatprep.mubr.f32.mxu0 0.0
        %3001 = vmatmul.mubr.f32.gmra.mrb[0].mxu0 %v2926
        %v3002 = vpop.f32.mrb[0].mxu0
        %v3003 = vadd.f32 %v2921, %v3002
        %v3004 = vpop.f32.mrb[0].mxu0
        %3005 = vdwg.mxu0
        %v3006 = vld [vmem:[%s3 + $0xa8] sm:$0xff]
        %v3007 = vld [vmem:[%s3 + $0xb0] sm:$0xff]
        %v3008 = vld [vmem:[%s3 + $0xb8] sm:$0xff]
        %v3009 = vld [vmem:[%s3 + $0xc0] sm:$0xff]
        %v3010 = vld [vmem:[%s3 + $0xc8] sm:$0xff]
        %v3011 = vld [vmem:[%s3 + $0xd0] sm:$0xff]
        %v3012 = vld [vmem:[%s3 + $0xd8] sm:$0xff]
        %v3013 = vld [vmem:[%s3 + $0xe0] sm:$0xff]
        %v3014 = vld [vmem:[%s3 + $0xe8] sm:$0xff]
        %v3015 = vld [vmem:[%s3 + $0xf0] sm:$0xff]
        %v3016 = vld [vmem:[%s3 + $0xf8] sm:$0xf]
        %vm3017 = vcmask 1045504
        %v3018 = vrot.slane %v2811, 2
        %v3019 = vrot.slane %v2812, 2
        %v3020 = vsel %vm3017, %v3018, %v3019
        %v3021 = vsel %vm2841, %v3020, 0
        %v3023 = vsel %vm2841, %v3019, 0
        %v3026 = vsel %vm2439, %v3016, 0
        %3028 = vmatprep.subr.mxu0 0.0
        %3029 = vmatpush1.msra.mxu0 %v3006
        %3030 = vmatprep.subr.mxu0 0.0
        %3031 = vmatpush1.msra.mxu0 %v3007
        %3032 = vmatprep.subr.mxu0 0.0
        %3033 = vmatpush1.msra.mxu0 %v3008
        %3034 = vmatprep.subr.mxu0 0.0
        %3035 = vmatpush1.msra.mxu0 %v3009
        %3036 = vmatprep.subr.mxu0 0.0
        %3037 = vmatpush1.msra.mxu0 %v3010
        %3038 = vmatprep.subr.mxu0 0.0
        %3039 = vmatpush1.msra.mxu0 %v3011
        %3040 = vmatprep.subr.mxu0 0.0
        %3041 = vmatpush1.msra.mxu0 %v3012
        %3042 = vmatprep.subr.mxu0 0.0
        %3043 = vmatpush1.msra.mxu0 %v3013
        %3044 = vmatprep.subr.mxu0 0.0
        %3045 = vmatpush1.msra.mxu0 %v3014
        %3046 = vmatprep.subr.mxu0 0.0
        %3047 = vmatpush1.msra.mxu0 %v3015
        %3048 = vmatprep.subr.mxu0 0.0
        %3049 = vmatpush1.msra.mxu0 %v3026
        %3050 = vmatprep.subr.mxu0 0.0
        %3051 = vmatpush1.msra.mxu0 0.0
        %3052 = vmatprep.subr.mxu0 0.0
        %3053 = vmatpush1.msra.mxu0 0.0
        %3054 = vmatprep.subr.mxu0 0.0
        %3055 = vmatpush1.msra.mxu0 0.0
        %3056 = vmatprep.subr.mxu0 0.0
        %3057 = vmatpush1.msra.mxu0 0.0
        %3058 = vmatprep.subr.mxu0 0.0
        %3059 = vmatpush1.msra.mxu0 0.0
        %3060 = vmatprep.subr.mxu0 0.0
        %3061 = vmatpush1.msra.mxu0 0.0
        %3062 = vmatprep.subr.mxu0 0.0
        %3063 = vmatpush1.msra.mxu0 0.0
        %3064 = vmatprep.subr.mxu0 0.0
        %3065 = vmatpush1.msra.mxu0 0.0
        %3066 = vmatprep.subr.mxu0 0.0
        %3067 = vmatpush1.msra.mxu0 0.0
        %3068 = vmatprep.subr.mxu0 0.0
        %3069 = vmatpush1.msra.mxu0 0.0
        %3070 = vmatprep.subr.mxu0 0.0
        %3071 = vmatpush1.msra.mxu0 0.0
        %3072 = vmatprep.subr.mxu0 0.0
        %3073 = vmatpush1.msra.mxu0 0.0
        %3074 = vmatprep.subr.mxu0 0.0
        %3075 = vmatpush1.msra.mxu0 0.0
        %3076 = vmatprep.subr.mxu0 0.0
        %3077 = vmatpush1.msra.mxu0 0.0
        %3078 = vmatprep.subr.mxu0 0.0
        %3079 = vmatpush1.msra.mxu0 0.0
        %3080 = vmatprep.subr.mxu0 0.0
        %3081 = vmatpush1.msra.mxu0 0.0
        %3082 = vmatprep.subr.mxu0 0.0
        %3083 = vmatpush1.msra.mxu0 0.0
        %3084 = vmatprep.subr.mxu0 0.0
        %3085 = vmatpush1.msra.mxu0 0.0
        %3086 = vmatprep.subr.mxu0 0.0
        %3087 = vmatpush1.msra.mxu0 0.0
        %3088 = vmatprep.subr.mxu0 0.0
        %3089 = vmatpush1.msra.mxu0 0.0
        %3090 = vmatprep.subr.mxu0 0.0
        %3091 = vmatpush1.msra.mxu0 0.0
        %3092 = vmatprep.mubr.f32.mxu0 0.0
        %3093 = vmatmul.mubr.f32.gmra.mrb[0].mxu0 %v3021
        %v3094 = vpop.f32.mrb[0].mxu0
        %v3095 = vadd.f32 0.0, %v3094
        %v3096 = vpop.f32.mrb[0].mxu0
        %3097 = vmatprep.mubr.f32.mxu0 0.0
        %3098 = vmatmul.mubr.f32.gmra.mrb[0].mxu0 %v3023
        %v3099 = vpop.f32.mrb[0].mxu0
        %v3100 = vadd.f32 0.0, %v3099
        %v3101 = vpop.f32.mrb[0].mxu0
        %3102 = vdwg.mxu0
        %v3103 = vadd.f32 %v2998, %v3095
        %v3104 = vadd.f32 %v3003, %v3100
        %v3105 = vld [vmem:[%s3 + $0xfc] sm:$0xff]
        %v3106 = vld [vmem:[%s3 + $0x104] sm:$0xff]
        %v3107 = vld [vmem:[%s3 + $0x10c] sm:$0xff]
        %v3108 = vld [vmem:[%s3 + $0x114] sm:$0xff]
        %v3109 = vld [vmem:[%s3 + $0x11c] sm:$0xff]
        %v3110 = vld [vmem:[%s3 + $0x124] sm:$0xff]
        %v3111 = vld [vmem:[%s3 + $0x12c] sm:$0xff]
        %v3112 = vld [vmem:[%s3 + $0x134] sm:$0xff]
        %v3113 = vld [vmem:[%s3 + $0x13c] sm:$0xff]
        %v3114 = vld [vmem:[%s3 + $0x144] sm:$0xff]
        %v3115 = vld [vmem:[%s3 + $0x14c] sm:$0xf]
        %vm3116 = vcmask 1044480
        %v3117 = vrot.slane %v2811, 3
        %v3118 = vrot.slane %v2812, 3
        %v3119 = vsel %vm3116, %v3117, %v3118
        %v3120 = vsel %vm2841, %v3119, 0
        %v3122 = vsel %vm2841, %v3118, 0
        %v3125 = vsel %vm2439, %v3115, 0
        %3127 = vmatprep.subr.mxu0 0.0
        %3128 = vmatpush1.msra.mxu0 %v3105
        %3129 = vmatprep.subr.mxu0 0.0
        %3130 = vmatpush1.msra.mxu0 %v3106
        %3131 = vmatprep.subr.mxu0 0.0
        %3132 = vmatpush1.msra.mxu0 %v3107
        %3133 = vmatprep.subr.mxu0 0.0
        %3134 = vmatpush1.msra.mxu0 %v3108
        %3135 = vmatprep.subr.mxu0 0.0
        %3136 = vmatpush1.msra.mxu0 %v3109
        %3137 = vmatprep.subr.mxu0 0.0
        %3138 = vmatpush1.msra.mxu0 %v3110
        %3139 = vmatprep.subr.mxu0 0.0
        %3140 = vmatpush1.msra.mxu0 %v3111
        %3141 = vmatprep.subr.mxu0 0.0
        %3142 = vmatpush1.msra.mxu0 %v3112
        %3143 = vmatprep.subr.mxu0 0.0
        %3144 = vmatpush1.msra.mxu0 %v3113
        %3145 = vmatprep.subr.mxu0 0.0
        %3146 = vmatpush1.msra.mxu0 %v3114
        %3147 = vmatprep.subr.mxu0 0.0
        %3148 = vmatpush1.msra.mxu0 %v3125
        %3149 = vmatprep.subr.mxu0 0.0
        %3150 = vmatpush1.msra.mxu0 0.0
        %3151 = vmatprep.subr.mxu0 0.0
        %3152 = vmatpush1.msra.mxu0 0.0
        %3153 = vmatprep.subr.mxu0 0.0
        %3154 = vmatpush1.msra.mxu0 0.0
        %3155 = vmatprep.subr.mxu0 0.0
        %3156 = vmatpush1.msra.mxu0 0.0
        %3157 = vmatprep.subr.mxu0 0.0
        %3158 = vmatpush1.msra.mxu0 0.0
        %3159 = vmatprep.subr.mxu0 0.0
        %3160 = vmatpush1.msra.mxu0 0.0
        %3161 = vmatprep.subr.mxu0 0.0
        %3162 = vmatpush1.msra.mxu0 0.0
        %3163 = vmatprep.subr.mxu0 0.0
        %3164 = vmatpush1.msra.mxu0 0.0
        %3165 = vmatprep.subr.mxu0 0.0
        %3166 = vmatpush1.msra.mxu0 0.0
        %3167 = vmatprep.subr.mxu0 0.0
        %3168 = vmatpush1.msra.mxu0 0.0
        %3169 = vmatprep.subr.mxu0 0.0
        %3170 = vmatpush1.msra.mxu0 0.0
        %3171 = vmatprep.subr.mxu0 0.0
        %3172 = vmatpush1.msra.mxu0 0.0
        %3173 = vmatprep.subr.mxu0 0.0
        %3174 = vmatpush1.msra.mxu0 0.0
        %3175 = vmatprep.subr.mxu0 0.0
        %3176 = vmatpush1.msra.mxu0 0.0
        %3177 = vmatprep.subr.mxu0 0.0
        %3178 = vmatpush1.msra.mxu0 0.0
        %3179 = vmatprep.subr.mxu0 0.0
        %3180 = vmatpush1.msra.mxu0 0.0
        %3181 = vmatprep.subr.mxu0 0.0
        %3182 = vmatpush1.msra.mxu0 0.0
        %3183 = vmatprep.subr.mxu0 0.0
        %3184 = vmatpush1.msra.mxu0 0.0
        %3185 = vmatprep.subr.mxu0 0.0
        %3186 = vmatpush1.msra.mxu0 0.0
        %3187 = vmatprep.subr.mxu0 0.0
        %3188 = vmatpush1.msra.mxu0 0.0
        %3189 = vmatprep.subr.mxu0 0.0
        %3190 = vmatpush1.msra.mxu0 0.0
        %3191 = vmatprep.mubr.f32.mxu0 0.0
        %3192 = vmatmul.mubr.f32.gmra.mrb[0].mxu0 %v3120
        %v3193 = vpop.f32.mrb[0].mxu0
        %v3194 = vadd.f32 0.0, %v3193
        %v3195 = vpop.f32.mrb[0].mxu0
        %3196 = vmatprep.mubr.f32.mxu0 0.0
        %3197 = vmatmul.mubr.f32.gmra.mrb[0].mxu0 %v3122
        %v3198 = vpop.f32.mrb[0].mxu0
        %v3199 = vadd.f32 0.0, %v3198
        %v3200 = vpop.f32.mrb[0].mxu0
        %3201 = vdwg.mxu0
        %v3202 = vadd.f32 %v3103, %v3194
        %v3203 = vadd.f32 %v3104, %v3199
        %v3204 = vld [vmem:[%s3 + $0x150] sm:$0xff]
        %v3205 = vld [vmem:[%s3 + $0x158] sm:$0xff]
        %v3206 = vld [vmem:[%s3 + $0x160] sm:$0xff]
        %v3207 = vld [vmem:[%s3 + $0x168] sm:$0xff]
        %v3208 = vld [vmem:[%s3 + $0x170] sm:$0xff]
        %v3209 = vld [vmem:[%s3 + $0x178] sm:$0xff]
        %v3210 = vld [vmem:[%s3 + $0x180] sm:$0xff]
        %v3211 = vld [vmem:[%s3 + $0x188] sm:$0xff]
        %v3212 = vld [vmem:[%s3 + $0x190] sm:$0xff]
        %v3213 = vld [vmem:[%s3 + $0x198] sm:$0xff]
        %v3214 = vld [vmem:[%s3 + $0x1a0] sm:$0xf]
        %v3215 = vrot.slane %v2811, 4
        %v3216 = vrot.slane %v2812, 4
        %v3217 = vsel %vm2439, %v3215, %v3216
        %v3218 = vsel %vm2841, %v3217, 0
        %v3220 = vsel %vm2841, %v3216, 0
        %v3223 = vsel %vm2439, %v3214, 0
        %3225 = vmatprep.subr.mxu0 0.0
        %3226 = vmatpush1.msra.mxu0 %v3204
        %3227 = vmatprep.subr.mxu0 0.0
        %3228 = vmatpush1.msra.mxu0 %v3205
        %3229 = vmatprep.subr.mxu0 0.0
        %3230 = vmatpush1.msra.mxu0 %v3206
        %3231 = vmatprep.subr.mxu0 0.0
        %3232 = vmatpush1.msra.mxu0 %v3207
        %3233 = vmatprep.subr.mxu0 0.0
        %3234 = vmatpush1.msra.mxu0 %v3208
        %3235 = vmatprep.subr.mxu0 0.0
        %3236 = vmatpush1.msra.mxu0 %v3209
        %3237 = vmatprep.subr.mxu0 0.0
        %3238 = vmatpush1.msra.mxu0 %v3210
        %3239 = vmatprep.subr.mxu0 0.0
        %3240 = vmatpush1.msra.mxu0 %v3211
        %3241 = vmatprep.subr.mxu0 0.0
        %3242 = vmatpush1.msra.mxu0 %v3212
        %3243 = vmatprep.subr.mxu0 0.0
        %3244 = vmatpush1.msra.mxu0 %v3213
        %3245 = vmatprep.subr.mxu0 0.0
        %3246 = vmatpush1.msra.mxu0 %v3223
        %3247 = vmatprep.subr.mxu0 0.0
        %3248 = vmatpush1.msra.mxu0 0.0
        %3249 = vmatprep.subr.mxu0 0.0
        %3250 = vmatpush1.msra.mxu0 0.0
        %3251 = vmatprep.subr.mxu0 0.0
        %3252 = vmatpush1.msra.mxu0 0.0
        %3253 = vmatprep.subr.mxu0 0.0
        %3254 = vmatpush1.msra.mxu0 0.0
        %3255 = vmatprep.subr.mxu0 0.0
        %3256 = vmatpush1.msra.mxu0 0.0
        %3257 = vmatprep.subr.mxu0 0.0
        %3258 = vmatpush1.msra.mxu0 0.0
        %3259 = vmatprep.subr.mxu0 0.0
        %3260 = vmatpush1.msra.mxu0 0.0
        %3261 = vmatprep.subr.mxu0 0.0
        %3262 = vmatpush1.msra.mxu0 0.0
        %3263 = vmatprep.subr.mxu0 0.0
        %3264 = vmatpush1.msra.mxu0 0.0
        %3265 = vmatprep.subr.mxu0 0.0
        %3266 = vmatpush1.msra.mxu0 0.0
        %3267 = vmatprep.subr.mxu0 0.0
        %3268 = vmatpush1.msra.mxu0 0.0
        %3269 = vmatprep.subr.mxu0 0.0
        %3270 = vmatpush1.msra.mxu0 0.0
        %3271 = vmatprep.subr.mxu0 0.0
        %3272 = vmatpush1.msra.mxu0 0.0
        %3273 = vmatprep.subr.mxu0 0.0
        %3274 = vmatpush1.msra.mxu0 0.0
        %3275 = vmatprep.subr.mxu0 0.0
        %3276 = vmatpush1.msra.mxu0 0.0
        %3277 = vmatprep.subr.mxu0 0.0
        %3278 = vmatpush1.msra.mxu0 0.0
        %3279 = vmatprep.subr.mxu0 0.0
        %3280 = vmatpush1.msra.mxu0 0.0
        %3281 = vmatprep.subr.mxu0 0.0
        %3282 = vmatpush1.msra.mxu0 0.0
        %3283 = vmatprep.subr.mxu0 0.0
        %3284 = vmatpush1.msra.mxu0 0.0
        %3285 = vmatprep.subr.mxu0 0.0
        %3286 = vmatpush1.msra.mxu0 0.0
        %3287 = vmatprep.subr.mxu0 0.0
        %3288 = vmatpush1.msra.mxu0 0.0
        %3289 = vmatprep.mubr.f32.mxu0 0.0
        %3290 = vmatmul.mubr.f32.gmra.mrb[0].mxu0 %v3218
        %v3291 = vpop.f32.mrb[0].mxu0
        %v3292 = vadd.f32 0.0, %v3291
        %v3293 = vpop.f32.mrb[0].mxu0
        %3294 = vmatprep.mubr.f32.mxu0 0.0
        %3295 = vmatmul.mubr.f32.gmra.mrb[0].mxu0 %v3220
        %v3296 = vpop.f32.mrb[0].mxu0
        %v3297 = vadd.f32 0.0, %v3296
        %v3298 = vpop.f32.mrb[0].mxu0
        %3299 = vdwg.mxu0
        %v3300 = vadd.f32 %v3202, %v3292
        %v3301 = vadd.f32 %v3203, %v3297
        %v3302 = vld [vmem:[%s4] sm:$0x1]
        %v3304 = vlaneseq
        %v3305 = vshrl.u32 %v3304, 7
        %v3306 = vsub.s32 0, %v3305
        %v3307 = vrot.slane %v3302, %v3306
        %v3309 = vadd.f32 %v3300, %v3307
        %v3310 = vadd.f32 %v3301, %v3307
        %v3311 = vmax.f32 %v3309, 0.0
        %v3312 = vmax.f32 %v3310, 0.0
        %v3313 = vld [vmem:[%s9] sm:$0x1f]
        %vm3314 = vcmask 80896
        %v3316 = vsel %vm3314, %v3313, 0
        %vm3318 = vcmask 1041408
        %v3320 = vsel %vm3318, %v3312, 0
        %3322 = vmatprep.subr.mxu0 0.0
        %3323 = vmatpush1.msra.mxu0 %v3311
        %3324 = vmatprep.subr.mxu0 0.0
        %3325 = vmatpush1.msra.mxu0 %v3320
        %3326 = vmatprep.subr.mxu0 0.0
        %3327 = vmatpush1.msra.mxu0 0.0
        %3328 = vmatprep.subr.mxu0 0.0
        %3329 = vmatpush1.msra.mxu0 0.0
        %3330 = vmatprep.subr.mxu0 0.0
        %3331 = vmatpush1.msra.mxu0 0.0
        %3332 = vmatprep.subr.mxu0 0.0
        %3333 = vmatpush1.msra.mxu0 0.0
        %3334 = vmatprep.subr.mxu0 0.0
        %3335 = vmatpush1.msra.mxu0 0.0
        %3336 = vmatprep.subr.mxu0 0.0
        %3337 = vmatpush1.msra.mxu0 0.0
        %3338 = vmatprep.subr.mxu0 0.0
        %3339 = vmatpush1.msra.mxu0 0.0
        %3340 = vmatprep.subr.mxu0 0.0
        %3341 = vmatpush1.msra.mxu0 0.0
        %3342 = vmatprep.subr.mxu0 0.0
        %3343 = vmatpush1.msra.mxu0 0.0
        %3344 = vmatprep.subr.mxu0 0.0
        %3345 = vmatpush1.msra.mxu0 0.0
        %3346 = vmatprep.subr.mxu0 0.0
        %3347 = vmatpush1.msra.mxu0 0.0
        %3348 = vmatprep.subr.mxu0 0.0
        %3349 = vmatpush1.msra.mxu0 0.0
        %3350 = vmatprep.subr.mxu0 0.0
        %3351 = vmatpush1.msra.mxu0 0.0
        %3352 = vmatprep.subr.mxu0 0.0
        %3353 = vmatpush1.msra.mxu0 0.0
        %3354 = vmatprep.subr.mxu0 0.0
        %3355 = vmatpush1.msra.mxu0 0.0
        %3356 = vmatprep.subr.mxu0 0.0
        %3357 = vmatpush1.msra.mxu0 0.0
        %3358 = vmatprep.subr.mxu0 0.0
        %3359 = vmatpush1.msra.mxu0 0.0
        %3360 = vmatprep.subr.mxu0 0.0
        %3361 = vmatpush1.msra.mxu0 0.0
        %3362 = vmatprep.subr.mxu0 0.0
        %3363 = vmatpush1.msra.mxu0 0.0
        %3364 = vmatprep.subr.mxu0 0.0
        %3365 = vmatpush1.msra.mxu0 0.0
        %3366 = vmatprep.subr.mxu0 0.0
        %3367 = vmatpush1.msra.mxu0 0.0
        %3368 = vmatprep.subr.mxu0 0.0
        %3369 = vmatpush1.msra.mxu0 0.0
        %3370 = vmatprep.subr.mxu0 0.0
        %3371 = vmatpush1.msra.mxu0 0.0
        %3372 = vmatprep.subr.mxu0 0.0
        %3373 = vmatpush1.msra.mxu0 0.0
        %3374 = vmatprep.subr.mxu0 0.0
        %3375 = vmatpush1.msra.mxu0 0.0
        %3376 = vmatprep.subr.mxu0 0.0
        %3377 = vmatpush1.msra.mxu0 0.0
        %3378 = vmatprep.subr.mxu0 0.0
        %3379 = vmatpush1.msra.mxu0 0.0
        %3380 = vmatprep.subr.mxu0 0.0
        %3381 = vmatpush1.msra.mxu0 0.0
        %3382 = vmatprep.subr.mxu0 0.0
        %3383 = vmatpush1.msra.mxu0 0.0
        %3384 = vmatprep.subr.mxu0 0.0
        %3385 = vmatpush1.msra.mxu0 0.0
        %3386 = vmatprep.mubr.f32.mxu0 0.0
        %3387 = vmatmul.mubr.f32.gmra.mrb[0].mxu0 %v3316
        %v3388 = vpop.f32.mrb[0].mxu0
        %v3389 = vadd.f32 0.0, %v3388
        %v3390 = vpop.f32.mrb[0].mxu0
        %3391 = vdwg.mxu0
        %v3392 = vld [vmem:[%s10] sm:$0x1f]
        %v3394 = vsel %vm3314, %v3392, 0
        %3396 = vmatprep.subr.mxu0 0.0
        %3397 = vmatpush1.msra.mxu0 %v3311
        %3398 = vmatprep.subr.mxu0 0.0
        %3399 = vmatpush1.msra.mxu0 %v3320
        %3400 = vmatprep.subr.mxu0 0.0
        %3401 = vmatpush1.msra.mxu0 0.0
        %3402 = vmatprep.subr.mxu0 0.0
        %3403 = vmatpush1.msra.mxu0 0.0
        %3404 = vmatprep.subr.mxu0 0.0
        %3405 = vmatpush1.msra.mxu0 0.0
        %3406 = vmatprep.subr.mxu0 0.0
        %3407 = vmatpush1.msra.mxu0 0.0
        %3408 = vmatprep.subr.mxu0 0.0
        %3409 = vmatpush1.msra.mxu0 0.0
        %3410 = vmatprep.subr.mxu0 0.0
        %3411 = vmatpush1.msra.mxu0 0.0
        %3412 = vmatprep.subr.mxu0 0.0
        %3413 = vmatpush1.msra.mxu0 0.0
        %3414 = vmatprep.subr.mxu0 0.0
        %3415 = vmatpush1.msra.mxu0 0.0
        %3416 = vmatprep.subr.mxu0 0.0
        %3417 = vmatpush1.msra.mxu0 0.0
        %3418 = vmatprep.subr.mxu0 0.0
        %3419 = vmatpush1.msra.mxu0 0.0
        %3420 = vmatprep.subr.mxu0 0.0
        %3421 = vmatpush1.msra.mxu0 0.0
        %3422 = vmatprep.subr.mxu0 0.0
        %3423 = vmatpush1.msra.mxu0 0.0
        %3424 = vmatprep.subr.mxu0 0.0
        %3425 = vmatpush1.msra.mxu0 0.0
        %3426 = vmatprep.subr.mxu0 0.0
        %3427 = vmatpush1.msra.mxu0 0.0
        %3428 = vmatprep.subr.mxu0 0.0
        %3429 = vmatpush1.msra.mxu0 0.0
        %3430 = vmatprep.subr.mxu0 0.0
        %3431 = vmatpush1.msra.mxu0 0.0
        %3432 = vmatprep.subr.mxu0 0.0
        %3433 = vmatpush1.msra.mxu0 0.0
        %3434 = vmatprep.subr.mxu0 0.0
        %3435 = vmatpush1.msra.mxu0 0.0
        %3436 = vmatprep.subr.mxu0 0.0
        %3437 = vmatpush1.msra.mxu0 0.0
        %3438 = vmatprep.subr.mxu0 0.0
        %3439 = vmatpush1.msra.mxu0 0.0
        %3440 = vmatprep.subr.mxu0 0.0
        %3441 = vmatpush1.msra.mxu0 0.0
        %3442 = vmatprep.subr.mxu0 0.0
        %3443 = vmatpush1.msra.mxu0 0.0
        %3444 = vmatprep.subr.mxu0 0.0
        %3445 = vmatpush1.msra.mxu0 0.0
        %3446 = vmatprep.subr.mxu0 0.0
        %3447 = vmatpush1.msra.mxu0 0.0
        %3448 = vmatprep.subr.mxu0 0.0
        %3449 = vmatpush1.msra.mxu0 0.0
        %3450 = vmatprep.subr.mxu0 0.0
        %3451 = vmatpush1.msra.mxu0 0.0
        %3452 = vmatprep.subr.mxu0 0.0
        %3453 = vmatpush1.msra.mxu0 0.0
        %3454 = vmatprep.subr.mxu0 0.0
        %3455 = vmatpush1.msra.mxu0 0.0
        %3456 = vmatprep.subr.mxu0 0.0
        %3457 = vmatpush1.msra.mxu0 0.0
        %3458 = vmatprep.subr.mxu0 0.0
        %3459 = vmatpush1.msra.mxu0 0.0
        %3460 = vmatprep.mubr.f32.mxu0 0.0
        %3461 = vmatmul.mubr.f32.gmra.mrb[0].mxu0 %v3394
        %v3462 = vpop.f32.mrb[0].mxu0
        %v3463 = vadd.f32 0.0, %v3462
        %v3464 = vpop.f32.mrb[0].mxu0
        %3465 = vdwg.mxu0
        %v3466 = vmax.f32 %v3389, %v3463
        %v3467 = vld [vmem:[%s11] sm:$0xff]
        %v3468 = vld [vmem:[%s11 + $0x8] sm:$0xff]
        %v3469 = vld [vmem:[%s11 + $0x10] sm:$0xff]
        %v3470 = vld [vmem:[%s11 + $0x18] sm:$0xff]
        %v3471 = vld [vmem:[%s11 + $0x20] sm:$0xff]
        %v3472 = vld [vmem:[%s11 + $0x28] sm:$0xff]
        %v3473 = vld [vmem:[%s11 + $0x30] sm:$0xff]
        %v3474 = vld [vmem:[%s11 + $0x38] sm:$0xff]
        %v3475 = vld [vmem:[%s11 + $0x40] sm:$0xff]
        %v3476 = vld [vmem:[%s11 + $0x48] sm:$0xff]
        %v3477 = vld [vmem:[%s11 + $0x50] sm:$0xff]
        %v3478 = vld [vmem:[%s11 + $0x58] sm:$0xff]
        %v3479 = vld [vmem:[%s11 + $0x60] sm:$0xff]
        %v3480 = vld [vmem:[%s11 + $0x68] sm:$0xff]
        %v3481 = vld [vmem:[%s11 + $0x70] sm:$0xff]
        %vm3482 = vcmask 982016
        %v3484 = vsel %vm3482, %v3466, 0
        %3486 = vmatprep.subr.mxu0 0.0
        %3487 = vmatpush1.msra.mxu0 %v3467
        %3488 = vmatprep.subr.mxu0 0.0
        %3489 = vmatpush1.msra.mxu0 %v3468
        %3490 = vmatprep.subr.mxu0 0.0
        %3491 = vmatpush1.msra.mxu0 %v3469
        %3492 = vmatprep.subr.mxu0 0.0
        %3493 = vmatpush1.msra.mxu0 %v3470
        %3494 = vmatprep.subr.mxu0 0.0
        %3495 = vmatpush1.msra.mxu0 %v3471
        %3496 = vmatprep.subr.mxu0 0.0
        %3497 = vmatpush1.msra.mxu0 %v3472
        %3498 = vmatprep.subr.mxu0 0.0
        %3499 = vmatpush1.msra.mxu0 %v3473
        %3500 = vmatprep.subr.mxu0 0.0
        %3501 = vmatpush1.msra.mxu0 %v3474
        %3502 = vmatprep.subr.mxu0 0.0
        %3503 = vmatpush1.msra.mxu0 %v3475
        %3504 = vmatprep.subr.mxu0 0.0
        %3505 = vmatpush1.msra.mxu0 %v3476
        %3506 = vmatprep.subr.mxu0 0.0
        %3507 = vmatpush1.msra.mxu0 %v3477
        %3508 = vmatprep.subr.mxu0 0.0
        %3509 = vmatpush1.msra.mxu0 %v3478
        %3510 = vmatprep.subr.mxu0 0.0
        %3511 = vmatpush1.msra.mxu0 %v3479
        %3512 = vmatprep.subr.mxu0 0.0
        %3513 = vmatpush1.msra.mxu0 %v3480
        %3514 = vmatprep.subr.mxu0 0.0
        %3515 = vmatpush1.msra.mxu0 %v3481
        %3516 = vmatprep.subr.mxu0 0.0
        %3517 = vmatpush1.msra.mxu0 0.0
        %3518 = vmatprep.subr.mxu0 0.0
        %3519 = vmatpush1.msra.mxu0 0.0
        %3520 = vmatprep.subr.mxu0 0.0
        %3521 = vmatpush1.msra.mxu0 0.0
        %3522 = vmatprep.subr.mxu0 0.0
        %3523 = vmatpush1.msra.mxu0 0.0
        %3524 = vmatprep.subr.mxu0 0.0
        %3525 = vmatpush1.msra.mxu0 0.0
        %3526 = vmatprep.subr.mxu0 0.0
        %3527 = vmatpush1.msra.mxu0 0.0
        %3528 = vmatprep.subr.mxu0 0.0
        %3529 = vmatpush1.msra.mxu0 0.0
        %3530 = vmatprep.subr.mxu0 0.0
        %3531 = vmatpush1.msra.mxu0 0.0
        %3532 = vmatprep.subr.mxu0 0.0
        %3533 = vmatpush1.msra.mxu0 0.0
        %3534 = vmatprep.subr.mxu0 0.0
        %3535 = vmatpush1.msra.mxu0 0.0
        %3536 = vmatprep.subr.mxu0 0.0
        %3537 = vmatpush1.msra.mxu0 0.0
        %3538 = vmatprep.subr.mxu0 0.0
        %3539 = vmatpush1.msra.mxu0 0.0
        %3540 = vmatprep.subr.mxu0 0.0
        %3541 = vmatpush1.msra.mxu0 0.0
        %3542 = vmatprep.subr.mxu0 0.0
        %3543 = vmatpush1.msra.mxu0 0.0
        %3544 = vmatprep.subr.mxu0 0.0
        %3545 = vmatpush1.msra.mxu0 0.0
        %3546 = vmatprep.subr.mxu0 0.0
        %3547 = vmatpush1.msra.mxu0 0.0
        %3548 = vmatprep.subr.mxu0 0.0
        %3549 = vmatpush1.msra.mxu0 0.0
        %3550 = vmatprep.mubr.f32.mxu0 0.0
        %3551 = vmatmul.mubr.f32.gmra.mrb[0].mxu0 %v3484
        %v3552 = vpop.f32.mrb[0].mxu0
        %v3553 = vadd.f32 0.0, %v3552
        %v3554 = vpop.f32.mrb[0].mxu0
        %3555 = vdwg.mxu0
        %v3556 = vld [vmem:[%s12] sm:$0xff]
        %v3557 = vld [vmem:[%s12 + $0x8] sm:$0xff]
        %v3558 = vld [vmem:[%s12 + $0x10] sm:$0xff]
        %v3559 = vld [vmem:[%s12 + $0x18] sm:$0xff]
        %v3560 = vld [vmem:[%s12 + $0x20] sm:$0xff]
        %v3561 = vld [vmem:[%s12 + $0x28] sm:$0xff]
        %v3562 = vld [vmem:[%s12 + $0x30] sm:$0xff]
        %v3563 = vld [vmem:[%s12 + $0x38] sm:$0xff]
        %v3564 = vld [vmem:[%s12 + $0x40] sm:$0xff]
        %v3565 = vld [vmem:[%s12 + $0x48] sm:$0xff]
        %v3566 = vld [vmem:[%s12 + $0x50] sm:$0xff]
        %v3567 = vld [vmem:[%s12 + $0x58] sm:$0xff]
        %v3568 = vld [vmem:[%s12 + $0x60] sm:$0xff]
        %v3569 = vld [vmem:[%s12 + $0x68] sm:$0xff]
        %v3570 = vld [vmem:[%s12 + $0x70] sm:$0xff]
        %3571 = vmatprep.subr.mxu0 0.0
        %3572 = vmatpush1.msra.mxu0 %v3556
        %3573 = vmatprep.subr.mxu0 0.0
        %3574 = vmatpush1.msra.mxu0 %v3557
        %3575 = vmatprep.subr.mxu0 0.0
        %3576 = vmatpush1.msra.mxu0 %v3558
        %3577 = vmatprep.subr.mxu0 0.0
        %3578 = vmatpush1.msra.mxu0 %v3559
        %3579 = vmatprep.subr.mxu0 0.0
        %3580 = vmatpush1.msra.mxu0 %v3560
        %3581 = vmatprep.subr.mxu0 0.0
        %3582 = vmatpush1.msra.mxu0 %v3561
        %3583 = vmatprep.subr.mxu0 0.0
        %3584 = vmatpush1.msra.mxu0 %v3562
        %3585 = vmatprep.subr.mxu0 0.0
        %3586 = vmatpush1.msra.mxu0 %v3563
        %3587 = vmatprep.subr.mxu0 0.0
        %3588 = vmatpush1.msra.mxu0 %v3564
        %3589 = vmatprep.subr.mxu0 0.0
        %3590 = vmatpush1.msra.mxu0 %v3565
        %3591 = vmatprep.subr.mxu0 0.0
        %3592 = vmatpush1.msra.mxu0 %v3566
        %3593 = vmatprep.subr.mxu0 0.0
        %3594 = vmatpush1.msra.mxu0 %v3567
        %3595 = vmatprep.subr.mxu0 0.0
        %3596 = vmatpush1.msra.mxu0 %v3568
        %3597 = vmatprep.subr.mxu0 0.0
        %3598 = vmatpush1.msra.mxu0 %v3569
        %3599 = vmatprep.subr.mxu0 0.0
        %3600 = vmatpush1.msra.mxu0 %v3570
        %3601 = vmatprep.subr.mxu0 0.0
        %3602 = vmatpush1.msra.mxu0 0.0
        %3603 = vmatprep.subr.mxu0 0.0
        %3604 = vmatpush1.msra.mxu0 0.0
        %3605 = vmatprep.subr.mxu0 0.0
        %3606 = vmatpush1.msra.mxu0 0.0
        %3607 = vmatprep.subr.mxu0 0.0
        %3608 = vmatpush1.msra.mxu0 0.0
        %3609 = vmatprep.subr.mxu0 0.0
        %3610 = vmatpush1.msra.mxu0 0.0
        %3611 = vmatprep.subr.mxu0 0.0
        %3612 = vmatpush1.msra.mxu0 0.0
        %3613 = vmatprep.subr.mxu0 0.0
        %3614 = vmatpush1.msra.mxu0 0.0
        %3615 = vmatprep.subr.mxu0 0.0
        %3616 = vmatpush1.msra.mxu0 0.0
        %3617 = vmatprep.subr.mxu0 0.0
        %3618 = vmatpush1.msra.mxu0 0.0
        %3619 = vmatprep.subr.mxu0 0.0
        %3620 = vmatpush1.msra.mxu0 0.0
        %3621 = vmatprep.subr.mxu0 0.0
        %3622 = vmatpush1.msra.mxu0 0.0
        %3623 = vmatprep.subr.mxu0 0.0
        %3624 = vmatpush1.msra.mxu0 0.0
        %3625 = vmatprep.subr.mxu0 0.0
        %3626 = vmatpush1.msra.mxu0 0.0
        %3627 = vmatprep.subr.mxu0 0.0
        %3628 = vmatpush1.msra.mxu0 0.0
        %3629 = vmatprep.subr.mxu0 0.0
        %3630 = vmatpush1.msra.mxu0 0.0
        %3631 = vmatprep.subr.mxu0 0.0
        %3632 = vmatpush1.msra.mxu0 0.0
        %3633 = vmatprep.subr.mxu0 0.0
        %3634 = vmatpush1.msra.mxu0 0.0
        %3635 = vmatprep.mubr.f32.mxu0 0.0
        %3636 = vmatmul.mubr.f32.gmra.mrb[0].mxu0 %v3484
        %v3637 = vpop.f32.mrb[0].mxu0
        %v3638 = vadd.f32 0.0, %v3637
        %v3639 = vpop.f32.mrb[0].mxu0
        %3640 = vdwg.mxu0
        %v3641 = vmax.f32 %v3553, %v3638
        %v3642 = vld [vmem:[%s14] sm:$0x3]
        %v3643 = vld [vmem:[%s13] sm:$0xff]
        %v3644 = vld [vmem:[%s13 + $0x8] sm:$0xff]
        %v3645 = vld [vmem:[%s13 + $0x10] sm:$0xff]
        %v3646 = vld [vmem:[%s13 + $0x18] sm:$0xff]
        %v3647 = vld [vmem:[%s13 + $0x20] sm:$0xff]
        %v3648 = vld [vmem:[%s13 + $0x28] sm:$0xff]
        %v3649 = vld [vmem:[%s13 + $0x30] sm:$0xff]
        %v3650 = vld [vmem:[%s13 + $0x38] sm:$0xff]
        %v3651 = vld [vmem:[%s13 + $0x40] sm:$0xff]
        %v3652 = vld [vmem:[%s13 + $0x48] sm:$0xff]
        %v3653 = vld [vmem:[%s13 + $0x50] sm:$0xff]
        %v3654 = vld [vmem:[%s13 + $0x58] sm:$0xff]
        %v3655 = vld [vmem:[%s13 + $0x60] sm:$0xff]
        %v3656 = vld [vmem:[%s13 + $0x68] sm:$0xff]
        %v3657 = vld [vmem:[%s13 + $0x70] sm:$0xf]
        %v3658 = vld [vmem:[%s13 + $0x78] sm:$0xf]
        %vm3659 = vcmask 490496
        %v3661 = vsel %vm3659, %v3641, 0
        %v3664 = vsel %vm2439, %v3657, 0
        %v3667 = vsel %vm2439, %v3658, 0
        %3669 = vmatprep.subr.mxu0 %v3644
        %3670 = vmatpush1.msra.mxu0 %v3643
        %3671 = vmatprep.subr.mxu0 %v3646
        %3672 = vmatpush1.msra.mxu0 %v3645
        %3673 = vmatprep.subr.mxu0 %v3648
        %3674 = vmatpush1.msra.mxu0 %v3647
        %3675 = vmatprep.subr.mxu0 %v3650
        %3676 = vmatpush1.msra.mxu0 %v3649
        %3677 = vmatprep.subr.mxu0 %v3652
        %3678 = vmatpush1.msra.mxu0 %v3651
        %3679 = vmatprep.subr.mxu0 %v3654
        %3680 = vmatpush1.msra.mxu0 %v3653
        %3681 = vmatprep.subr.mxu0 %v3656
        %3682 = vmatpush1.msra.mxu0 %v3655
        %3683 = vmatprep.subr.mxu0 %v3667
        %3684 = vmatpush1.msra.mxu0 %v3664
        %3685 = vmatprep.subr.mxu0 0.0
        %3686 = vmatpush1.msra.mxu0 0.0
        %3687 = vmatprep.subr.mxu0 0.0
        %3688 = vmatpush1.msra.mxu0 0.0
        %3689 = vmatprep.subr.mxu0 0.0
        %3690 = vmatpush1.msra.mxu0 0.0
        %3691 = vmatprep.subr.mxu0 0.0
        %3692 = vmatpush1.msra.mxu0 0.0
        %3693 = vmatprep.subr.mxu0 0.0
        %3694 = vmatpush1.msra.mxu0 0.0
        %3695 = vmatprep.subr.mxu0 0.0
        %3696 = vmatpush1.msra.mxu0 0.0
        %3697 = vmatprep.subr.mxu0 0.0
        %3698 = vmatpush1.msra.mxu0 0.0
        %3699 = vmatprep.subr.mxu0 0.0
        %3700 = vmatpush1.msra.mxu0 0.0
        %3701 = vmatprep.subr.mxu0 0.0
        %3702 = vmatpush1.msra.mxu0 0.0
        %3703 = vmatprep.subr.mxu0 0.0
        %3704 = vmatpush1.msra.mxu0 0.0
        %3705 = vmatprep.subr.mxu0 0.0
        %3706 = vmatpush1.msra.mxu0 0.0
        %3707 = vmatprep.subr.mxu0 0.0
        %3708 = vmatpush1.msra.mxu0 0.0
        %3709 = vmatprep.subr.mxu0 0.0
        %3710 = vmatpush1.msra.mxu0 0.0
        %3711 = vmatprep.subr.mxu0 0.0
        %3712 = vmatpush1.msra.mxu0 0.0
        %3713 = vmatprep.subr.mxu0 0.0
        %3714 = vmatpush1.msra.mxu0 0.0
        %3715 = vmatprep.subr.mxu0 0.0
        %3716 = vmatpush1.msra.mxu0 0.0
        %3717 = vmatprep.subr.mxu0 0.0
        %3718 = vmatpush1.msra.mxu0 0.0
        %3719 = vmatprep.subr.mxu0 0.0
        %3720 = vmatpush1.msra.mxu0 0.0
        %3721 = vmatprep.subr.mxu0 0.0
        %3722 = vmatpush1.msra.mxu0 0.0
        %3723 = vmatprep.subr.mxu0 0.0
        %3724 = vmatpush1.msra.mxu0 0.0
        %3725 = vmatprep.subr.mxu0 0.0
        %3726 = vmatpush1.msra.mxu0 0.0
        %3727 = vmatprep.subr.mxu0 0.0
        %3728 = vmatpush1.msra.mxu0 0.0
        %3729 = vmatprep.subr.mxu0 0.0
        %3730 = vmatpush1.msra.mxu0 0.0
        %3731 = vmatprep.subr.mxu0 0.0
        %3732 = vmatpush1.msra.mxu0 0.0
        %3733 = vmatprep.mubr.f32.mxu0 0.0
        %3734 = vmatmul.mubr.f32.gmra.mrb[0].mxu0 %v3661
        %v3735 = vpop.f32.mrb[0].mxu0
        %v3736 = vadd.f32 0.0, %v3735
        %v3737 = vpop.f32.mrb[0].mxu0
        %v3738 = vadd.f32 0.0, %v3737
        %3739 = vdwg.mxu0
        %v3742 = vcombine.low %v3736, %v3738
        %v3744 = vunpack.c.l.s4 1966171168
        %v3745 = vunpack.c.0.s8 %v3744
        %v3746 = vlaneseq
        %v3747 = vshrl.u32 %v3746, 7
        %v3748 = vsub.s32 %v3745, %v3747
        %v3749 = vrot.slane %v3742, %v3748
        %v3751 = vunpack.c.l.s4 1966171168
        %v3752 = vunpack.c.0.s8 %v3751
        %v3753 = vlaneseq
        %v3754 = vshrl.u32 %v3753, 7
        %v3755 = vsub.s32 %v3752, %v3754
        %v3756 = vrot.slane %v3749, %v3755
        %v3758 = vadd.f32 %v3642, %v3756
        %s3759 = scalar_lea.vmem %s13, 128
        %v3760 = vld [vmem:[%s3759] sm:$0xff]
        %v3761 = vld [vmem:[%s3759 + $0x8] sm:$0xff]
        %v3762 = vld [vmem:[%s3759 + $0x10] sm:$0xff]
        %v3763 = vld [vmem:[%s3759 + $0x18] sm:$0xff]
        %v3764 = vld [vmem:[%s3759 + $0x20] sm:$0xff]
        %v3765 = vld [vmem:[%s3759 + $0x28] sm:$0xff]
        %v3766 = vld [vmem:[%s3759 + $0x30] sm:$0xff]
        %v3767 = vld [vmem:[%s3759 + $0x38] sm:$0xff]
        %v3768 = vld [vmem:[%s3759 + $0x40] sm:$0xff]
        %v3769 = vld [vmem:[%s3759 + $0x48] sm:$0xff]
        %v3770 = vld [vmem:[%s3759 + $0x50] sm:$0xff]
        %v3771 = vld [vmem:[%s3759 + $0x58] sm:$0xff]
        %v3772 = vld [vmem:[%s3759 + $0x60] sm:$0xff]
        %v3773 = vld [vmem:[%s3759 + $0x68] sm:$0xff]
        %v3774 = vld [vmem:[%s3759 + $0x70] sm:$0xf]
        %v3775 = vld [vmem:[%s3759 + $0x78] sm:$0xf]
        %v3776 = vrot.slane %v3641, 1
        %v3777 = vsel %vm3659, %v3776, 0
        %v3780 = vsel %vm2439, %v3774, 0
        %v3783 = vsel %vm2439, %v3775, 0
        %3785 = vmatprep.subr.mxu0 %v3761
        %3786 = vmatpush1.msra.mxu0 %v3760
        %3787 = vmatprep.subr.mxu0 %v3763
        %3788 = vmatpush1.msra.mxu0 %v3762
        %3789 = vmatprep.subr.mxu0 %v3765
        %3790 = vmatpush1.msra.mxu0 %v3764
        %3791 = vmatprep.subr.mxu0 %v3767
        %3792 = vmatpush1.msra.mxu0 %v3766
        %3793 = vmatprep.subr.mxu0 %v3769
        %3794 = vmatpush1.msra.mxu0 %v3768
        %3795 = vmatprep.subr.mxu0 %v3771
        %3796 = vmatpush1.msra.mxu0 %v3770
        %3797 = vmatprep.subr.mxu0 %v3773
        %3798 = vmatpush1.msra.mxu0 %v3772
        %3799 = vmatprep.subr.mxu0 %v3783
        %3800 = vmatpush1.msra.mxu0 %v3780
        %3801 = vmatprep.subr.mxu0 0.0
        %3802 = vmatpush1.msra.mxu0 0.0
        %3803 = vmatprep.subr.mxu0 0.0
        %3804 = vmatpush1.msra.mxu0 0.0
        %3805 = vmatprep.subr.mxu0 0.0
        %3806 = vmatpush1.msra.mxu0 0.0
        %3807 = vmatprep.subr.mxu0 0.0
        %3808 = vmatpush1.msra.mxu0 0.0
        %3809 = vmatprep.subr.mxu0 0.0
        %3810 = vmatpush1.msra.mxu0 0.0
        %3811 = vmatprep.subr.mxu0 0.0
        %3812 = vmatpush1.msra.mxu0 0.0
        %3813 = vmatprep.subr.mxu0 0.0
        %3814 = vmatpush1.msra.mxu0 0.0
        %3815 = vmatprep.subr.mxu0 0.0
        %3816 = vmatpush1.msra.mxu0 0.0
        %3817 = vmatprep.subr.mxu0 0.0
        %3818 = vmatpush1.msra.mxu0 0.0
        %3819 = vmatprep.subr.mxu0 0.0
        %3820 = vmatpush1.msra.mxu0 0.0
        %3821 = vmatprep.subr.mxu0 0.0
        %3822 = vmatpush1.msra.mxu0 0.0
        %3823 = vmatprep.subr.mxu0 0.0
        %3824 = vmatpush1.msra.mxu0 0.0
        %3825 = vmatprep.subr.mxu0 0.0
        %3826 = vmatpush1.msra.mxu0 0.0
        %3827 = vmatprep.subr.mxu0 0.0
        %3828 = vmatpush1.msra.mxu0 0.0
        %3829 = vmatprep.subr.mxu0 0.0
        %3830 = vmatpush1.msra.mxu0 0.0
        %3831 = vmatprep.subr.mxu0 0.0
        %3832 = vmatpush1.msra.mxu0 0.0
        %3833 = vmatprep.subr.mxu0 0.0
        %3834 = vmatpush1.msra.mxu0 0.0
        %3835 = vmatprep.subr.mxu0 0.0
        %3836 = vmatpush1.msra.mxu0 0.0
        %3837 = vmatprep.subr.mxu0 0.0
        %3838 = vmatpush1.msra.mxu0 0.0
        %3839 = vmatprep.subr.mxu0 0.0
        %3840 = vmatpush1.msra.mxu0 0.0
        %3841 = vmatprep.subr.mxu0 0.0
        %3842 = vmatpush1.msra.mxu0 0.0
        %3843 = vmatprep.subr.mxu0 0.0
        %3844 = vmatpush1.msra.mxu0 0.0
        %3845 = vmatprep.subr.mxu0 0.0
        %3846 = vmatpush1.msra.mxu0 0.0
        %3847 = vmatprep.subr.mxu0 0.0
        %3848 = vmatpush1.msra.mxu0 0.0
        %3849 = vmatprep.mubr.f32.mxu0 0.0
        %3850 = vmatmul.mubr.f32.gmra.mrb[0].mxu0 %v3777
        %v3851 = vpop.f32.mrb[0].mxu0
        %v3852 = vadd.f32 0.0, %v3851
        %v3853 = vpop.f32.mrb[0].mxu0
        %v3854 = vadd.f32 0.0, %v3853
        %3855 = vdwg.mxu0
        %v3858 = vcombine.low %v3852, %v3854
        %v3860 = vunpack.c.l.s4 1966171168
        %v3861 = vunpack.c.0.s8 %v3860
        %v3862 = vlaneseq
        %v3863 = vshrl.u32 %v3862, 7
        %v3864 = vsub.s32 %v3861, %v3863
        %v3865 = vrot.slane %v3858, %v3864
        %v3867 = vunpack.c.l.s4 1966171168
        %v3868 = vunpack.c.0.s8 %v3867
        %v3869 = vlaneseq
        %v3870 = vshrl.u32 %v3869, 7
        %v3871 = vsub.s32 %v3868, %v3870
        %v3872 = vrot.slane %v3865, %v3871
        %v3874 = vadd.f32 %v3758, %v3872
        %s3875 = scalar_lea.vmem %s13, 256
        %v3876 = vld [vmem:[%s3875] sm:$0xff]
        %v3877 = vld [vmem:[%s3875 + $0x8] sm:$0xff]
        %v3878 = vld [vmem:[%s3875 + $0x10] sm:$0xff]
        %v3879 = vld [vmem:[%s3875 + $0x18] sm:$0xff]
        %v3880 = vld [vmem:[%s3875 + $0x20] sm:$0xff]
        %v3881 = vld [vmem:[%s3875 + $0x28] sm:$0xff]
        %v3882 = vld [vmem:[%s3875 + $0x30] sm:$0xff]
        %v3883 = vld [vmem:[%s3875 + $0x38] sm:$0xff]
        %v3884 = vld [vmem:[%s3875 + $0x40] sm:$0xff]
        %v3885 = vld [vmem:[%s3875 + $0x48] sm:$0xff]
        %v3886 = vld [vmem:[%s3875 + $0x50] sm:$0xff]
        %v3887 = vld [vmem:[%s3875 + $0x58] sm:$0xff]
        %v3888 = vld [vmem:[%s3875 + $0x60] sm:$0xff]
        %v3889 = vld [vmem:[%s3875 + $0x68] sm:$0xff]
        %v3890 = vld [vmem:[%s3875 + $0x70] sm:$0xf]
        %v3891 = vld [vmem:[%s3875 + $0x78] sm:$0xf]
        %v3892 = vrot.slane %v3641, 2
        %v3893 = vsel %vm3659, %v3892, 0
        %v3896 = vsel %vm2439, %v3890, 0
        %v3899 = vsel %vm2439, %v3891, 0
        %3901 = vmatprep.subr.mxu0 %v3877
        %3902 = vmatpush1.msra.mxu0 %v3876
        %3903 = vmatprep.subr.mxu0 %v3879
        %3904 = vmatpush1.msra.mxu0 %v3878
        %3905 = vmatprep.subr.mxu0 %v3881
        %3906 = vmatpush1.msra.mxu0 %v3880
        %3907 = vmatprep.subr.mxu0 %v3883
        %3908 = vmatpush1.msra.mxu0 %v3882
        %3909 = vmatprep.subr.mxu0 %v3885
        %3910 = vmatpush1.msra.mxu0 %v3884
        %3911 = vmatprep.subr.mxu0 %v3887
        %3912 = vmatpush1.msra.mxu0 %v3886
        %3913 = vmatprep.subr.mxu0 %v3889
        %3914 = vmatpush1.msra.mxu0 %v3888
        %3915 = vmatprep.subr.mxu0 %v3899
        %3916 = vmatpush1.msra.mxu0 %v3896
        %3917 = vmatprep.subr.mxu0 0.0
        %3918 = vmatpush1.msra.mxu0 0.0
        %3919 = vmatprep.subr.mxu0 0.0
        %3920 = vmatpush1.msra.mxu0 0.0
        %3921 = vmatprep.subr.mxu0 0.0
        %3922 = vmatpush1.msra.mxu0 0.0
        %3923 = vmatprep.subr.mxu0 0.0
        %3924 = vmatpush1.msra.mxu0 0.0
        %3925 = vmatprep.subr.mxu0 0.0
        %3926 = vmatpush1.msra.mxu0 0.0
        %3927 = vmatprep.subr.mxu0 0.0
        %3928 = vmatpush1.msra.mxu0 0.0
        %3929 = vmatprep.subr.mxu0 0.0
        %3930 = vmatpush1.msra.mxu0 0.0
        %3931 = vmatprep.subr.mxu0 0.0
        %3932 = vmatpush1.msra.mxu0 0.0
        %3933 = vmatprep.subr.mxu0 0.0
        %3934 = vmatpush1.msra.mxu0 0.0
        %3935 = vmatprep.subr.mxu0 0.0
        %3936 = vmatpush1.msra.mxu0 0.0
        %3937 = vmatprep.subr.mxu0 0.0
        %3938 = vmatpush1.msra.mxu0 0.0
        %3939 = vmatprep.subr.mxu0 0.0
        %3940 = vmatpush1.msra.mxu0 0.0
        %3941 = vmatprep.subr.mxu0 0.0
        %3942 = vmatpush1.msra.mxu0 0.0
        %3943 = vmatprep.subr.mxu0 0.0
        %3944 = vmatpush1.msra.mxu0 0.0
        %3945 = vmatprep.subr.mxu0 0.0
        %3946 = vmatpush1.msra.mxu0 0.0
        %3947 = vmatprep.subr.mxu0 0.0
        %3948 = vmatpush1.msra.mxu0 0.0
        %3949 = vmatprep.subr.mxu0 0.0
        %3950 = vmatpush1.msra.mxu0 0.0
        %3951 = vmatprep.subr.mxu0 0.0
        %3952 = vmatpush1.msra.mxu0 0.0
        %3953 = vmatprep.subr.mxu0 0.0
        %3954 = vmatpush1.msra.mxu0 0.0
        %3955 = vmatprep.subr.mxu0 0.0
        %3956 = vmatpush1.msra.mxu0 0.0
        %3957 = vmatprep.subr.mxu0 0.0
        %3958 = vmatpush1.msra.mxu0 0.0
        %3959 = vmatprep.subr.mxu0 0.0
        %3960 = vmatpush1.msra.mxu0 0.0
        %3961 = vmatprep.subr.mxu0 0.0
        %3962 = vmatpush1.msra.mxu0 0.0
        %3963 = vmatprep.subr.mxu0 0.0
        %3964 = vmatpush1.msra.mxu0 0.0
        %3965 = vmatprep.mubr.f32.mxu0 0.0
        %3966 = vmatmul.mubr.f32.gmra.mrb[0].mxu0 %v3893
        %v3967 = vpop.f32.mrb[0].mxu0
        %v3968 = vadd.f32 0.0, %v3967
        %v3969 = vpop.f32.mrb[0].mxu0
        %v3970 = vadd.f32 0.0, %v3969
        %3971 = vdwg.mxu0
        %v3974 = vcombine.low %v3968, %v3970
        %v3976 = vunpack.c.l.s4 1966171168
        %v3977 = vunpack.c.0.s8 %v3976
        %v3978 = vlaneseq
        %v3979 = vshrl.u32 %v3978, 7
        %v3980 = vsub.s32 %v3977, %v3979
        %v3981 = vrot.slane %v3974, %v3980
        %v3983 = vunpack.c.l.s4 1966171168
        %v3984 = vunpack.c.0.s8 %v3983
        %v3985 = vlaneseq
        %v3986 = vshrl.u32 %v3985, 7
        %v3987 = vsub.s32 %v3984, %v3986
        %v3988 = vrot.slane %v3981, %v3987
        %v3990 = vadd.f32 %v3874, %v3988
        %s3991 = scalar_lea.vmem %s13, 384
        %v3992 = vld [vmem:[%s3991] sm:$0xff]
        %v3993 = vld [vmem:[%s3991 + $0x8] sm:$0xff]
        %v3994 = vld [vmem:[%s3991 + $0x10] sm:$0xff]
        %v3995 = vld [vmem:[%s3991 + $0x18] sm:$0xff]
        %v3996 = vld [vmem:[%s3991 + $0x20] sm:$0xff]
        %v3997 = vld [vmem:[%s3991 + $0x28] sm:$0xff]
        %v3998 = vld [vmem:[%s3991 + $0x30] sm:$0xff]
        %v3999 = vld [vmem:[%s3991 + $0x38] sm:$0xff]
        %v4000 = vld [vmem:[%s3991 + $0x40] sm:$0xff]
        %v4001 = vld [vmem:[%s3991 + $0x48] sm:$0xff]
        %v4002 = vld [vmem:[%s3991 + $0x50] sm:$0xff]
        %v4003 = vld [vmem:[%s3991 + $0x58] sm:$0xff]
        %v4004 = vld [vmem:[%s3991 + $0x60] sm:$0xff]
        %v4005 = vld [vmem:[%s3991 + $0x68] sm:$0xff]
        %v4006 = vld [vmem:[%s3991 + $0x70] sm:$0xf]
        %v4007 = vld [vmem:[%s3991 + $0x78] sm:$0xf]
        %v4008 = vrot.slane %v3641, 3
        %v4009 = vsel %vm3659, %v4008, 0
        %v4012 = vsel %vm2439, %v4006, 0
        %v4015 = vsel %vm2439, %v4007, 0
        %4017 = vmatprep.subr.mxu0 %v3993
        %4018 = vmatpush1.msra.mxu0 %v3992
        %4019 = vmatprep.subr.mxu0 %v3995
        %4020 = vmatpush1.msra.mxu0 %v3994
        %4021 = vmatprep.subr.mxu0 %v3997
        %4022 = vmatpush1.msra.mxu0 %v3996
        %4023 = vmatprep.subr.mxu0 %v3999
        %4024 = vmatpush1.msra.mxu0 %v3998
        %4025 = vmatprep.subr.mxu0 %v4001
        %4026 = vmatpush1.msra.mxu0 %v4000
        %4027 = vmatprep.subr.mxu0 %v4003
        %4028 = vmatpush1.msra.mxu0 %v4002
        %4029 = vmatprep.subr.mxu0 %v4005
        %4030 = vmatpush1.msra.mxu0 %v4004
        %4031 = vmatprep.subr.mxu0 %v4015
        %4032 = vmatpush1.msra.mxu0 %v4012
        %4033 = vmatprep.subr.mxu0 0.0
        %4034 = vmatpush1.msra.mxu0 0.0
        %4035 = vmatprep.subr.mxu0 0.0
        %4036 = vmatpush1.msra.mxu0 0.0
        %4037 = vmatprep.subr.mxu0 0.0
        %4038 = vmatpush1.msra.mxu0 0.0
        %4039 = vmatprep.subr.mxu0 0.0
        %4040 = vmatpush1.msra.mxu0 0.0
        %4041 = vmatprep.subr.mxu0 0.0
        %4042 = vmatpush1.msra.mxu0 0.0
        %4043 = vmatprep.subr.mxu0 0.0
        %4044 = vmatpush1.msra.mxu0 0.0
        %4045 = vmatprep.subr.mxu0 0.0
        %4046 = vmatpush1.msra.mxu0 0.0
        %4047 = vmatprep.subr.mxu0 0.0
        %4048 = vmatpush1.msra.mxu0 0.0
        %4049 = vmatprep.subr.mxu0 0.0
        %4050 = vmatpush1.msra.mxu0 0.0
        %4051 = vmatprep.subr.mxu0 0.0
        %4052 = vmatpush1.msra.mxu0 0.0
        %4053 = vmatprep.subr.mxu0 0.0
        %4054 = vmatpush1.msra.mxu0 0.0
        %4055 = vmatprep.subr.mxu0 0.0
        %4056 = vmatpush1.msra.mxu0 0.0
        %4057 = vmatprep.subr.mxu0 0.0
        %4058 = vmatpush1.msra.mxu0 0.0
        %4059 = vmatprep.subr.mxu0 0.0
        %4060 = vmatpush1.msra.mxu0 0.0
        %4061 = vmatprep.subr.mxu0 0.0
        %4062 = vmatpush1.msra.mxu0 0.0
        %4063 = vmatprep.subr.mxu0 0.0
        %4064 = vmatpush1.msra.mxu0 0.0
        %4065 = vmatprep.subr.mxu0 0.0
        %4066 = vmatpush1.msra.mxu0 0.0
        %4067 = vmatprep.subr.mxu0 0.0
        %4068 = vmatpush1.msra.mxu0 0.0
        %4069 = vmatprep.subr.mxu0 0.0
        %4070 = vmatpush1.msra.mxu0 0.0
        %4071 = vmatprep.subr.mxu0 0.0
        %4072 = vmatpush1.msra.mxu0 0.0
        %4073 = vmatprep.subr.mxu0 0.0
        %4074 = vmatpush1.msra.mxu0 0.0
        %4075 = vmatprep.subr.mxu0 0.0
        %4076 = vmatpush1.msra.mxu0 0.0
        %4077 = vmatprep.subr.mxu0 0.0
        %4078 = vmatpush1.msra.mxu0 0.0
        %4079 = vmatprep.subr.mxu0 0.0
        %4080 = vmatpush1.msra.mxu0 0.0
        %4081 = vmatprep.mubr.f32.mxu0 0.0
        %4082 = vmatmul.mubr.f32.gmra.mrb[0].mxu0 %v4009
        %v4083 = vpop.f32.mrb[0].mxu0
        %v4084 = vadd.f32 0.0, %v4083
        %v4085 = vpop.f32.mrb[0].mxu0
        %v4086 = vadd.f32 0.0, %v4085
        %4087 = vdwg.mxu0
        %v4090 = vcombine.low %v4084, %v4086
        %v4092 = vunpack.c.l.s4 1966171168
        %v4093 = vunpack.c.0.s8 %v4092
        %v4094 = vlaneseq
        %v4095 = vshrl.u32 %v4094, 7
        %v4096 = vsub.s32 %v4093, %v4095
        %v4097 = vrot.slane %v4090, %v4096
        %v4099 = vunpack.c.l.s4 1966171168
        %v4100 = vunpack.c.0.s8 %v4099
        %v4101 = vlaneseq
        %v4102 = vshrl.u32 %v4101, 7
        %v4103 = vsub.s32 %v4100, %v4102
        %v4104 = vrot.slane %v4097, %v4103
        %v4106 = vadd.f32 %v3990, %v4104
        %s4107 = scalar_lea.vmem %s13, 512
        %v4108 = vld [vmem:[%s4107] sm:$0xff]
        %v4109 = vld [vmem:[%s4107 + $0x8] sm:$0xff]
        %v4110 = vld [vmem:[%s4107 + $0x10] sm:$0xff]
        %v4111 = vld [vmem:[%s4107 + $0x18] sm:$0xff]
        %v4112 = vld [vmem:[%s4107 + $0x20] sm:$0xff]
        %v4113 = vld [vmem:[%s4107 + $0x28] sm:$0xff]
        %v4114 = vld [vmem:[%s4107 + $0x30] sm:$0xff]
        %v4115 = vld [vmem:[%s4107 + $0x38] sm:$0xff]
        %v4116 = vld [vmem:[%s4107 + $0x40] sm:$0xff]
        %v4117 = vld [vmem:[%s4107 + $0x48] sm:$0xff]
        %v4118 = vld [vmem:[%s4107 + $0x50] sm:$0xff]
        %v4119 = vld [vmem:[%s4107 + $0x58] sm:$0xff]
        %v4120 = vld [vmem:[%s4107 + $0x60] sm:$0xff]
        %v4121 = vld [vmem:[%s4107 + $0x68] sm:$0xff]
        %v4122 = vld [vmem:[%s4107 + $0x70] sm:$0xf]
        %v4123 = vld [vmem:[%s4107 + $0x78] sm:$0xf]
        %v4124 = vrot.slane %v3641, 4
        %v4125 = vsel %vm3659, %v4124, 0
        %v4128 = vsel %vm2439, %v4122, 0
        %v4131 = vsel %vm2439, %v4123, 0
        %4133 = vmatprep.subr.mxu0 %v4109
        %4134 = vmatpush1.msra.mxu0 %v4108
        %4135 = vmatprep.subr.mxu0 %v4111
        %4136 = vmatpush1.msra.mxu0 %v4110
        %4137 = vmatprep.subr.mxu0 %v4113
        %4138 = vmatpush1.msra.mxu0 %v4112
        %4139 = vmatprep.subr.mxu0 %v4115
        %4140 = vmatpush1.msra.mxu0 %v4114
        %4141 = vmatprep.subr.mxu0 %v4117
        %4142 = vmatpush1.msra.mxu0 %v4116
        %4143 = vmatprep.subr.mxu0 %v4119
        %4144 = vmatpush1.msra.mxu0 %v4118
        %4145 = vmatprep.subr.mxu0 %v4121
        %4146 = vmatpush1.msra.mxu0 %v4120
        %4147 = vmatprep.subr.mxu0 %v4131
        %4148 = vmatpush1.msra.mxu0 %v4128
        %4149 = vmatprep.subr.mxu0 0.0
        %4150 = vmatpush1.msra.mxu0 0.0
        %4151 = vmatprep.subr.mxu0 0.0
        %4152 = vmatpush1.msra.mxu0 0.0
        %4153 = vmatprep.subr.mxu0 0.0
        %4154 = vmatpush1.msra.mxu0 0.0
        %4155 = vmatprep.subr.mxu0 0.0
        %4156 = vmatpush1.msra.mxu0 0.0
        %4157 = vmatprep.subr.mxu0 0.0
        %4158 = vmatpush1.msra.mxu0 0.0
        %4159 = vmatprep.subr.mxu0 0.0
        %4160 = vmatpush1.msra.mxu0 0.0
        %4161 = vmatprep.subr.mxu0 0.0
        %4162 = vmatpush1.msra.mxu0 0.0
        %4163 = vmatprep.subr.mxu0 0.0
        %4164 = vmatpush1.msra.mxu0 0.0
        %4165 = vmatprep.subr.mxu0 0.0
        %4166 = vmatpush1.msra.mxu0 0.0
        %4167 = vmatprep.subr.mxu0 0.0
        %4168 = vmatpush1.msra.mxu0 0.0
        %4169 = vmatprep.subr.mxu0 0.0
        %4170 = vmatpush1.msra.mxu0 0.0
        %4171 = vmatprep.subr.mxu0 0.0
        %4172 = vmatpush1.msra.mxu0 0.0
        %4173 = vmatprep.subr.mxu0 0.0
        %4174 = vmatpush1.msra.mxu0 0.0
        %4175 = vmatprep.subr.mxu0 0.0
        %4176 = vmatpush1.msra.mxu0 0.0
        %4177 = vmatprep.subr.mxu0 0.0
        %4178 = vmatpush1.msra.mxu0 0.0
        %4179 = vmatprep.subr.mxu0 0.0
        %4180 = vmatpush1.msra.mxu0 0.0
        %4181 = vmatprep.subr.mxu0 0.0
        %4182 = vmatpush1.msra.mxu0 0.0
        %4183 = vmatprep.subr.mxu0 0.0
        %4184 = vmatpush1.msra.mxu0 0.0
        %4185 = vmatprep.subr.mxu0 0.0
        %4186 = vmatpush1.msra.mxu0 0.0
        %4187 = vmatprep.subr.mxu0 0.0
        %4188 = vmatpush1.msra.mxu0 0.0
        %4189 = vmatprep.subr.mxu0 0.0
        %4190 = vmatpush1.msra.mxu0 0.0
        %4191 = vmatprep.subr.mxu0 0.0
        %4192 = vmatpush1.msra.mxu0 0.0
        %4193 = vmatprep.subr.mxu0 0.0
        %4194 = vmatpush1.msra.mxu0 0.0
        %4195 = vmatprep.subr.mxu0 0.0
        %4196 = vmatpush1.msra.mxu0 0.0
        %4197 = vmatprep.mubr.f32.mxu0 0.0
        %4198 = vmatmul.mubr.f32.gmra.mrb[0].mxu0 %v4125
        %v4199 = vpop.f32.mrb[0].mxu0
        %v4200 = vadd.f32 0.0, %v4199
        %v4201 = vpop.f32.mrb[0].mxu0
        %v4202 = vadd.f32 0.0, %v4201
        %4203 = vdwg.mxu0
        %v4206 = vcombine.low %v4200, %v4202
        %v4208 = vunpack.c.l.s4 1966171168
        %v4209 = vunpack.c.0.s8 %v4208
        %v4210 = vlaneseq
        %v4211 = vshrl.u32 %v4210, 7
        %v4212 = vsub.s32 %v4209, %v4211
        %v4213 = vrot.slane %v4206, %v4212
        %v4215 = vunpack.c.l.s4 1966171168
        %v4216 = vunpack.c.0.s8 %v4215
        %v4217 = vlaneseq
        %v4218 = vshrl.u32 %v4217, 7
        %v4219 = vsub.s32 %v4216, %v4218
        %v4220 = vrot.slane %v4213, %v4219
        %v4222 = vadd.f32 %v4106, %v4220
        %v4223 = vmax.f32 %v4222, 0.0
        %v4224 = vld [vmem:[%s15] sm:$0xff]
        %v4225 = vld [vmem:[%s15 + $0x8] sm:$0xff]
        %v4226 = vld [vmem:[%s15 + $0x10] sm:$0xff]
        %v4227 = vld [vmem:[%s15 + $0x18] sm:$0xff]
        %v4228 = vld [vmem:[%s15 + $0x20] sm:$0xff]
        %v4229 = vld [vmem:[%s15 + $0x28] sm:$0xff]
        %v4230 = vld [vmem:[%s15 + $0x30] sm:$0xff]
        %v4231 = vld [vmem:[%s15 + $0x38] sm:$0xff]
        %v4232 = vld [vmem:[%s15 + $0x40] sm:$0xff]
        %v4233 = vld [vmem:[%s15 + $0x48] sm:$0xff]
        %v4234 = vld [vmem:[%s15 + $0x50] sm:$0xff]
        %v4235 = vld [vmem:[%s15 + $0x58] sm:$0xff]
        %v4236 = vld [vmem:[%s15 + $0x60] sm:$0xff]
        %v4237 = vld [vmem:[%s15 + $0x68] sm:$0xff]
        %v4238 = vld [vmem:[%s15 + $0x70] sm:$0xff]
        %v4239 = vld [vmem:[%s15 + $0x78] sm:$0xff]
        %v4240 = vld [vmem:[%s15 + $0x80] sm:$0xff]
        %v4241 = vld [vmem:[%s15 + $0x88] sm:$0xff]
        %v4242 = vld [vmem:[%s15 + $0x90] sm:$0xff]
        %v4243 = vld [vmem:[%s15 + $0x98] sm:$0xff]
        %v4244 = vld [vmem:[%s15 + $0xa0] sm:$0xff]
        %v4245 = vld [vmem:[%s15 + $0xa8] sm:$0xff]
        %v4246 = vld [vmem:[%s15 + $0xb0] sm:$0xff]
        %v4247 = vld [vmem:[%s15 + $0xb8] sm:$0xff]
        %v4248 = vld [vmem:[%s15 + $0xc0] sm:$0xff]
        %v4249 = vld [vmem:[%s15 + $0xc8] sm:$0xff]
        %v4250 = vld [vmem:[%s15 + $0xd0] sm:$0xff]
        %v4251 = vld [vmem:[%s15 + $0xd8] sm:$0xff]
        %v4252 = vld [vmem:[%s15 + $0xe0] sm:$0xff]
        %v4253 = vld [vmem:[%s15 + $0xe8] sm:$0xff]
        %v4254 = vld [vmem:[%s15 + $0xf0] sm:$0xff]
        %v4255 = vld [vmem:[%s15 + $0xf8] sm:$0xff]
        %v4256 = vld [vmem:[%s16] sm:$0x1]
        %v4258 = vlaneseq
        %v4259 = vshrl.u32 %v4258, 7
        %v4260 = vsub.s32 0, %v4259
        %v4261 = vrot.slane %v4223, %v4260
        %v4262 = vlaneseq
        %v4263 = vshrl.u32 %v4262, 7
        %v4264 = vsub.s32 1, %v4263
        %v4265 = vrot.slane %v4223, %v4264
        %4268 = vmatprep.subr.mxu0 0.0
        %4269 = vmatpush1.msra.mxu0 %v4224
        %4270 = vmatprep.subr.mxu0 0.0
        %4271 = vmatpush1.msra.mxu0 %v4225
        %4272 = vmatprep.subr.mxu0 0.0
        %4273 = vmatpush1.msra.mxu0 %v4226
        %4274 = vmatprep.subr.mxu0 0.0
        %4275 = vmatpush1.msra.mxu0 %v4227
        %4276 = vmatprep.subr.mxu0 0.0
        %4277 = vmatpush1.msra.mxu0 %v4228
        %4278 = vmatprep.subr.mxu0 0.0
        %4279 = vmatpush1.msra.mxu0 %v4229
        %4280 = vmatprep.subr.mxu0 0.0
        %4281 = vmatpush1.msra.mxu0 %v4230
        %4282 = vmatprep.subr.mxu0 0.0
        %4283 = vmatpush1.msra.mxu0 %v4231
        %4284 = vmatprep.subr.mxu0 0.0
        %4285 = vmatpush1.msra.mxu0 %v4232
        %4286 = vmatprep.subr.mxu0 0.0
        %4287 = vmatpush1.msra.mxu0 %v4233
        %4288 = vmatprep.subr.mxu0 0.0
        %4289 = vmatpush1.msra.mxu0 %v4234
        %4290 = vmatprep.subr.mxu0 0.0
        %4291 = vmatpush1.msra.mxu0 %v4235
        %4292 = vmatprep.subr.mxu0 0.0
        %4293 = vmatpush1.msra.mxu0 %v4236
        %4294 = vmatprep.subr.mxu0 0.0
        %4295 = vmatpush1.msra.mxu0 %v4237
        %4296 = vmatprep.subr.mxu0 0.0
        %4297 = vmatpush1.msra.mxu0 %v4238
        %4298 = vmatprep.subr.mxu0 0.0
        %4299 = vmatpush1.msra.mxu0 %v4239
        %4300 = vmatprep.subr.mxu0 0.0
        %4301 = vmatpush1.msra.mxu0 %v4240
        %4302 = vmatprep.subr.mxu0 0.0
        %4303 = vmatpush1.msra.mxu0 %v4241
        %4304 = vmatprep.subr.mxu0 0.0
        %4305 = vmatpush1.msra.mxu0 %v4242
        %4306 = vmatprep.subr.mxu0 0.0
        %4307 = vmatpush1.msra.mxu0 %v4243
        %4308 = vmatprep.subr.mxu0 0.0
        %4309 = vmatpush1.msra.mxu0 %v4244
        %4310 = vmatprep.subr.mxu0 0.0
        %4311 = vmatpush1.msra.mxu0 %v4245
        %4312 = vmatprep.subr.mxu0 0.0
        %4313 = vmatpush1.msra.mxu0 %v4246
        %4314 = vmatprep.subr.mxu0 0.0
        %4315 = vmatpush1.msra.mxu0 %v4247
        %4316 = vmatprep.subr.mxu0 0.0
        %4317 = vmatpush1.msra.mxu0 %v4248
        %4318 = vmatprep.subr.mxu0 0.0
        %4319 = vmatpush1.msra.mxu0 %v4249
        %4320 = vmatprep.subr.mxu0 0.0
        %4321 = vmatpush1.msra.mxu0 %v4250
        %4322 = vmatprep.subr.mxu0 0.0
        %4323 = vmatpush1.msra.mxu0 %v4251
        %4324 = vmatprep.subr.mxu0 0.0
        %4325 = vmatpush1.msra.mxu0 %v4252
        %4326 = vmatprep.subr.mxu0 0.0
        %4327 = vmatpush1.msra.mxu0 %v4253
        %4328 = vmatprep.subr.mxu0 0.0
        %4329 = vmatpush1.msra.mxu0 %v4254
        %4330 = vmatprep.subr.mxu0 0.0
        %4331 = vmatpush1.msra.mxu0 %v4255
        %4332 = vmatprep.mubr.f32.mxu0 %v4265
        %4333 = vmatmul.mubr.f32.gmra.mrb[0].mxu0 %v4261
        %v4334 = vpop.f32.mrb[0].mxu0
        %v4335 = vadd.f32 %v4256, %v4334
        %v4336 = vpop.f32.mrb[0].mxu0
        %4337 = vdwg.mxu0
        %v4338 = vmax.f32 %v4335, 0.0
        %v4339 = vld [vmem:[%s17] sm:$0xff]
        %v4340 = vld [vmem:[%s17 + $0x8] sm:$0xff]
        %v4341 = vld [vmem:[%s17 + $0x10] sm:$0xff]
        %v4342 = vld [vmem:[%s17 + $0x18] sm:$0xff]
        %v4343 = vld [vmem:[%s17 + $0x20] sm:$0xff]
        %v4344 = vld [vmem:[%s17 + $0x28] sm:$0xff]
        %v4345 = vld [vmem:[%s17 + $0x30] sm:$0xff]
        %v4346 = vld [vmem:[%s17 + $0x38] sm:$0xff]
        %v4347 = vld [vmem:[%s17 + $0x40] sm:$0xff]
        %v4348 = vld [vmem:[%s17 + $0x48] sm:$0xff]
        %v4349 = vld [vmem:[%s17 + $0x50] sm:$0xff]
        %v4350 = vld [vmem:[%s17 + $0x58] sm:$0xff]
        %v4351 = vld [vmem:[%s17 + $0x60] sm:$0xff]
        %v4352 = vld [vmem:[%s17 + $0x68] sm:$0xff]
        %v4353 = vld [vmem:[%s17 + $0x70] sm:$0xff]
        %v4354 = vld [vmem:[%s17 + $0x78] sm:$0xff]
        %v4355 = vld [vmem:[%s18] sm:$0x1]
        %4356 = vmatprep.subr.mxu0 0.0
        %4357 = vmatpush1.msra.mxu0 %v4339
        %4358 = vmatprep.subr.mxu0 0.0
        %4359 = vmatpush1.msra.mxu0 %v4340
        %4360 = vmatprep.subr.mxu0 0.0
        %4361 = vmatpush1.msra.mxu0 %v4341
        %4362 = vmatprep.subr.mxu0 0.0
        %4363 = vmatpush1.msra.mxu0 %v4342
        %4364 = vmatprep.subr.mxu0 0.0
        %4365 = vmatpush1.msra.mxu0 %v4343
        %4366 = vmatprep.subr.mxu0 0.0
        %4367 = vmatpush1.msra.mxu0 %v4344
        %4368 = vmatprep.subr.mxu0 0.0
        %4369 = vmatpush1.msra.mxu0 %v4345
        %4370 = vmatprep.subr.mxu0 0.0
        %4371 = vmatpush1.msra.mxu0 %v4346
        %4372 = vmatprep.subr.mxu0 0.0
        %4373 = vmatpush1.msra.mxu0 %v4347
        %4374 = vmatprep.subr.mxu0 0.0
        %4375 = vmatpush1.msra.mxu0 %v4348
        %4376 = vmatprep.subr.mxu0 0.0
        %4377 = vmatpush1.msra.mxu0 %v4349
        %4378 = vmatprep.subr.mxu0 0.0
        %4379 = vmatpush1.msra.mxu0 %v4350
        %4380 = vmatprep.subr.mxu0 0.0
        %4381 = vmatpush1.msra.mxu0 %v4351
        %4382 = vmatprep.subr.mxu0 0.0
        %4383 = vmatpush1.msra.mxu0 %v4352
        %4384 = vmatprep.subr.mxu0 0.0
        %4385 = vmatpush1.msra.mxu0 %v4353
        %4386 = vmatprep.subr.mxu0 0.0
        %4387 = vmatpush1.msra.mxu0 %v4354
        %4388 = vmatprep.subr.mxu0 0.0
        %4389 = vmatpush1.msra.mxu0 0.0
        %4390 = vmatprep.subr.mxu0 0.0
        %4391 = vmatpush1.msra.mxu0 0.0
        %4392 = vmatprep.subr.mxu0 0.0
        %4393 = vmatpush1.msra.mxu0 0.0
        %4394 = vmatprep.subr.mxu0 0.0
        %4395 = vmatpush1.msra.mxu0 0.0
        %4396 = vmatprep.subr.mxu0 0.0
        %4397 = vmatpush1.msra.mxu0 0.0
        %4398 = vmatprep.subr.mxu0 0.0
        %4399 = vmatpush1.msra.mxu0 0.0
        %4400 = vmatprep.subr.mxu0 0.0
        %4401 = vmatpush1.msra.mxu0 0.0
        %4402 = vmatprep.subr.mxu0 0.0
        %4403 = vmatpush1.msra.mxu0 0.0
        %4404 = vmatprep.subr.mxu0 0.0
        %4405 = vmatpush1.msra.mxu0 0.0
        %4406 = vmatprep.subr.mxu0 0.0
        %4407 = vmatpush1.msra.mxu0 0.0
        %4408 = vmatprep.subr.mxu0 0.0
        %4409 = vmatpush1.msra.mxu0 0.0
        %4410 = vmatprep.subr.mxu0 0.0
        %4411 = vmatpush1.msra.mxu0 0.0
        %4412 = vmatprep.subr.mxu0 0.0
        %4413 = vmatpush1.msra.mxu0 0.0
        %4414 = vmatprep.subr.mxu0 0.0
        %4415 = vmatpush1.msra.mxu0 0.0
        %4416 = vmatprep.subr.mxu0 0.0
        %4417 = vmatpush1.msra.mxu0 0.0
        %4418 = vmatprep.subr.mxu0 0.0
        %4419 = vmatpush1.msra.mxu0 0.0
        %4420 = vmatprep.mubr.f32.mxu0 0.0
        %4421 = vmatmul.mubr.f32.gmra.mrb[0].mxu0 %v4338
        %v4422 = vpop.f32.mrb[0].mxu0
        %v4423 = vadd.f32 %v4355, %v4422
        %v4424 = vpop.f32.mrb[0].mxu0
        %4425 = vdwg.mxu0
        %vm4426 = vcmask 73728
        %4427 = vst.msk [vmem:[%s594] sm:$0x1] %vm4426, %v4423
        %s4428 = sand.u32 %s445, 1
        %s4429 = scalar_lea.sflag [#allocation3], %s4428
        %s4430 = sand.u32 %s445, 1
        %s4431 = scalar_lea.vmem [#allocation2], %s4430
        // Predicated region
        $region97: #{conv_net_forward.1} parent=95 // pred_check
          %p4432 = pneg %p455
        $region98: #{conv_net_forward.1} parent=95 // pred_check_branch
          %4434 = sbr.rel (%p4432) target = $region100
        $region99: #{conv_net_forward.1} parent=95 // pred_region
          %s4436 = ssub.s32 16, 16
          %4437 = vsyncadd %s4429, %s4436
          %s4438 = smul.addr %s33, 16
          %s4439 = scalar_lea.hbm %s19, %s4438
          %s4441 = sshll.u32 %s4431, 4
          %s4442 = int_to_ptr.vmem [resolvable:$true] %s4441
          %4444 = dma.vmem_to_hbm [thread:$0]  %s4442, 16, %s4439, %s4429
        $region100: #{conv_net_forward.1} parent=95 // pred_fallthru
          _
      $region96: #{conv_net_forward.1} parent=5 // pred_fallthru
        _
      %p4445 = scmp.le.s32.totalorder 2, %s28
      // Predicated region
      $region101: #{conv_net_forward.1} parent=5 // pred_check
        %p4446 = pneg %p4445
      $region102: #{conv_net_forward.1} parent=5 // pred_check_branch
        %4448 = sbr.rel (%p4446) target = $region104
      $region103: #{conv_net_forward.1} parent=5 // pred_region
        %s4449 = ssub.s32 %s28, 2
        // Predicated region
        $region105: #{conv_net_forward.1} parent=103 // pred_check
          %p4450 = pneg %p461
        $region106: #{conv_net_forward.1} parent=103 // pred_check_branch
          %4452 = sbr.rel (%p4450) target = $region108
        $region107: #{conv_net_forward.1} parent=103 // pred_region
          %s4453 = sand.u32 %s446, 1
          %s4454 = scalar_lea.sflag [#allocation3], %s4453
          %s4455 = sand.u32 %s446, 1
          %s4456 = scalar_lea.vmem [#allocation2], %s4455
          %4457 = dma.done %s4454, 16
        $region108: #{conv_net_forward.1} parent=103 // pred_fallthru
          _
      $region104: #{conv_net_forward.1} parent=5 // pred_fallthru
        _
    $region6: #{conv_net_forward.1} parent=1 // loop_footer
      %s32 = sadd.s32 1, %s28
    $region7: #{conv_net_forward.1} parent=1 // loop_footer_branch
      %27 = sbr.rel target = $region3
    $region8: #{conv_net_forward.1} parent=1 // loop_exit
      _
    %4458 = vsyncpa [#allocation3], 1
    %s4459 = scalar_lea.sflag [#allocation3], 1
    %4460 = vsyncpa %s4459, 1

</llo_original>
